<compile_context>
chip_gen: v5e
topology: v5e:2x2
jax: 0.10.0
libtpu: 0.0.40
codegen_flags: <defaults>
</compile_context>

<pallas_src>
import jax
import jax.numpy as jnp
from jax.experimental import pallas as pl
from jax.experimental.pallas import tpu as pltpu


# --------------------------------------------------------------------------
# Shared math (traced into kernel bodies)
# --------------------------------------------------------------------------
def _silu(v):
    return v * jax.nn.sigmoid(v)


def _layernorm(h, gamma, beta, eps=1e-5):
    mu = jnp.mean(h, axis=-1, keepdims=True)
    var = jnp.mean(jnp.square(h - mu), axis=-1, keepdims=True)
    return (h - mu) * jax.lax.rsqrt(var + eps) * gamma + beta


def _resblock_body(x, te_s, le_s, wf, bf, wl, bl, wt, bt, gamma, beta):
    """ResidualBlock with the embedding SiLU already applied to te_s / le_s."""
    h = jnp.dot(x, wf, preferred_element_type=jnp.float32) + bf
    scale = jnp.dot(le_s, wl, preferred_element_type=jnp.float32) + bl
    shift = jnp.dot(te_s, wt, preferred_element_type=jnp.float32) + bt
    h = h * scale + shift
    h = _layernorm(h, gamma, beta)
    return _silu(h)  # ResidualBlock.drop is Dropout(0): identity


# --------------------------------------------------------------------------
# Kernel bodies (per-module fallback path)
# --------------------------------------------------------------------------
def _embed_mlp_kernel(x_ref, w1_ref, b1_ref, w2_ref, b2_ref, o_ref):
    """Linear -> SiLU -> Linear, plus the SiLU every emb_*_layer applies next."""
    h = _silu(jnp.dot(x_ref[...], w1_ref[...],
                      preferred_element_type=jnp.float32) + b1_ref[...])
    y = _silu(jnp.dot(h, w2_ref[...],
                      preferred_element_type=jnp.float32) + b2_ref[...])
    o_ref[...] = y.astype(o_ref.dtype)


def _resblock_kernel(x_ref, te_ref, le_ref,
                     wf_ref, bf_ref, wl_ref, bl_ref, wt_ref, bt_ref,
                     g_ref, beta_ref, o_ref):
    h = _resblock_body(x_ref[...], te_ref[...], le_ref[...],
                       wf_ref[...], bf_ref[...], wl_ref[...], bl_ref[...],
                       wt_ref[...], bt_ref[...], g_ref[...], beta_ref[...])
    o_ref[...] = h.astype(o_ref.dtype)


def _resblock_skip_kernel(x_ref, te_ref, le_ref, skip_ref,
                          wf_ref, bf_ref, wl_ref, bl_ref, wt_ref, bt_ref,
                          g_ref, beta_ref, o_ref):
    h = _resblock_body(x_ref[...], te_ref[...], le_ref[...],
                       wf_ref[...], bf_ref[...], wl_ref[...], bl_ref[...],
                       wt_ref[...], bt_ref[...], g_ref[...], beta_ref[...])
    o_ref[...] = (h + skip_ref[...]).astype(o_ref.dtype)


def _out_head_kernel(x_ref, w1_ref, b1_ref, g_ref, beta_ref, w2_ref, b2_ref, o_ref):
    h = jnp.dot(x_ref[...], w1_ref[...],
                preferred_element_type=jnp.float32) + b1_ref[...]
    h = _silu(_layernorm(h, g_ref[...], beta_ref[...]))
    y = jnp.dot(h, w2_ref[...], preferred_element_type=jnp.float32) + b2_ref[...]
    o_ref[...] = y.astype(o_ref.dtype)


# --------------------------------------------------------------------------
# Kernel body (fully fused path)
# --------------------------------------------------------------------------
def _make_fused_kernel(n_enc, n_dec):
    def kernel(*refs):
        o_ref = refs[-1]
        it = iter(refs[:-1])
        nxt = lambda: next(it)[...]

        x = nxt()
        temb = nxt()
        yv = nxt()

        tw1, tb1, tw2, tb2 = nxt(), nxt(), nxt(), nxt()
        lw1, lb1, lw2, lb2 = nxt(), nxt(), nxt(), nxt()
        # Embedding MLPs; the trailing SiLU belongs to every emb_*_layer.
        te = _silu(jnp.dot(temb, tw1, preferred_element_type=jnp.float32) + tb1)
        te = _silu(jnp.dot(te, tw2, preferred_element_type=jnp.float32) + tb2)
        le = _silu(jnp.dot(yv, lw1, preferred_element_type=jnp.float32) + lb1)
        le = _silu(jnp.dot(le, lw2, preferred_element_type=jnp.float32) + lb2)

        h = x
        history = []
        for _ in range(n_enc):
            p = tuple(nxt() for _ in range(8))
            h = _resblock_body(h, te, le, *p)
            history.append(h)
        history.pop()
        for _ in range(n_dec):
            p = tuple(nxt() for _ in range(8))
            h = _resblock_body(h, te, le, *p) + history.pop()

        ow1, ob1, og, obeta, ow2, ob2 = (nxt() for _ in range(6))
        h = jnp.dot(h, ow1, preferred_element_type=jnp.float32) + ob1
        h = _silu(_layernorm(h, og, obeta))
        y = jnp.dot(h, ow2, preferred_element_type=jnp.float32) + ob2
        o_ref[...] = y.astype(o_ref.dtype)

    return kernel


# --------------------------------------------------------------------------
# BlockSpec helpers
# --------------------------------------------------------------------------
def _pick_batch_tile(B, preferred=128):
    for cand in (preferred, 64, 32, 16, 8):
        if cand <= B and B % cand == 0:
            return cand
    return B  # full-array block (exempt from the (8,128) divisibility rule)


def _row_spec(tb, d):
    # Activation block: tiled over the batch grid axis only.
    return pl.BlockSpec((tb, d), lambda i: (i, 0))


def _const_spec(shape):
    # Weights / biases: same block for every batch tile -> VMEM resident.
    return pl.BlockSpec(shape, lambda i: (0,) * len(shape))


def _parallel_params():
    # Batch tiles are independent: shard across TensorCores on v7x.
    return pltpu.CompilerParams(dimension_semantics=("parallel",))


# --------------------------------------------------------------------------
# Wrappers (per-module fallback path)
# --------------------------------------------------------------------------
def embed_mlp(x, w1, b1, w2, b2, *, tile_b=128):
    B, D = x.shape
    H = w1.shape[1]
    tb = _pick_batch_tile(B, tile_b)
    return pl.pallas_call(
        _embed_mlp_kernel,
        out_shape=jax.ShapeDtypeStruct((B, H), jnp.float32),
        grid=(B // tb,),
        in_specs=[
            _row_spec(tb, D),
            _const_spec((D, H)), _const_spec((1, H)),
            _const_spec((H, H)), _const_spec((1, H)),
        ],
        out_specs=_row_spec(tb, H),
        compiler_params=_parallel_params(),
    )(x, w1, b1.reshape(1, H), w2, b2.reshape(1, H))


def residual_block(x, te_s, le_s, params, skip=None, *, tile_b=128):
    wf, bf, wl, bl, wt, bt, gamma, beta = params
    B, Din = x.shape
    Dt = te_s.shape[1]
    Dl = le_s.shape[1]
    Dout = wf.shape[1]
    tb = _pick_batch_tile(B, tile_b)

    in_specs = [_row_spec(tb, Din), _row_spec(tb, Dt), _row_spec(tb, Dl)]
    args = [x, te_s, le_s]
    kernel = _resblock_kernel
    if skip is not None:
        in_specs.append(_row_spec(tb, Dout))
        args.append(skip)
        kernel = _resblock_skip_kernel
    in_specs += [
        _const_spec((Din, Dout)), _const_spec((1, Dout)),
        _const_spec((Dl, Dout)), _const_spec((1, Dout)),
        _const_spec((Dt, Dout)), _const_spec((1, Dout)),
        _const_spec((1, Dout)), _const_spec((1, Dout)),
    ]
    args += [wf, bf.reshape(1, Dout), wl, bl.reshape(1, Dout),
             wt, bt.reshape(1, Dout), gamma.reshape(1, Dout), beta.reshape(1, Dout)]

    return pl.pallas_call(
        kernel,
        out_shape=jax.ShapeDtypeStruct((B, Dout), jnp.float32),
        grid=(B // tb,),
        in_specs=in_specs,
        out_specs=_row_spec(tb, Dout),
        compiler_params=_parallel_params(),
    )(*args)


def out_head(x, w1, b1, gamma, beta, w2, b2, *, tile_b=128):
    B, Din = x.shape
    Dm = w1.shape[1]
    Dout = w2.shape[1]
    tb = _pick_batch_tile(B, tile_b)
    return pl.pallas_call(
        _out_head_kernel,
        out_shape=jax.ShapeDtypeStruct((B, Dout), jnp.float32),
        grid=(B // tb,),
        in_specs=[
            _row_spec(tb, Din),
            _const_spec((Din, Dm)), _const_spec((1, Dm)),
            _const_spec((1, Dm)), _const_spec((1, Dm)),
            _const_spec((Dm, Dout)), _const_spec((1, Dout)),
        ],
        out_specs=_row_spec(tb, Dout),
        compiler_params=_parallel_params(),
    )(x, w1, b1.reshape(1, Dm), gamma.reshape(1, Dm), beta.reshape(1, Dm),
      w2, b2.reshape(1, Dout))


# --------------------------------------------------------------------------
# Fully fused wrapper
# --------------------------------------------------------------------------
def _fused_forward(params, x, temb_in, yv, *, tile_b=128):
    B, input_dim = x.shape
    h0 = temb_in.shape[1]
    sum_c = yv.shape[1]
    tb = _pick_batch_tile(B, tile_b)

    args = [x, temb_in, yv]
    in_specs = [_row_spec(tb, input_dim), _row_spec(tb, h0), _row_spec(tb, sum_c)]

    def add_mat(w):
        args.append(w)
        in_specs.append(_const_spec(w.shape))

    def add_vec(b):
        v = b.reshape(1, -1)
        args.append(v)
        in_specs.append(_const_spec(v.shape))

    tw1, tb1, tw2, tb2 = params["time_mlp"]
    lw1, lb1, lw2, lb2 = params["label_mlp"]
    for w, b in ((tw1, tb1), (tw2, tb2), (lw1, lb1), (lw2, lb2)):
        add_mat(w)
        add_vec(b)

    enc = params["layers"]
    dec = params["reverse_layers"]
    for p in list(enc) + list(dec):
        wf, bf, wl, bl, wt, bt, gamma, beta = p
        add_mat(wf); add_vec(bf)
        add_mat(wl); add_vec(bl)
        add_mat(wt); add_vec(bt)
        add_vec(gamma); add_vec(beta)

    w1, b1, gamma, beta, w2, b2 = params["out_head"]
    add_mat(w1); add_vec(b1); add_vec(gamma); add_vec(beta)
    add_mat(w2); add_vec(b2)

    return pl.pallas_call(
        _make_fused_kernel(len(enc), len(dec)),
        out_shape=jax.ShapeDtypeStruct((B, input_dim), jnp.float32),
        grid=(B // tb,),
        in_specs=in_specs,
        out_specs=_row_spec(tb, input_dim),
        compiler_params=_parallel_params(),
    )(*args)


def _param_arrays(params):
    arrs = list(params["time_mlp"]) + list(params["label_mlp"])
    for p in list(params["layers"]) + list(params["reverse_layers"]):
        arrs += list(p)
    arrs += list(params["out_head"])
    return arrs


# Conservative budget for keeping all weights VMEM-resident (double-buffered).
_FUSE_WEIGHT_BUDGET_BYTES = 8 * 1024 * 1024


def _weight_bytes(params):
    return sum(int(a.size) * a.dtype.itemsize for a in _param_arrays(params))


# --------------------------------------------------------------------------
# Conditioning prep (data preparation, kept in plain JAX)
# --------------------------------------------------------------------------
def timestep_embedding(t, dim, max_period=10000.0):
    half = dim // 2
    freqs = jnp.exp(-jnp.log(max_period) * jnp.arange(half, dtype=jnp.float32) / half)
    args = t.astype(jnp.float32).reshape(-1, 1) * freqs[None, :]
    emb = jnp.concatenate([jnp.cos(args), jnp.sin(args)], axis=-1)
    if dim % 2:
        emb = jnp.concatenate([emb, jnp.zeros_like(emb[:, :1])], axis=-1)
    return emb


def prepare_condition(y, num_classes, mask_key):
    # One-hot each condition column and concatenate (Cell_Unet.forward, multi-cond path).
    onehots = [jax.nn.one_hot(y[:, i], num_classes[i], dtype=jnp.float32)
               for i in range(y.shape[1])]
    yv = jnp.concatenate(onehots, axis=1)
    # Training-path context mask: bernoulli(0.1) -> -1*(1-mask) -> y * mask.
    mask = jax.random.bernoulli(mask_key, 0.1, yv.shape).astype(jnp.float32)
    mask = -1.0 * (1.0 - mask)
    return yv * mask


# --------------------------------------------------------------------------
# Full forward pass (Pallas) and pure-JAX reference
# --------------------------------------------------------------------------
def cell_unet_forward(params, x, t, y, mask_key, *, fuse=None, tile_b=128):
    h0 = params["hidden_dim"][0]
    yv = prepare_condition(y, params["num_classes"], mask_key)
    temb_in = timestep_embedding(t, h0)
    xf = x.astype(jnp.float32)

    if fuse is None:
        fuse = _weight_bytes(params) <= _FUSE_WEIGHT_BUDGET_BYTES

    if fuse:
        return _fused_forward(params, xf, temb_in, yv, tile_b=tile_b)

    # Fallback: per-module kernels (weights too large for a single VMEM-resident call).
    te_s = embed_mlp(temb_in, *params["time_mlp"], tile_b=tile_b)   # SiLU pre-applied
    le_s = embed_mlp(yv, *params["label_mlp"], tile_b=tile_b)       # SiLU pre-applied

    h = xf
    history = []
    for p in params["layers"]:
        h = residual_block(h, te_s, le_s, p, tile_b=tile_b)
        history.append(h)
    history.pop()
    for p in params["reverse_layers"]:
        h = residual_block(h, te_s, le_s, p, skip=history.pop(), tile_b=tile_b)
    return out_head(h, *params["out_head"], tile_b=tile_b)


def _ref_mlp(x, w1, b1, w2, b2):
    h = x @ w1 + b1
    h = h * jax.nn.sigmoid(h)
    return h @ w2 + b2


def _ref_layernorm(h, gamma, beta, eps=1e-5):
    mu = jnp.mean(h, axis=-1, keepdims=True)
    var = jnp.mean(jnp.square(h - mu), axis=-1, keepdims=True)
    return (h - mu) / jnp.sqrt(var + eps) * gamma + beta


def _ref_resblock(x, te, le, params, skip=None):
    wf, bf, wl, bl, wt, bt, gamma, beta = params
    h = x @ wf + bf
    scale = (le * jax.nn.sigmoid(le)) @ wl + bl
    shift = (te * jax.nn.sigmoid(te)) @ wt + bt
    h = h * scale + shift
    h = _ref_layernorm(h, gamma, beta)
    h = h * jax.nn.sigmoid(h)
    if skip is not None:
        h = h + skip
    return h


def cell_unet_reference(params, x, t, y, mask_key):
    h0 = params["hidden_dim"][0]
    yv = prepare_condition(y, params["num_classes"], mask_key)
    temb_in = timestep_embedding(t, h0)
    time_emb = _ref_mlp(temb_in, *params["time_mlp"])
    label_emb = _ref_mlp(yv, *params["label_mlp"])
    h = x.astype(jnp.float32)
    history = []
    for p in params["layers"]:
        h = _ref_resblock(h, time_emb, label_emb, p)
        history.append(h)
    history.pop()
    for p in params["reverse_layers"]:
        h = _ref_resblock(h, time_emb, label_emb, p, skip=history.pop())
    w1, b1, gamma, beta, w2, b2 = params["out_head"]
    h = h @ w1 + b1
    h = _ref_layernorm(h, gamma, beta)
    h = h * jax.nn.sigmoid(h)
    return h @ w2 + b2


# --------------------------------------------------------------------------
# Parameter construction
# --------------------------------------------------------------------------
def init_params(key, input_dim, hidden_dim, num_classes):
    h0 = hidden_dim[0]
    sum_c = sum(num_classes)
    keys = iter(jax.random.split(key, 128))

    def lin(din, dout, scale=0.05):
        w = jax.random.normal(next(keys), (din, dout), jnp.float32) * scale
        b = jax.random.normal(next(keys), (dout,), jnp.float32) * scale
        return w, b

    def resblock(din, dout):
        wf, bf = lin(din, dout)
        wl, bl = lin(h0, dout)   # emb_label_layer
        wt, bt = lin(h0, dout)   # emb_time_layer
        gamma = jnp.ones((dout,), jnp.float32)
        beta = jnp.zeros((dout,), jnp.float32)
        return (wf, bf, wl, bl, wt, bt, gamma, beta)

    params = {
        "hidden_dim": tuple(hidden_dim),
        "num_classes": tuple(num_classes),
        "time_mlp": lin(h0, h0) + lin(h0, h0),
        "label_mlp": lin(sum_c, h0) + lin(h0, h0),
        "layers": [resblock(input_dim, hidden_dim[0])]
                  + [resblock(hidden_dim[i], hidden_dim[i + 1])
                     for i in range(len(hidden_dim) - 1)],
        "reverse_layers": [resblock(hidden_dim[i + 1], hidden_dim[i])
                           for i in reversed(range(len(hidden_dim) - 1))],
    }
    dm = int(hidden_dim[1] * 2)
    w1, b1 = lin(h0, dm)
    w2, b2 = lin(dm, input_dim)
    params["out_head"] = (w1, b1, jnp.ones((dm,), jnp.float32),
                          jnp.zeros((dm,), jnp.float32), w2, b2)
    return params


# --------------------------------------------------------------------------
# Main
# --------------------------------------------------------------------------
if __name__ == "__main__":
    input_dim = 2
    hidden_dim = [128, 128, 128, 128]   # lane-dense hidden dims (multiples of 128)
    num_classes = (3, 4)
    batch = 8

    root = jax.random.PRNGKey(0)
    k_param, k_x, k_t, k_y0, k_y1, k_mask = jax.random.split(root, 6)

    params = init_params(k_param, input_dim, hidden_dim, num_classes)

    x = jax.random.normal(k_x, (batch, input_dim), dtype=jnp.float32)
    t = jax.random.randint(k_t, (batch, 1), 0, 1000)
    y = jnp.stack(
        [jax.random.randint(k_y0, (batch,), 0, num_classes[0]),
         jax.random.randint(k_y1, (batch,), 0, num_classes[1])], axis=1)

    ref = cell_unet_reference(params, x, t, y, k_mask)

    # Fused single-kernel path (auto-selected at this weight footprint).
    out_fused = jax.block_until_ready(cell_unet_forward(params, x, t, y, k_mask))
    assert out_fused.shape == (batch, input_dim)
    assert jnp.allclose(out_fused, ref, atol=1e-2, rtol=1e-2), "fused mismatch vs reference"

    # Per-module fallback path (used when weights exceed the VMEM budget).
    out_mod = jax.block_until_ready(cell_unet_forward(params, x, t, y, k_mask, fuse=False))
    assert out_mod.shape == (batch, input_dim)
    assert jnp.allclose(out_mod, ref, atol=1e-2, rtol=1e-2), "per-module mismatch vs reference"

    print("KERNEL_OK")
</pallas_src>

<mosaic_0001>
module attributes {stable_mosaic.version = 11 : i64} {
  func.func @kernel(%arg0: i32, %arg1: memref<8x2xf32, #tpu.memory_space<vmem>>, %arg2: memref<8x128xf32, #tpu.memory_space<vmem>>, %arg3: memref<8x7xf32, #tpu.memory_space<vmem>>, %arg4: memref<128x128xf32, #tpu.memory_space<vmem>>, %arg5: memref<1x128xf32, #tpu.memory_space<vmem>>, %arg6: memref<128x128xf32, #tpu.memory_space<vmem>>, %arg7: memref<1x128xf32, #tpu.memory_space<vmem>>, %arg8: memref<7x128xf32, #tpu.memory_space<vmem>>, %arg9: memref<1x128xf32, #tpu.memory_space<vmem>>, %arg10: memref<128x128xf32, #tpu.memory_space<vmem>>, %arg11: memref<1x128xf32, #tpu.memory_space<vmem>>, %arg12: memref<2x128xf32, #tpu.memory_space<vmem>>, %arg13: memref<1x128xf32, #tpu.memory_space<vmem>>, %arg14: memref<128x128xf32, #tpu.memory_space<vmem>>, %arg15: memref<1x128xf32, #tpu.memory_space<vmem>>, %arg16: memref<128x128xf32, #tpu.memory_space<vmem>>, %arg17: memref<1x128xf32, #tpu.memory_space<vmem>>, %arg18: memref<1x128xf32, #tpu.memory_space<vmem>>, %arg19: memref<1x128xf32, #tpu.memory_space<vmem>>, %arg20: memref<128x128xf32, #tpu.memory_space<vmem>>, %arg21: memref<1x128xf32, #tpu.memory_space<vmem>>, %arg22: memref<128x128xf32, #tpu.memory_space<vmem>>, %arg23: memref<1x128xf32, #tpu.memory_space<vmem>>, %arg24: memref<128x128xf32, #tpu.memory_space<vmem>>, %arg25: memref<1x128xf32, #tpu.memory_space<vmem>>, %arg26: memref<1x128xf32, #tpu.memory_space<vmem>>, %arg27: memref<1x128xf32, #tpu.memory_space<vmem>>, %arg28: memref<128x128xf32, #tpu.memory_space<vmem>>, %arg29: memref<1x128xf32, #tpu.memory_space<vmem>>, %arg30: memref<128x128xf32, #tpu.memory_space<vmem>>, %arg31: memref<1x128xf32, #tpu.memory_space<vmem>>, %arg32: memref<128x128xf32, #tpu.memory_space<vmem>>, %arg33: memref<1x128xf32, #tpu.memory_space<vmem>>, %arg34: memref<1x128xf32, #tpu.memory_space<vmem>>, %arg35: memref<1x128xf32, #tpu.memory_space<vmem>>, %arg36: memref<128x128xf32, #tpu.memory_space<vmem>>, %arg37: memref<1x128xf32, #tpu.memory_space<vmem>>, %arg38: memref<128x128xf32, #tpu.memory_space<vmem>>, %arg39: memref<1x128xf32, #tpu.memory_space<vmem>>, %arg40: memref<128x128xf32, #tpu.memory_space<vmem>>, %arg41: memref<1x128xf32, #tpu.memory_space<vmem>>, %arg42: memref<1x128xf32, #tpu.memory_space<vmem>>, %arg43: memref<1x128xf32, #tpu.memory_space<vmem>>, %arg44: memref<128x128xf32, #tpu.memory_space<vmem>>, %arg45: memref<1x128xf32, #tpu.memory_space<vmem>>, %arg46: memref<128x128xf32, #tpu.memory_space<vmem>>, %arg47: memref<1x128xf32, #tpu.memory_space<vmem>>, %arg48: memref<128x128xf32, #tpu.memory_space<vmem>>, %arg49: memref<1x128xf32, #tpu.memory_space<vmem>>, %arg50: memref<1x128xf32, #tpu.memory_space<vmem>>, %arg51: memref<1x128xf32, #tpu.memory_space<vmem>>, %arg52: memref<128x128xf32, #tpu.memory_space<vmem>>, %arg53: memref<1x128xf32, #tpu.memory_space<vmem>>, %arg54: memref<128x128xf32, #tpu.memory_space<vmem>>, %arg55: memref<1x128xf32, #tpu.memory_space<vmem>>, %arg56: memref<128x128xf32, #tpu.memory_space<vmem>>, %arg57: memref<1x128xf32, #tpu.memory_space<vmem>>, %arg58: memref<1x128xf32, #tpu.memory_space<vmem>>, %arg59: memref<1x128xf32, #tpu.memory_space<vmem>>, %arg60: memref<128x128xf32, #tpu.memory_space<vmem>>, %arg61: memref<1x128xf32, #tpu.memory_space<vmem>>, %arg62: memref<128x128xf32, #tpu.memory_space<vmem>>, %arg63: memref<1x128xf32, #tpu.memory_space<vmem>>, %arg64: memref<128x128xf32, #tpu.memory_space<vmem>>, %arg65: memref<1x128xf32, #tpu.memory_space<vmem>>, %arg66: memref<1x128xf32, #tpu.memory_space<vmem>>, %arg67: memref<1x128xf32, #tpu.memory_space<vmem>>, %arg68: memref<128x256xf32, #tpu.memory_space<vmem>>, %arg69: memref<1x256xf32, #tpu.memory_space<vmem>>, %arg70: memref<1x256xf32, #tpu.memory_space<vmem>>, %arg71: memref<1x256xf32, #tpu.memory_space<vmem>>, %arg72: memref<256x2xf32, #tpu.memory_space<vmem>>, %arg73: memref<1x2xf32, #tpu.memory_space<vmem>>, %arg74: memref<8x2xf32, #tpu.memory_space<vmem>>) attributes {dimension_semantics = [#tpu.dimension_semantics<parallel>], iteration_bounds = array<i64: 1>, scalar_prefetch = 0 : i64, scratch_operands = 0 : i64, tpu.core_type = #tpu.core_type<tc>, window_params = [{transform_indices = @transform_0, window_bounds = array<i64: 8, 2>}, {transform_indices = @transform_1, window_bounds = array<i64: 8, 128>}, {transform_indices = @transform_2, window_bounds = array<i64: 8, 7>}, {pipeline_mode = #tpu.pipeline_mode<synchronous>, transform_indices = @transform_3, window_bounds = array<i64: 128, 128>}, {pipeline_mode = #tpu.pipeline_mode<synchronous>, transform_indices = @transform_4, window_bounds = array<i64: 1, 128>}, {pipeline_mode = #tpu.pipeline_mode<synchronous>, transform_indices = @transform_5, window_bounds = array<i64: 128, 128>}, {pipeline_mode = #tpu.pipeline_mode<synchronous>, transform_indices = @transform_6, window_bounds = array<i64: 1, 128>}, {pipeline_mode = #tpu.pipeline_mode<synchronous>, transform_indices = @transform_7, window_bounds = array<i64: 7, 128>}, {pipeline_mode = #tpu.pipeline_mode<synchronous>, transform_indices = @transform_8, window_bounds = array<i64: 1, 128>}, {pipeline_mode = #tpu.pipeline_mode<synchronous>, transform_indices = @transform_9, window_bounds = array<i64: 128, 128>}, {pipeline_mode = #tpu.pipeline_mode<synchronous>, transform_indices = @transform_10, window_bounds = array<i64: 1, 128>}, {pipeline_mode = #tpu.pipeline_mode<synchronous>, transform_indices = @transform_11, window_bounds = array<i64: 2, 128>}, {pipeline_mode = #tpu.pipeline_mode<synchronous>, transform_indices = @transform_12, window_bounds = array<i64: 1, 128>}, {pipeline_mode = #tpu.pipeline_mode<synchronous>, transform_indices = @transform_13, window_bounds = array<i64: 128, 128>}, {pipeline_mode = #tpu.pipeline_mode<synchronous>, transform_indices = @transform_14, window_bounds = array<i64: 1, 128>}, {pipeline_mode = #tpu.pipeline_mode<synchronous>, transform_indices = @transform_15, window_bounds = array<i64: 128, 128>}, {pipeline_mode = #tpu.pipeline_mode<synchronous>, transform_indices = @transform_16, window_bounds = array<i64: 1, 128>}, {pipeline_mode = #tpu.pipeline_mode<synchronous>, transform_indices = @transform_17, window_bounds = array<i64: 1, 128>}, {pipeline_mode = #tpu.pipeline_mode<synchronous>, transform_indices = @transform_18, window_bounds = array<i64: 1, 128>}, {pipeline_mode = #tpu.pipeline_mode<synchronous>, transform_indices = @transform_19, window_bounds = array<i64: 128, 128>}, {pipeline_mode = #tpu.pipeline_mode<synchronous>, transform_indices = @transform_20, window_bounds = array<i64: 1, 128>}, {pipeline_mode = #tpu.pipeline_mode<synchronous>, transform_indices = @transform_21, window_bounds = array<i64: 128, 128>}, {pipeline_mode = #tpu.pipeline_mode<synchronous>, transform_indices = @transform_22, window_bounds = array<i64: 1, 128>}, {pipeline_mode = #tpu.pipeline_mode<synchronous>, transform_indices = @transform_23, window_bounds = array<i64: 128, 128>}, {pipeline_mode = #tpu.pipeline_mode<synchronous>, transform_indices = @transform_24, window_bounds = array<i64: 1, 128>}, {pipeline_mode = #tpu.pipeline_mode<synchronous>, transform_indices = @transform_25, window_bounds = array<i64: 1, 128>}, {pipeline_mode = #tpu.pipeline_mode<synchronous>, transform_indices = @transform_26, window_bounds = array<i64: 1, 128>}, {pipeline_mode = #tpu.pipeline_mode<synchronous>, transform_indices = @transform_27, window_bounds = array<i64: 128, 128>}, {pipeline_mode = #tpu.pipeline_mode<synchronous>, transform_indices = @transform_28, window_bounds = array<i64: 1, 128>}, {pipeline_mode = #tpu.pipeline_mode<synchronous>, transform_indices = @transform_29, window_bounds = array<i64: 128, 128>}, {pipeline_mode = #tpu.pipeline_mode<synchronous>, transform_indices = @transform_30, window_bounds = array<i64: 1, 128>}, {pipeline_mode = #tpu.pipeline_mode<synchronous>, transform_indices = @transform_31, window_bounds = array<i64: 128, 128>}, {pipeline_mode = #tpu.pipeline_mode<synchronous>, transform_indices = @transform_32, window_bounds = array<i64: 1, 128>}, {pipeline_mode = #tpu.pipeline_mode<synchronous>, transform_indices = @transform_33, window_bounds = array<i64: 1, 128>}, {pipeline_mode = #tpu.pipeline_mode<synchronous>, transform_indices = @transform_34, window_bounds = array<i64: 1, 128>}, {pipeline_mode = #tpu.pipeline_mode<synchronous>, transform_indices = @transform_35, window_bounds = array<i64: 128, 128>}, {pipeline_mode = #tpu.pipeline_mode<synchronous>, transform_indices = @transform_36, window_bounds = array<i64: 1, 128>}, {pipeline_mode = #tpu.pipeline_mode<synchronous>, transform_indices = @transform_37, window_bounds = array<i64: 128, 128>}, {pipeline_mode = #tpu.pipeline_mode<synchronous>, transform_indices = @transform_38, window_bounds = array<i64: 1, 128>}, {pipeline_mode = #tpu.pipeline_mode<synchronous>, transform_indices = @transform_39, window_bounds = array<i64: 128, 128>}, {pipeline_mode = #tpu.pipeline_mode<synchronous>, transform_indices = @transform_40, window_bounds = array<i64: 1, 128>}, {pipeline_mode = #tpu.pipeline_mode<synchronous>, transform_indices = @transform_41, window_bounds = array<i64: 1, 128>}, {pipeline_mode = #tpu.pipeline_mode<synchronous>, transform_indices = @transform_42, window_bounds = array<i64: 1, 128>}, {pipeline_mode = #tpu.pipeline_mode<synchronous>, transform_indices = @transform_43, window_bounds = array<i64: 128, 128>}, {pipeline_mode = #tpu.pipeline_mode<synchronous>, transform_indices = @transform_44, window_bounds = array<i64: 1, 128>}, {pipeline_mode = #tpu.pipeline_mode<synchronous>, transform_indices = @transform_45, window_bounds = array<i64: 128, 128>}, {pipeline_mode = #tpu.pipeline_mode<synchronous>, transform_indices = @transform_46, window_bounds = array<i64: 1, 128>}, {pipeline_mode = #tpu.pipeline_mode<synchronous>, transform_indices = @transform_47, window_bounds = array<i64: 128, 128>}, {pipeline_mode = #tpu.pipeline_mode<synchronous>, transform_indices = @transform_48, window_bounds = array<i64: 1, 128>}, {pipeline_mode = #tpu.pipeline_mode<synchronous>, transform_indices = @transform_49, window_bounds = array<i64: 1, 128>}, {pipeline_mode = #tpu.pipeline_mode<synchronous>, transform_indices = @transform_50, window_bounds = array<i64: 1, 128>}, {pipeline_mode = #tpu.pipeline_mode<synchronous>, transform_indices = @transform_51, window_bounds = array<i64: 128, 128>}, {pipeline_mode = #tpu.pipeline_mode<synchronous>, transform_indices = @transform_52, window_bounds = array<i64: 1, 128>}, {pipeline_mode = #tpu.pipeline_mode<synchronous>, transform_indices = @transform_53, window_bounds = array<i64: 128, 128>}, {pipeline_mode = #tpu.pipeline_mode<synchronous>, transform_indices = @transform_54, window_bounds = array<i64: 1, 128>}, {pipeline_mode = #tpu.pipeline_mode<synchronous>, transform_indices = @transform_55, window_bounds = array<i64: 128, 128>}, {pipeline_mode = #tpu.pipeline_mode<synchronous>, transform_indices = @transform_56, window_bounds = array<i64: 1, 128>}, {pipeline_mode = #tpu.pipeline_mode<synchronous>, transform_indices = @transform_57, window_bounds = array<i64: 1, 128>}, {pipeline_mode = #tpu.pipeline_mode<synchronous>, transform_indices = @transform_58, window_bounds = array<i64: 1, 128>}, {pipeline_mode = #tpu.pipeline_mode<synchronous>, transform_indices = @transform_59, window_bounds = array<i64: 128, 128>}, {pipeline_mode = #tpu.pipeline_mode<synchronous>, transform_indices = @transform_60, window_bounds = array<i64: 1, 128>}, {pipeline_mode = #tpu.pipeline_mode<synchronous>, transform_indices = @transform_61, window_bounds = array<i64: 128, 128>}, {pipeline_mode = #tpu.pipeline_mode<synchronous>, transform_indices = @transform_62, window_bounds = array<i64: 1, 128>}, {pipeline_mode = #tpu.pipeline_mode<synchronous>, transform_indices = @transform_63, window_bounds = array<i64: 128, 128>}, {pipeline_mode = #tpu.pipeline_mode<synchronous>, transform_indices = @transform_64, window_bounds = array<i64: 1, 128>}, {pipeline_mode = #tpu.pipeline_mode<synchronous>, transform_indices = @transform_65, window_bounds = array<i64: 1, 128>}, {pipeline_mode = #tpu.pipeline_mode<synchronous>, transform_indices = @transform_66, window_bounds = array<i64: 1, 128>}, {pipeline_mode = #tpu.pipeline_mode<synchronous>, transform_indices = @transform_67, window_bounds = array<i64: 128, 256>}, {pipeline_mode = #tpu.pipeline_mode<synchronous>, transform_indices = @transform_68, window_bounds = array<i64: 1, 256>}, {pipeline_mode = #tpu.pipeline_mode<synchronous>, transform_indices = @transform_69, window_bounds = array<i64: 1, 256>}, {pipeline_mode = #tpu.pipeline_mode<synchronous>, transform_indices = @transform_70, window_bounds = array<i64: 1, 256>}, {pipeline_mode = #tpu.pipeline_mode<synchronous>, transform_indices = @transform_71, window_bounds = array<i64: 256, 2>}, {pipeline_mode = #tpu.pipeline_mode<synchronous>, transform_indices = @transform_72, window_bounds = array<i64: 1, 2>}, {transform_indices = @transform_73, window_bounds = array<i64: 8, 2>}]} {
    %c0 = arith.constant 0 : index
    %c0_0 = arith.constant 0 : index
    %0 = vector.load %arg1[%c0, %c0_0] : memref<8x2xf32, #tpu.memory_space<vmem>>, vector<8x2xf32>
    %c0_1 = arith.constant 0 : index
    %c0_2 = arith.constant 0 : index
    %1 = vector.load %arg2[%c0_1, %c0_2] : memref<8x128xf32, #tpu.memory_space<vmem>>, vector<8x128xf32>
    %c0_3 = arith.constant 0 : index
    %c0_4 = arith.constant 0 : index
    %2 = vector.load %arg3[%c0_3, %c0_4] : memref<8x7xf32, #tpu.memory_space<vmem>>, vector<8x7xf32>
    %c0_5 = arith.constant 0 : index
    %c0_6 = arith.constant 0 : index
    %3 = vector.load %arg4[%c0_5, %c0_6] : memref<128x128xf32, #tpu.memory_space<vmem>>, vector<128x128xf32>
    %c0_7 = arith.constant 0 : index
    %c0_8 = arith.constant 0 : index
    %4 = vector.load %arg5[%c0_7, %c0_8] : memref<1x128xf32, #tpu.memory_space<vmem>>, vector<1x128xf32>
    %c0_9 = arith.constant 0 : index
    %c0_10 = arith.constant 0 : index
    %5 = vector.load %arg6[%c0_9, %c0_10] : memref<128x128xf32, #tpu.memory_space<vmem>>, vector<128x128xf32>
    %c0_11 = arith.constant 0 : index
    %c0_12 = arith.constant 0 : index
    %6 = vector.load %arg7[%c0_11, %c0_12] : memref<1x128xf32, #tpu.memory_space<vmem>>, vector<1x128xf32>
    %c0_13 = arith.constant 0 : index
    %c0_14 = arith.constant 0 : index
    %7 = vector.load %arg8[%c0_13, %c0_14] : memref<7x128xf32, #tpu.memory_space<vmem>>, vector<7x128xf32>
    %c0_15 = arith.constant 0 : index
    %c0_16 = arith.constant 0 : index
    %8 = vector.load %arg9[%c0_15, %c0_16] : memref<1x128xf32, #tpu.memory_space<vmem>>, vector<1x128xf32>
    %c0_17 = arith.constant 0 : index
    %c0_18 = arith.constant 0 : index
    %9 = vector.load %arg10[%c0_17, %c0_18] : memref<128x128xf32, #tpu.memory_space<vmem>>, vector<128x128xf32>
    %c0_19 = arith.constant 0 : index
    %c0_20 = arith.constant 0 : index
    %10 = vector.load %arg11[%c0_19, %c0_20] : memref<1x128xf32, #tpu.memory_space<vmem>>, vector<1x128xf32>
    %cst = arith.constant dense<0.000000e+00> : vector<8x128xf32>
    %11 = tpu.matmul %1, %3, %cst {dimension_numbers = #tpu.dot_dimension_numbers<[1], [0], [0], [1], [0, 0, 1, 1], [], []>} : vector<8x128xf32>, vector<128x128xf32>, vector<8x128xf32> -> vector<8x128xf32>
    %12 = vector.broadcast %4 : vector<1x128xf32> to vector<8x128xf32>
    %13 = arith.addf %11, %12 : vector<8x128xf32>
    %14 = arith.negf %13 : vector<8x128xf32>
    %15 = math.exp %14 : vector<8x128xf32>
    %cst_21 = arith.constant 1.000000e+00 : f32
    %16 = vector.broadcast %cst_21 : f32 to vector<8x128xf32>
    %17 = arith.addf %16, %15 : vector<8x128xf32>
    %18 = arith.divf %16, %17 : vector<8x128xf32>
    %19 = arith.mulf %13, %18 : vector<8x128xf32>
    %cst_22 = arith.constant dense<0.000000e+00> : vector<8x128xf32>
    %20 = tpu.matmul %19, %5, %cst_22 {dimension_numbers = #tpu.dot_dimension_numbers<[1], [0], [0], [1], [0, 0, 1, 1], [], []>} : vector<8x128xf32>, vector<128x128xf32>, vector<8x128xf32> -> vector<8x128xf32>
    %21 = vector.broadcast %6 : vector<1x128xf32> to vector<8x128xf32>
    %22 = arith.addf %20, %21 : vector<8x128xf32>
    %23 = arith.negf %22 : vector<8x128xf32>
    %24 = math.exp %23 : vector<8x128xf32>
    %cst_23 = arith.constant 1.000000e+00 : f32
    %25 = vector.broadcast %cst_23 : f32 to vector<8x128xf32>
    %26 = arith.addf %25, %24 : vector<8x128xf32>
    %27 = arith.divf %25, %26 : vector<8x128xf32>
    %28 = arith.mulf %22, %27 : vector<8x128xf32>
    %cst_24 = arith.constant dense<0.000000e+00> : vector<8x128xf32>
    %29 = tpu.matmul %2, %7, %cst_24 {dimension_numbers = #tpu.dot_dimension_numbers<[1], [0], [0], [1], [0, 0, 1, 1], [], []>} : vector<8x7xf32>, vector<7x128xf32>, vector<8x128xf32> -> vector<8x128xf32>
    %30 = vector.broadcast %8 : vector<1x128xf32> to vector<8x128xf32>
    %31 = arith.addf %29, %30 : vector<8x128xf32>
    %32 = arith.negf %31 : vector<8x128xf32>
    %33 = math.exp %32 : vector<8x128xf32>
    %cst_25 = arith.constant 1.000000e+00 : f32
    %34 = vector.broadcast %cst_25 : f32 to vector<8x128xf32>
    %35 = arith.addf %34, %33 : vector<8x128xf32>
    %36 = arith.divf %34, %35 : vector<8x128xf32>
    %37 = arith.mulf %31, %36 : vector<8x128xf32>
    %cst_26 = arith.constant dense<0.000000e+00> : vector<8x128xf32>
    %38 = tpu.matmul %37, %9, %cst_26 {dimension_numbers = #tpu.dot_dimension_numbers<[1], [0], [0], [1], [0, 0, 1, 1], [], []>} : vector<8x128xf32>, vector<128x128xf32>, vector<8x128xf32> -> vector<8x128xf32>
    %39 = vector.broadcast %10 : vector<1x128xf32> to vector<8x128xf32>
    %40 = arith.addf %38, %39 : vector<8x128xf32>
    %41 = arith.negf %40 : vector<8x128xf32>
    %42 = math.exp %41 : vector<8x128xf32>
    %cst_27 = arith.constant 1.000000e+00 : f32
    %43 = vector.broadcast %cst_27 : f32 to vector<8x128xf32>
    %44 = arith.addf %43, %42 : vector<8x128xf32>
    %45 = arith.divf %43, %44 : vector<8x128xf32>
    %46 = arith.mulf %40, %45 : vector<8x128xf32>
    %c0_28 = arith.constant 0 : index
    %c0_29 = arith.constant 0 : index
    %47 = vector.load %arg12[%c0_28, %c0_29] : memref<2x128xf32, #tpu.memory_space<vmem>>, vector<2x128xf32>
    %c0_30 = arith.constant 0 : index
    %c0_31 = arith.constant 0 : index
    %48 = vector.load %arg13[%c0_30, %c0_31] : memref<1x128xf32, #tpu.memory_space<vmem>>, vector<1x128xf32>
    %c0_32 = arith.constant 0 : index
    %c0_33 = arith.constant 0 : index
    %49 = vector.load %arg14[%c0_32, %c0_33] : memref<128x128xf32, #tpu.memory_space<vmem>>, vector<128x128xf32>
    %c0_34 = arith.constant 0 : index
    %c0_35 = arith.constant 0 : index
    %50 = vector.load %arg15[%c0_34, %c0_35] : memref<1x128xf32, #tpu.memory_space<vmem>>, vector<1x128xf32>
    %c0_36 = arith.constant 0 : index
    %c0_37 = arith.constant 0 : index
    %51 = vector.load %arg16[%c0_36, %c0_37] : memref<128x128xf32, #tpu.memory_space<vmem>>, vector<128x128xf32>
    %c0_38 = arith.constant 0 : index
    %c0_39 = arith.constant 0 : index
    %52 = vector.load %arg17[%c0_38, %c0_39] : memref<1x128xf32, #tpu.memory_space<vmem>>, vector<1x128xf32>
    %c0_40 = arith.constant 0 : index
    %c0_41 = arith.constant 0 : index
    %53 = vector.load %arg18[%c0_40, %c0_41] : memref<1x128xf32, #tpu.memory_space<vmem>>, vector<1x128xf32>
    %c0_42 = arith.constant 0 : index
    %c0_43 = arith.constant 0 : index
    %54 = vector.load %arg19[%c0_42, %c0_43] : memref<1x128xf32, #tpu.memory_space<vmem>>, vector<1x128xf32>
    %cst_44 = arith.constant dense<0.000000e+00> : vector<8x128xf32>
    %55 = tpu.matmul %0, %47, %cst_44 {dimension_numbers = #tpu.dot_dimension_numbers<[1], [0], [0], [1], [0, 0, 1, 1], [], []>} : vector<8x2xf32>, vector<2x128xf32>, vector<8x128xf32> -> vector<8x128xf32>
    %56 = vector.broadcast %48 : vector<1x128xf32> to vector<8x128xf32>
    %57 = arith.addf %55, %56 : vector<8x128xf32>
    %cst_45 = arith.constant dense<0.000000e+00> : vector<8x128xf32>
    %58 = tpu.matmul %46, %49, %cst_45 {dimension_numbers = #tpu.dot_dimension_numbers<[1], [0], [0], [1], [0, 0, 1, 1], [], []>} : vector<8x128xf32>, vector<128x128xf32>, vector<8x128xf32> -> vector<8x128xf32>
    %59 = vector.broadcast %50 : vector<1x128xf32> to vector<8x128xf32>
    %60 = arith.addf %58, %59 : vector<8x128xf32>
    %cst_46 = arith.constant dense<0.000000e+00> : vector<8x128xf32>
    %61 = tpu.matmul %28, %51, %cst_46 {dimension_numbers = #tpu.dot_dimension_numbers<[1], [0], [0], [1], [0, 0, 1, 1], [], []>} : vector<8x128xf32>, vector<128x128xf32>, vector<8x128xf32> -> vector<8x128xf32>
    %62 = vector.broadcast %52 : vector<1x128xf32> to vector<8x128xf32>
    %63 = arith.addf %61, %62 : vector<8x128xf32>
    %64 = arith.mulf %57, %60 : vector<8x128xf32>
    %65 = arith.addf %64, %63 : vector<8x128xf32>
    %cst_47 = arith.constant dense<0.000000e+00> : vector<8xf32>
    %66 = vector.multi_reduction <add>, %65, %cst_47 [1] : vector<8x128xf32> to vector<8xf32>
    %67 = vector.shape_cast %66 : vector<8xf32> to vector<8x1xf32>
    %cst_48 = arith.constant 1.280000e+02 : f32
    %68 = vector.broadcast %cst_48 : f32 to vector<8x1xf32>
    %69 = arith.divf %67, %68 : vector<8x1xf32>
    %70 = vector.broadcast %69 : vector<8x1xf32> to vector<8x128xf32>
    %71 = arith.subf %65, %70 : vector<8x128xf32>
    %72 = arith.mulf %71, %71 : vector<8x128xf32>
    %cst_49 = arith.constant dense<0.000000e+00> : vector<8xf32>
    %73 = vector.multi_reduction <add>, %72, %cst_49 [1] : vector<8x128xf32> to vector<8xf32>
    %74 = vector.shape_cast %73 : vector<8xf32> to vector<8x1xf32>
    %cst_50 = arith.constant 1.280000e+02 : f32
    %75 = vector.broadcast %cst_50 : f32 to vector<8x1xf32>
    %76 = arith.divf %74, %75 : vector<8x1xf32>
    %77 = vector.broadcast %69 : vector<8x1xf32> to vector<8x128xf32>
    %78 = arith.subf %65, %77 : vector<8x128xf32>
    %cst_51 = arith.constant 9.99999974E-6 : f32
    %79 = vector.broadcast %cst_51 : f32 to vector<8x1xf32>
    %80 = arith.addf %76, %79 : vector<8x1xf32>
    %81 = math.rsqrt %80 : vector<8x1xf32>
    %82 = vector.broadcast %81 : vector<8x1xf32> to vector<8x128xf32>
    %83 = arith.mulf %78, %82 : vector<8x128xf32>
    %84 = vector.broadcast %53 : vector<1x128xf32> to vector<8x128xf32>
    %85 = arith.mulf %83, %84 : vector<8x128xf32>
    %86 = vector.broadcast %54 : vector<1x128xf32> to vector<8x128xf32>
    %87 = arith.addf %85, %86 : vector<8x128xf32>
    %88 = arith.negf %87 : vector<8x128xf32>
    %89 = math.exp %88 : vector<8x128xf32>
    %cst_52 = arith.constant 1.000000e+00 : f32
    %90 = vector.broadcast %cst_52 : f32 to vector<8x128xf32>
    %91 = arith.addf %90, %89 : vector<8x128xf32>
    %92 = arith.divf %90, %91 : vector<8x128xf32>
    %93 = arith.mulf %87, %92 : vector<8x128xf32>
    %c0_53 = arith.constant 0 : index
    %c0_54 = arith.constant 0 : index
    %94 = vector.load %arg20[%c0_53, %c0_54] : memref<128x128xf32, #tpu.memory_space<vmem>>, vector<128x128xf32>
    %c0_55 = arith.constant 0 : index
    %c0_56 = arith.constant 0 : index
    %95 = vector.load %arg21[%c0_55, %c0_56] : memref<1x128xf32, #tpu.memory_space<vmem>>, vector<1x128xf32>
    %c0_57 = arith.constant 0 : index
    %c0_58 = arith.constant 0 : index
    %96 = vector.load %arg22[%c0_57, %c0_58] : memref<128x128xf32, #tpu.memory_space<vmem>>, vector<128x128xf32>
    %c0_59 = arith.constant 0 : index
    %c0_60 = arith.constant 0 : index
    %97 = vector.load %arg23[%c0_59, %c0_60] : memref<1x128xf32, #tpu.memory_space<vmem>>, vector<1x128xf32>
    %c0_61 = arith.constant 0 : index
    %c0_62 = arith.constant 0 : index
    %98 = vector.load %arg24[%c0_61, %c0_62] : memref<128x128xf32, #tpu.memory_space<vmem>>, vector<128x128xf32>
    %c0_63 = arith.constant 0 : index
    %c0_64 = arith.constant 0 : index
    %99 = vector.load %arg25[%c0_63, %c0_64] : memref<1x128xf32, #tpu.memory_space<vmem>>, vector<1x128xf32>
    %c0_65 = arith.constant 0 : index
    %c0_66 = arith.constant 0 : index
    %100 = vector.load %arg26[%c0_65, %c0_66] : memref<1x128xf32, #tpu.memory_space<vmem>>, vector<1x128xf32>
    %c0_67 = arith.constant 0 : index
    %c0_68 = arith.constant 0 : index
    %101 = vector.load %arg27[%c0_67, %c0_68] : memref<1x128xf32, #tpu.memory_space<vmem>>, vector<1x128xf32>
    %cst_69 = arith.constant dense<0.000000e+00> : vector<8x128xf32>
    %102 = tpu.matmul %93, %94, %cst_69 {dimension_numbers = #tpu.dot_dimension_numbers<[1], [0], [0], [1], [0, 0, 1, 1], [], []>} : vector<8x128xf32>, vector<128x128xf32>, vector<8x128xf32> -> vector<8x128xf32>
    %103 = vector.broadcast %95 : vector<1x128xf32> to vector<8x128xf32>
    %104 = arith.addf %102, %103 : vector<8x128xf32>
    %cst_70 = arith.constant dense<0.000000e+00> : vector<8x128xf32>
    %105 = tpu.matmul %46, %96, %cst_70 {dimension_numbers = #tpu.dot_dimension_numbers<[1], [0], [0], [1], [0, 0, 1, 1], [], []>} : vector<8x128xf32>, vector<128x128xf32>, vector<8x128xf32> -> vector<8x128xf32>
    %106 = vector.broadcast %97 : vector<1x128xf32> to vector<8x128xf32>
    %107 = arith.addf %105, %106 : vector<8x128xf32>
    %cst_71 = arith.constant dense<0.000000e+00> : vector<8x128xf32>
    %108 = tpu.matmul %28, %98, %cst_71 {dimension_numbers = #tpu.dot_dimension_numbers<[1], [0], [0], [1], [0, 0, 1, 1], [], []>} : vector<8x128xf32>, vector<128x128xf32>, vector<8x128xf32> -> vector<8x128xf32>
    %109 = vector.broadcast %99 : vector<1x128xf32> to vector<8x128xf32>
    %110 = arith.addf %108, %109 : vector<8x128xf32>
    %111 = arith.mulf %104, %107 : vector<8x128xf32>
    %112 = arith.addf %111, %110 : vector<8x128xf32>
    %cst_72 = arith.constant dense<0.000000e+00> : vector<8xf32>
    %113 = vector.multi_reduction <add>, %112, %cst_72 [1] : vector<8x128xf32> to vector<8xf32>
    %114 = vector.shape_cast %113 : vector<8xf32> to vector<8x1xf32>
    %cst_73 = arith.constant 1.280000e+02 : f32
    %115 = vector.broadcast %cst_73 : f32 to vector<8x1xf32>
    %116 = arith.divf %114, %115 : vector<8x1xf32>
    %117 = vector.broadcast %116 : vector<8x1xf32> to vector<8x128xf32>
    %118 = arith.subf %112, %117 : vector<8x128xf32>
    %119 = arith.mulf %118, %118 : vector<8x128xf32>
    %cst_74 = arith.constant dense<0.000000e+00> : vector<8xf32>
    %120 = vector.multi_reduction <add>, %119, %cst_74 [1] : vector<8x128xf32> to vector<8xf32>
    %121 = vector.shape_cast %120 : vector<8xf32> to vector<8x1xf32>
    %cst_75 = arith.constant 1.280000e+02 : f32
    %122 = vector.broadcast %cst_75 : f32 to vector<8x1xf32>
    %123 = arith.divf %121, %122 : vector<8x1xf32>
    %124 = vector.broadcast %116 : vector<8x1xf32> to vector<8x128xf32>
    %125 = arith.subf %112, %124 : vector<8x128xf32>
    %cst_76 = arith.constant 9.99999974E-6 : f32
    %126 = vector.broadcast %cst_76 : f32 to vector<8x1xf32>
    %127 = arith.addf %123, %126 : vector<8x1xf32>
    %128 = math.rsqrt %127 : vector<8x1xf32>
    %129 = vector.broadcast %128 : vector<8x1xf32> to vector<8x128xf32>
    %130 = arith.mulf %125, %129 : vector<8x128xf32>
    %131 = vector.broadcast %100 : vector<1x128xf32> to vector<8x128xf32>
    %132 = arith.mulf %130, %131 : vector<8x128xf32>
    %133 = vector.broadcast %101 : vector<1x128xf32> to vector<8x128xf32>
    %134 = arith.addf %132, %133 : vector<8x128xf32>
    %135 = arith.negf %134 : vector<8x128xf32>
    %136 = math.exp %135 : vector<8x128xf32>
    %cst_77 = arith.constant 1.000000e+00 : f32
    %137 = vector.broadcast %cst_77 : f32 to vector<8x128xf32>
    %138 = arith.addf %137, %136 : vector<8x128xf32>
    %139 = arith.divf %137, %138 : vector<8x128xf32>
    %140 = arith.mulf %134, %139 : vector<8x128xf32>
    %c0_78 = arith.constant 0 : index
    %c0_79 = arith.constant 0 : index
    %141 = vector.load %arg28[%c0_78, %c0_79] : memref<128x128xf32, #tpu.memory_space<vmem>>, vector<128x128xf32>
    %c0_80 = arith.constant 0 : index
    %c0_81 = arith.constant 0 : index
    %142 = vector.load %arg29[%c0_80, %c0_81] : memref<1x128xf32, #tpu.memory_space<vmem>>, vector<1x128xf32>
    %c0_82 = arith.constant 0 : index
    %c0_83 = arith.constant 0 : index
    %143 = vector.load %arg30[%c0_82, %c0_83] : memref<128x128xf32, #tpu.memory_space<vmem>>, vector<128x128xf32>
    %c0_84 = arith.constant 0 : index
    %c0_85 = arith.constant 0 : index
    %144 = vector.load %arg31[%c0_84, %c0_85] : memref<1x128xf32, #tpu.memory_space<vmem>>, vector<1x128xf32>
    %c0_86 = arith.constant 0 : index
    %c0_87 = arith.constant 0 : index
    %145 = vector.load %arg32[%c0_86, %c0_87] : memref<128x128xf32, #tpu.memory_space<vmem>>, vector<128x128xf32>
    %c0_88 = arith.constant 0 : index
    %c0_89 = arith.constant 0 : index
    %146 = vector.load %arg33[%c0_88, %c0_89] : memref<1x128xf32, #tpu.memory_space<vmem>>, vector<1x128xf32>
    %c0_90 = arith.constant 0 : index
    %c0_91 = arith.constant 0 : index
    %147 = vector.load %arg34[%c0_90, %c0_91] : memref<1x128xf32, #tpu.memory_space<vmem>>, vector<1x128xf32>
    %c0_92 = arith.constant 0 : index
    %c0_93 = arith.constant 0 : index
    %148 = vector.load %arg35[%c0_92, %c0_93] : memref<1x128xf32, #tpu.memory_space<vmem>>, vector<1x128xf32>
    %cst_94 = arith.constant dense<0.000000e+00> : vector<8x128xf32>
    %149 = tpu.matmul %140, %141, %cst_94 {dimension_numbers = #tpu.dot_dimension_numbers<[1], [0], [0], [1], [0, 0, 1, 1], [], []>} : vector<8x128xf32>, vector<128x128xf32>, vector<8x128xf32> -> vector<8x128xf32>
    %150 = vector.broadcast %142 : vector<1x128xf32> to vector<8x128xf32>
    %151 = arith.addf %149, %150 : vector<8x128xf32>
    %cst_95 = arith.constant dense<0.000000e+00> : vector<8x128xf32>
    %152 = tpu.matmul %46, %143, %cst_95 {dimension_numbers = #tpu.dot_dimension_numbers<[1], [0], [0], [1], [0, 0, 1, 1], [], []>} : vector<8x128xf32>, vector<128x128xf32>, vector<8x128xf32> -> vector<8x128xf32>
    %153 = vector.broadcast %144 : vector<1x128xf32> to vector<8x128xf32>
    %154 = arith.addf %152, %153 : vector<8x128xf32>
    %cst_96 = arith.constant dense<0.000000e+00> : vector<8x128xf32>
    %155 = tpu.matmul %28, %145, %cst_96 {dimension_numbers = #tpu.dot_dimension_numbers<[1], [0], [0], [1], [0, 0, 1, 1], [], []>} : vector<8x128xf32>, vector<128x128xf32>, vector<8x128xf32> -> vector<8x128xf32>
    %156 = vector.broadcast %146 : vector<1x128xf32> to vector<8x128xf32>
    %157 = arith.addf %155, %156 : vector<8x128xf32>
    %158 = arith.mulf %151, %154 : vector<8x128xf32>
    %159 = arith.addf %158, %157 : vector<8x128xf32>
    %cst_97 = arith.constant dense<0.000000e+00> : vector<8xf32>
    %160 = vector.multi_reduction <add>, %159, %cst_97 [1] : vector<8x128xf32> to vector<8xf32>
    %161 = vector.shape_cast %160 : vector<8xf32> to vector<8x1xf32>
    %cst_98 = arith.constant 1.280000e+02 : f32
    %162 = vector.broadcast %cst_98 : f32 to vector<8x1xf32>
    %163 = arith.divf %161, %162 : vector<8x1xf32>
    %164 = vector.broadcast %163 : vector<8x1xf32> to vector<8x128xf32>
    %165 = arith.subf %159, %164 : vector<8x128xf32>
    %166 = arith.mulf %165, %165 : vector<8x128xf32>
    %cst_99 = arith.constant dense<0.000000e+00> : vector<8xf32>
    %167 = vector.multi_reduction <add>, %166, %cst_99 [1] : vector<8x128xf32> to vector<8xf32>
    %168 = vector.shape_cast %167 : vector<8xf32> to vector<8x1xf32>
    %cst_100 = arith.constant 1.280000e+02 : f32
    %169 = vector.broadcast %cst_100 : f32 to vector<8x1xf32>
    %170 = arith.divf %168, %169 : vector<8x1xf32>
    %171 = vector.broadcast %163 : vector<8x1xf32> to vector<8x128xf32>
    %172 = arith.subf %159, %171 : vector<8x128xf32>
    %cst_101 = arith.constant 9.99999974E-6 : f32
    %173 = vector.broadcast %cst_101 : f32 to vector<8x1xf32>
    %174 = arith.addf %170, %173 : vector<8x1xf32>
    %175 = math.rsqrt %174 : vector<8x1xf32>
    %176 = vector.broadcast %175 : vector<8x1xf32> to vector<8x128xf32>
    %177 = arith.mulf %172, %176 : vector<8x128xf32>
    %178 = vector.broadcast %147 : vector<1x128xf32> to vector<8x128xf32>
    %179 = arith.mulf %177, %178 : vector<8x128xf32>
    %180 = vector.broadcast %148 : vector<1x128xf32> to vector<8x128xf32>
    %181 = arith.addf %179, %180 : vector<8x128xf32>
    %182 = arith.negf %181 : vector<8x128xf32>
    %183 = math.exp %182 : vector<8x128xf32>
    %cst_102 = arith.constant 1.000000e+00 : f32
    %184 = vector.broadcast %cst_102 : f32 to vector<8x128xf32>
    %185 = arith.addf %184, %183 : vector<8x128xf32>
    %186 = arith.divf %184, %185 : vector<8x128xf32>
    %187 = arith.mulf %181, %186 : vector<8x128xf32>
    %c0_103 = arith.constant 0 : index
    %c0_104 = arith.constant 0 : index
    %188 = vector.load %arg36[%c0_103, %c0_104] : memref<128x128xf32, #tpu.memory_space<vmem>>, vector<128x128xf32>
    %c0_105 = arith.constant 0 : index
    %c0_106 = arith.constant 0 : index
    %189 = vector.load %arg37[%c0_105, %c0_106] : memref<1x128xf32, #tpu.memory_space<vmem>>, vector<1x128xf32>
    %c0_107 = arith.constant 0 : index
    %c0_108 = arith.constant 0 : index
    %190 = vector.load %arg38[%c0_107, %c0_108] : memref<128x128xf32, #tpu.memory_space<vmem>>, vector<128x128xf32>
    %c0_109 = arith.constant 0 : index
    %c0_110 = arith.constant 0 : index
    %191 = vector.load %arg39[%c0_109, %c0_110] : memref<1x128xf32, #tpu.memory_space<vmem>>, vector<1x128xf32>
    %c0_111 = arith.constant 0 : index
    %c0_112 = arith.constant 0 : index
    %192 = vector.load %arg40[%c0_111, %c0_112] : memref<128x128xf32, #tpu.memory_space<vmem>>, vector<128x128xf32>
    %c0_113 = arith.constant 0 : index
    %c0_114 = arith.constant 0 : index
    %193 = vector.load %arg41[%c0_113, %c0_114] : memref<1x128xf32, #tpu.memory_space<vmem>>, vector<1x128xf32>
    %c0_115 = arith.constant 0 : index
    %c0_116 = arith.constant 0 : index
    %194 = vector.load %arg42[%c0_115, %c0_116] : memref<1x128xf32, #tpu.memory_space<vmem>>, vector<1x128xf32>
    %c0_117 = arith.constant 0 : index
    %c0_118 = arith.constant 0 : index
    %195 = vector.load %arg43[%c0_117, %c0_118] : memref<1x128xf32, #tpu.memory_space<vmem>>, vector<1x128xf32>
    %cst_119 = arith.constant dense<0.000000e+00> : vector<8x128xf32>
    %196 = tpu.matmul %187, %188, %cst_119 {dimension_numbers = #tpu.dot_dimension_numbers<[1], [0], [0], [1], [0, 0, 1, 1], [], []>} : vector<8x128xf32>, vector<128x128xf32>, vector<8x128xf32> -> vector<8x128xf32>
    %197 = vector.broadcast %189 : vector<1x128xf32> to vector<8x128xf32>
    %198 = arith.addf %196, %197 : vector<8x128xf32>
    %cst_120 = arith.constant dense<0.000000e+00> : vector<8x128xf32>
    %199 = tpu.matmul %46, %190, %cst_120 {dimension_numbers = #tpu.dot_dimension_numbers<[1], [0], [0], [1], [0, 0, 1, 1], [], []>} : vector<8x128xf32>, vector<128x128xf32>, vector<8x128xf32> -> vector<8x128xf32>
    %200 = vector.broadcast %191 : vector<1x128xf32> to vector<8x128xf32>
    %201 = arith.addf %199, %200 : vector<8x128xf32>
    %cst_121 = arith.constant dense<0.000000e+00> : vector<8x128xf32>
    %202 = tpu.matmul %28, %192, %cst_121 {dimension_numbers = #tpu.dot_dimension_numbers<[1], [0], [0], [1], [0, 0, 1, 1], [], []>} : vector<8x128xf32>, vector<128x128xf32>, vector<8x128xf32> -> vector<8x128xf32>
    %203 = vector.broadcast %193 : vector<1x128xf32> to vector<8x128xf32>
    %204 = arith.addf %202, %203 : vector<8x128xf32>
    %205 = arith.mulf %198, %201 : vector<8x128xf32>
    %206 = arith.addf %205, %204 : vector<8x128xf32>
    %cst_122 = arith.constant dense<0.000000e+00> : vector<8xf32>
    %207 = vector.multi_reduction <add>, %206, %cst_122 [1] : vector<8x128xf32> to vector<8xf32>
    %208 = vector.shape_cast %207 : vector<8xf32> to vector<8x1xf32>
    %cst_123 = arith.constant 1.280000e+02 : f32
    %209 = vector.broadcast %cst_123 : f32 to vector<8x1xf32>
    %210 = arith.divf %208, %209 : vector<8x1xf32>
    %211 = vector.broadcast %210 : vector<8x1xf32> to vector<8x128xf32>
    %212 = arith.subf %206, %211 : vector<8x128xf32>
    %213 = arith.mulf %212, %212 : vector<8x128xf32>
    %cst_124 = arith.constant dense<0.000000e+00> : vector<8xf32>
    %214 = vector.multi_reduction <add>, %213, %cst_124 [1] : vector<8x128xf32> to vector<8xf32>
    %215 = vector.shape_cast %214 : vector<8xf32> to vector<8x1xf32>
    %cst_125 = arith.constant 1.280000e+02 : f32
    %216 = vector.broadcast %cst_125 : f32 to vector<8x1xf32>
    %217 = arith.divf %215, %216 : vector<8x1xf32>
    %218 = vector.broadcast %210 : vector<8x1xf32> to vector<8x128xf32>
    %219 = arith.subf %206, %218 : vector<8x128xf32>
    %cst_126 = arith.constant 9.99999974E-6 : f32
    %220 = vector.broadcast %cst_126 : f32 to vector<8x1xf32>
    %221 = arith.addf %217, %220 : vector<8x1xf32>
    %222 = math.rsqrt %221 : vector<8x1xf32>
    %223 = vector.broadcast %222 : vector<8x1xf32> to vector<8x128xf32>
    %224 = arith.mulf %219, %223 : vector<8x128xf32>
    %225 = vector.broadcast %194 : vector<1x128xf32> to vector<8x128xf32>
    %226 = arith.mulf %224, %225 : vector<8x128xf32>
    %227 = vector.broadcast %195 : vector<1x128xf32> to vector<8x128xf32>
    %228 = arith.addf %226, %227 : vector<8x128xf32>
    %229 = arith.negf %228 : vector<8x128xf32>
    %230 = math.exp %229 : vector<8x128xf32>
    %cst_127 = arith.constant 1.000000e+00 : f32
    %231 = vector.broadcast %cst_127 : f32 to vector<8x128xf32>
    %232 = arith.addf %231, %230 : vector<8x128xf32>
    %233 = arith.divf %231, %232 : vector<8x128xf32>
    %234 = arith.mulf %228, %233 : vector<8x128xf32>
    %c0_128 = arith.constant 0 : index
    %c0_129 = arith.constant 0 : index
    %235 = vector.load %arg44[%c0_128, %c0_129] : memref<128x128xf32, #tpu.memory_space<vmem>>, vector<128x128xf32>
    %c0_130 = arith.constant 0 : index
    %c0_131 = arith.constant 0 : index
    %236 = vector.load %arg45[%c0_130, %c0_131] : memref<1x128xf32, #tpu.memory_space<vmem>>, vector<1x128xf32>
    %c0_132 = arith.constant 0 : index
    %c0_133 = arith.constant 0 : index
    %237 = vector.load %arg46[%c0_132, %c0_133] : memref<128x128xf32, #tpu.memory_space<vmem>>, vector<128x128xf32>
    %c0_134 = arith.constant 0 : index
    %c0_135 = arith.constant 0 : index
    %238 = vector.load %arg47[%c0_134, %c0_135] : memref<1x128xf32, #tpu.memory_space<vmem>>, vector<1x128xf32>
    %c0_136 = arith.constant 0 : index
    %c0_137 = arith.constant 0 : index
    %239 = vector.load %arg48[%c0_136, %c0_137] : memref<128x128xf32, #tpu.memory_space<vmem>>, vector<128x128xf32>
    %c0_138 = arith.constant 0 : index
    %c0_139 = arith.constant 0 : index
    %240 = vector.load %arg49[%c0_138, %c0_139] : memref<1x128xf32, #tpu.memory_space<vmem>>, vector<1x128xf32>
    %c0_140 = arith.constant 0 : index
    %c0_141 = arith.constant 0 : index
    %241 = vector.load %arg50[%c0_140, %c0_141] : memref<1x128xf32, #tpu.memory_space<vmem>>, vector<1x128xf32>
    %c0_142 = arith.constant 0 : index
    %c0_143 = arith.constant 0 : index
    %242 = vector.load %arg51[%c0_142, %c0_143] : memref<1x128xf32, #tpu.memory_space<vmem>>, vector<1x128xf32>
    %cst_144 = arith.constant dense<0.000000e+00> : vector<8x128xf32>
    %243 = tpu.matmul %234, %235, %cst_144 {dimension_numbers = #tpu.dot_dimension_numbers<[1], [0], [0], [1], [0, 0, 1, 1], [], []>} : vector<8x128xf32>, vector<128x128xf32>, vector<8x128xf32> -> vector<8x128xf32>
    %244 = vector.broadcast %236 : vector<1x128xf32> to vector<8x128xf32>
    %245 = arith.addf %243, %244 : vector<8x128xf32>
    %cst_145 = arith.constant dense<0.000000e+00> : vector<8x128xf32>
    %246 = tpu.matmul %46, %237, %cst_145 {dimension_numbers = #tpu.dot_dimension_numbers<[1], [0], [0], [1], [0, 0, 1, 1], [], []>} : vector<8x128xf32>, vector<128x128xf32>, vector<8x128xf32> -> vector<8x128xf32>
    %247 = vector.broadcast %238 : vector<1x128xf32> to vector<8x128xf32>
    %248 = arith.addf %246, %247 : vector<8x128xf32>
    %cst_146 = arith.constant dense<0.000000e+00> : vector<8x128xf32>
    %249 = tpu.matmul %28, %239, %cst_146 {dimension_numbers = #tpu.dot_dimension_numbers<[1], [0], [0], [1], [0, 0, 1, 1], [], []>} : vector<8x128xf32>, vector<128x128xf32>, vector<8x128xf32> -> vector<8x128xf32>
    %250 = vector.broadcast %240 : vector<1x128xf32> to vector<8x128xf32>
    %251 = arith.addf %249, %250 : vector<8x128xf32>
    %252 = arith.mulf %245, %248 : vector<8x128xf32>
    %253 = arith.addf %252, %251 : vector<8x128xf32>
    %cst_147 = arith.constant dense<0.000000e+00> : vector<8xf32>
    %254 = vector.multi_reduction <add>, %253, %cst_147 [1] : vector<8x128xf32> to vector<8xf32>
    %255 = vector.shape_cast %254 : vector<8xf32> to vector<8x1xf32>
    %cst_148 = arith.constant 1.280000e+02 : f32
    %256 = vector.broadcast %cst_148 : f32 to vector<8x1xf32>
    %257 = arith.divf %255, %256 : vector<8x1xf32>
    %258 = vector.broadcast %257 : vector<8x1xf32> to vector<8x128xf32>
    %259 = arith.subf %253, %258 : vector<8x128xf32>
    %260 = arith.mulf %259, %259 : vector<8x128xf32>
    %cst_149 = arith.constant dense<0.000000e+00> : vector<8xf32>
    %261 = vector.multi_reduction <add>, %260, %cst_149 [1] : vector<8x128xf32> to vector<8xf32>
    %262 = vector.shape_cast %261 : vector<8xf32> to vector<8x1xf32>
    %cst_150 = arith.constant 1.280000e+02 : f32
    %263 = vector.broadcast %cst_150 : f32 to vector<8x1xf32>
    %264 = arith.divf %262, %263 : vector<8x1xf32>
    %265 = vector.broadcast %257 : vector<8x1xf32> to vector<8x128xf32>
    %266 = arith.subf %253, %265 : vector<8x128xf32>
    %cst_151 = arith.constant 9.99999974E-6 : f32
    %267 = vector.broadcast %cst_151 : f32 to vector<8x1xf32>
    %268 = arith.addf %264, %267 : vector<8x1xf32>
    %269 = math.rsqrt %268 : vector<8x1xf32>
    %270 = vector.broadcast %269 : vector<8x1xf32> to vector<8x128xf32>
    %271 = arith.mulf %266, %270 : vector<8x128xf32>
    %272 = vector.broadcast %241 : vector<1x128xf32> to vector<8x128xf32>
    %273 = arith.mulf %271, %272 : vector<8x128xf32>
    %274 = vector.broadcast %242 : vector<1x128xf32> to vector<8x128xf32>
    %275 = arith.addf %273, %274 : vector<8x128xf32>
    %276 = arith.negf %275 : vector<8x128xf32>
    %277 = math.exp %276 : vector<8x128xf32>
    %cst_152 = arith.constant 1.000000e+00 : f32
    %278 = vector.broadcast %cst_152 : f32 to vector<8x128xf32>
    %279 = arith.addf %278, %277 : vector<8x128xf32>
    %280 = arith.divf %278, %279 : vector<8x128xf32>
    %281 = arith.mulf %275, %280 : vector<8x128xf32>
    %282 = arith.addf %281, %187 : vector<8x128xf32>
    %c0_153 = arith.constant 0 : index
    %c0_154 = arith.constant 0 : index
    %283 = vector.load %arg52[%c0_153, %c0_154] : memref<128x128xf32, #tpu.memory_space<vmem>>, vector<128x128xf32>
    %c0_155 = arith.constant 0 : index
    %c0_156 = arith.constant 0 : index
    %284 = vector.load %arg53[%c0_155, %c0_156] : memref<1x128xf32, #tpu.memory_space<vmem>>, vector<1x128xf32>
    %c0_157 = arith.constant 0 : index
    %c0_158 = arith.constant 0 : index
    %285 = vector.load %arg54[%c0_157, %c0_158] : memref<128x128xf32, #tpu.memory_space<vmem>>, vector<128x128xf32>
    %c0_159 = arith.constant 0 : index
    %c0_160 = arith.constant 0 : index
    %286 = vector.load %arg55[%c0_159, %c0_160] : memref<1x128xf32, #tpu.memory_space<vmem>>, vector<1x128xf32>
    %c0_161 = arith.constant 0 : index
    %c0_162 = arith.constant 0 : index
    %287 = vector.load %arg56[%c0_161, %c0_162] : memref<128x128xf32, #tpu.memory_space<vmem>>, vector<128x128xf32>
    %c0_163 = arith.constant 0 : index
    %c0_164 = arith.constant 0 : index
    %288 = vector.load %arg57[%c0_163, %c0_164] : memref<1x128xf32, #tpu.memory_space<vmem>>, vector<1x128xf32>
    %c0_165 = arith.constant 0 : index
    %c0_166 = arith.constant 0 : index
    %289 = vector.load %arg58[%c0_165, %c0_166] : memref<1x128xf32, #tpu.memory_space<vmem>>, vector<1x128xf32>
    %c0_167 = arith.constant 0 : index
    %c0_168 = arith.constant 0 : index
    %290 = vector.load %arg59[%c0_167, %c0_168] : memref<1x128xf32, #tpu.memory_space<vmem>>, vector<1x128xf32>
    %cst_169 = arith.constant dense<0.000000e+00> : vector<8x128xf32>
    %291 = tpu.matmul %282, %283, %cst_169 {dimension_numbers = #tpu.dot_dimension_numbers<[1], [0], [0], [1], [0, 0, 1, 1], [], []>} : vector<8x128xf32>, vector<128x128xf32>, vector<8x128xf32> -> vector<8x128xf32>
    %292 = vector.broadcast %284 : vector<1x128xf32> to vector<8x128xf32>
    %293 = arith.addf %291, %292 : vector<8x128xf32>
    %cst_170 = arith.constant dense<0.000000e+00> : vector<8x128xf32>
    %294 = tpu.matmul %46, %285, %cst_170 {dimension_numbers = #tpu.dot_dimension_numbers<[1], [0], [0], [1], [0, 0, 1, 1], [], []>} : vector<8x128xf32>, vector<128x128xf32>, vector<8x128xf32> -> vector<8x128xf32>
    %295 = vector.broadcast %286 : vector<1x128xf32> to vector<8x128xf32>
    %296 = arith.addf %294, %295 : vector<8x128xf32>
    %cst_171 = arith.constant dense<0.000000e+00> : vector<8x128xf32>
    %297 = tpu.matmul %28, %287, %cst_171 {dimension_numbers = #tpu.dot_dimension_numbers<[1], [0], [0], [1], [0, 0, 1, 1], [], []>} : vector<8x128xf32>, vector<128x128xf32>, vector<8x128xf32> -> vector<8x128xf32>
    %298 = vector.broadcast %288 : vector<1x128xf32> to vector<8x128xf32>
    %299 = arith.addf %297, %298 : vector<8x128xf32>
    %300 = arith.mulf %293, %296 : vector<8x128xf32>
    %301 = arith.addf %300, %299 : vector<8x128xf32>
    %cst_172 = arith.constant dense<0.000000e+00> : vector<8xf32>
    %302 = vector.multi_reduction <add>, %301, %cst_172 [1] : vector<8x128xf32> to vector<8xf32>
    %303 = vector.shape_cast %302 : vector<8xf32> to vector<8x1xf32>
    %cst_173 = arith.constant 1.280000e+02 : f32
    %304 = vector.broadcast %cst_173 : f32 to vector<8x1xf32>
    %305 = arith.divf %303, %304 : vector<8x1xf32>
    %306 = vector.broadcast %305 : vector<8x1xf32> to vector<8x128xf32>
    %307 = arith.subf %301, %306 : vector<8x128xf32>
    %308 = arith.mulf %307, %307 : vector<8x128xf32>
    %cst_174 = arith.constant dense<0.000000e+00> : vector<8xf32>
    %309 = vector.multi_reduction <add>, %308, %cst_174 [1] : vector<8x128xf32> to vector<8xf32>
    %310 = vector.shape_cast %309 : vector<8xf32> to vector<8x1xf32>
    %cst_175 = arith.constant 1.280000e+02 : f32
    %311 = vector.broadcast %cst_175 : f32 to vector<8x1xf32>
    %312 = arith.divf %310, %311 : vector<8x1xf32>
    %313 = vector.broadcast %305 : vector<8x1xf32> to vector<8x128xf32>
    %314 = arith.subf %301, %313 : vector<8x128xf32>
    %cst_176 = arith.constant 9.99999974E-6 : f32
    %315 = vector.broadcast %cst_176 : f32 to vector<8x1xf32>
    %316 = arith.addf %312, %315 : vector<8x1xf32>
    %317 = math.rsqrt %316 : vector<8x1xf32>
    %318 = vector.broadcast %317 : vector<8x1xf32> to vector<8x128xf32>
    %319 = arith.mulf %314, %318 : vector<8x128xf32>
    %320 = vector.broadcast %289 : vector<1x128xf32> to vector<8x128xf32>
    %321 = arith.mulf %319, %320 : vector<8x128xf32>
    %322 = vector.broadcast %290 : vector<1x128xf32> to vector<8x128xf32>
    %323 = arith.addf %321, %322 : vector<8x128xf32>
    %324 = arith.negf %323 : vector<8x128xf32>
    %325 = math.exp %324 : vector<8x128xf32>
    %cst_177 = arith.constant 1.000000e+00 : f32
    %326 = vector.broadcast %cst_177 : f32 to vector<8x128xf32>
    %327 = arith.addf %326, %325 : vector<8x128xf32>
    %328 = arith.divf %326, %327 : vector<8x128xf32>
    %329 = arith.mulf %323, %328 : vector<8x128xf32>
    %330 = arith.addf %329, %140 : vector<8x128xf32>
    %c0_178 = arith.constant 0 : index
    %c0_179 = arith.constant 0 : index
    %331 = vector.load %arg60[%c0_178, %c0_179] : memref<128x128xf32, #tpu.memory_space<vmem>>, vector<128x128xf32>
    %c0_180 = arith.constant 0 : index
    %c0_181 = arith.constant 0 : index
    %332 = vector.load %arg61[%c0_180, %c0_181] : memref<1x128xf32, #tpu.memory_space<vmem>>, vector<1x128xf32>
    %c0_182 = arith.constant 0 : index
    %c0_183 = arith.constant 0 : index
    %333 = vector.load %arg62[%c0_182, %c0_183] : memref<128x128xf32, #tpu.memory_space<vmem>>, vector<128x128xf32>
    %c0_184 = arith.constant 0 : index
    %c0_185 = arith.constant 0 : index
    %334 = vector.load %arg63[%c0_184, %c0_185] : memref<1x128xf32, #tpu.memory_space<vmem>>, vector<1x128xf32>
    %c0_186 = arith.constant 0 : index
    %c0_187 = arith.constant 0 : index
    %335 = vector.load %arg64[%c0_186, %c0_187] : memref<128x128xf32, #tpu.memory_space<vmem>>, vector<128x128xf32>
    %c0_188 = arith.constant 0 : index
    %c0_189 = arith.constant 0 : index
    %336 = vector.load %arg65[%c0_188, %c0_189] : memref<1x128xf32, #tpu.memory_space<vmem>>, vector<1x128xf32>
    %c0_190 = arith.constant 0 : index
    %c0_191 = arith.constant 0 : index
    %337 = vector.load %arg66[%c0_190, %c0_191] : memref<1x128xf32, #tpu.memory_space<vmem>>, vector<1x128xf32>
    %c0_192 = arith.constant 0 : index
    %c0_193 = arith.constant 0 : index
    %338 = vector.load %arg67[%c0_192, %c0_193] : memref<1x128xf32, #tpu.memory_space<vmem>>, vector<1x128xf32>
    %cst_194 = arith.constant dense<0.000000e+00> : vector<8x128xf32>
    %339 = tpu.matmul %330, %331, %cst_194 {dimension_numbers = #tpu.dot_dimension_numbers<[1], [0], [0], [1], [0, 0, 1, 1], [], []>} : vector<8x128xf32>, vector<128x128xf32>, vector<8x128xf32> -> vector<8x128xf32>
    %340 = vector.broadcast %332 : vector<1x128xf32> to vector<8x128xf32>
    %341 = arith.addf %339, %340 : vector<8x128xf32>
    %cst_195 = arith.constant dense<0.000000e+00> : vector<8x128xf32>
    %342 = tpu.matmul %46, %333, %cst_195 {dimension_numbers = #tpu.dot_dimension_numbers<[1], [0], [0], [1], [0, 0, 1, 1], [], []>} : vector<8x128xf32>, vector<128x128xf32>, vector<8x128xf32> -> vector<8x128xf32>
    %343 = vector.broadcast %334 : vector<1x128xf32> to vector<8x128xf32>
    %344 = arith.addf %342, %343 : vector<8x128xf32>
    %cst_196 = arith.constant dense<0.000000e+00> : vector<8x128xf32>
    %345 = tpu.matmul %28, %335, %cst_196 {dimension_numbers = #tpu.dot_dimension_numbers<[1], [0], [0], [1], [0, 0, 1, 1], [], []>} : vector<8x128xf32>, vector<128x128xf32>, vector<8x128xf32> -> vector<8x128xf32>
    %346 = vector.broadcast %336 : vector<1x128xf32> to vector<8x128xf32>
    %347 = arith.addf %345, %346 : vector<8x128xf32>
    %348 = arith.mulf %341, %344 : vector<8x128xf32>
    %349 = arith.addf %348, %347 : vector<8x128xf32>
    %cst_197 = arith.constant dense<0.000000e+00> : vector<8xf32>
    %350 = vector.multi_reduction <add>, %349, %cst_197 [1] : vector<8x128xf32> to vector<8xf32>
    %351 = vector.shape_cast %350 : vector<8xf32> to vector<8x1xf32>
    %cst_198 = arith.constant 1.280000e+02 : f32
    %352 = vector.broadcast %cst_198 : f32 to vector<8x1xf32>
    %353 = arith.divf %351, %352 : vector<8x1xf32>
    %354 = vector.broadcast %353 : vector<8x1xf32> to vector<8x128xf32>
    %355 = arith.subf %349, %354 : vector<8x128xf32>
    %356 = arith.mulf %355, %355 : vector<8x128xf32>
    %cst_199 = arith.constant dense<0.000000e+00> : vector<8xf32>
    %357 = vector.multi_reduction <add>, %356, %cst_199 [1] : vector<8x128xf32> to vector<8xf32>
    %358 = vector.shape_cast %357 : vector<8xf32> to vector<8x1xf32>
    %cst_200 = arith.constant 1.280000e+02 : f32
    %359 = vector.broadcast %cst_200 : f32 to vector<8x1xf32>
    %360 = arith.divf %358, %359 : vector<8x1xf32>
    %361 = vector.broadcast %353 : vector<8x1xf32> to vector<8x128xf32>
    %362 = arith.subf %349, %361 : vector<8x128xf32>
    %cst_201 = arith.constant 9.99999974E-6 : f32
    %363 = vector.broadcast %cst_201 : f32 to vector<8x1xf32>
    %364 = arith.addf %360, %363 : vector<8x1xf32>
    %365 = math.rsqrt %364 : vector<8x1xf32>
    %366 = vector.broadcast %365 : vector<8x1xf32> to vector<8x128xf32>
    %367 = arith.mulf %362, %366 : vector<8x128xf32>
    %368 = vector.broadcast %337 : vector<1x128xf32> to vector<8x128xf32>
    %369 = arith.mulf %367, %368 : vector<8x128xf32>
    %370 = vector.broadcast %338 : vector<1x128xf32> to vector<8x128xf32>
    %371 = arith.addf %369, %370 : vector<8x128xf32>
    %372 = arith.negf %371 : vector<8x128xf32>
    %373 = math.exp %372 : vector<8x128xf32>
    %cst_202 = arith.constant 1.000000e+00 : f32
    %374 = vector.broadcast %cst_202 : f32 to vector<8x128xf32>
    %375 = arith.addf %374, %373 : vector<8x128xf32>
    %376 = arith.divf %374, %375 : vector<8x128xf32>
    %377 = arith.mulf %371, %376 : vector<8x128xf32>
    %378 = arith.addf %377, %93 : vector<8x128xf32>
    %c0_203 = arith.constant 0 : index
    %c0_204 = arith.constant 0 : index
    %379 = vector.load %arg68[%c0_203, %c0_204] : memref<128x256xf32, #tpu.memory_space<vmem>>, vector<128x256xf32>
    %c0_205 = arith.constant 0 : index
    %c0_206 = arith.constant 0 : index
    %380 = vector.load %arg69[%c0_205, %c0_206] : memref<1x256xf32, #tpu.memory_space<vmem>>, vector<1x256xf32>
    %c0_207 = arith.constant 0 : index
    %c0_208 = arith.constant 0 : index
    %381 = vector.load %arg70[%c0_207, %c0_208] : memref<1x256xf32, #tpu.memory_space<vmem>>, vector<1x256xf32>
    %c0_209 = arith.constant 0 : index
    %c0_210 = arith.constant 0 : index
    %382 = vector.load %arg71[%c0_209, %c0_210] : memref<1x256xf32, #tpu.memory_space<vmem>>, vector<1x256xf32>
    %c0_211 = arith.constant 0 : index
    %c0_212 = arith.constant 0 : index
    %383 = vector.load %arg72[%c0_211, %c0_212] : memref<256x2xf32, #tpu.memory_space<vmem>>, vector<256x2xf32>
    %c0_213 = arith.constant 0 : index
    %c0_214 = arith.constant 0 : index
    %384 = vector.load %arg73[%c0_213, %c0_214] : memref<1x2xf32, #tpu.memory_space<vmem>>, vector<1x2xf32>
    %cst_215 = arith.constant dense<0.000000e+00> : vector<8x256xf32>
    %385 = tpu.matmul %378, %379, %cst_215 {dimension_numbers = #tpu.dot_dimension_numbers<[1], [0], [0], [1], [0, 0, 1, 1], [], []>} : vector<8x128xf32>, vector<128x256xf32>, vector<8x256xf32> -> vector<8x256xf32>
    %386 = vector.broadcast %380 : vector<1x256xf32> to vector<8x256xf32>
    %387 = arith.addf %385, %386 : vector<8x256xf32>
    %cst_216 = arith.constant dense<0.000000e+00> : vector<8xf32>
    %388 = vector.multi_reduction <add>, %387, %cst_216 [1] : vector<8x256xf32> to vector<8xf32>
    %389 = vector.shape_cast %388 : vector<8xf32> to vector<8x1xf32>
    %cst_217 = arith.constant 2.560000e+02 : f32
    %390 = vector.broadcast %cst_217 : f32 to vector<8x1xf32>
    %391 = arith.divf %389, %390 : vector<8x1xf32>
    %392 = vector.broadcast %391 : vector<8x1xf32> to vector<8x256xf32>
    %393 = arith.subf %387, %392 : vector<8x256xf32>
    %394 = arith.mulf %393, %393 : vector<8x256xf32>
    %cst_218 = arith.constant dense<0.000000e+00> : vector<8xf32>
    %395 = vector.multi_reduction <add>, %394, %cst_218 [1] : vector<8x256xf32> to vector<8xf32>
    %396 = vector.shape_cast %395 : vector<8xf32> to vector<8x1xf32>
    %cst_219 = arith.constant 2.560000e+02 : f32
    %397 = vector.broadcast %cst_219 : f32 to vector<8x1xf32>
    %398 = arith.divf %396, %397 : vector<8x1xf32>
    %399 = vector.broadcast %391 : vector<8x1xf32> to vector<8x256xf32>
    %400 = arith.subf %387, %399 : vector<8x256xf32>
    %cst_220 = arith.constant 9.99999974E-6 : f32
    %401 = vector.broadcast %cst_220 : f32 to vector<8x1xf32>
    %402 = arith.addf %398, %401 : vector<8x1xf32>
    %403 = math.rsqrt %402 : vector<8x1xf32>
    %404 = vector.broadcast %403 : vector<8x1xf32> to vector<8x256xf32>
    %405 = arith.mulf %400, %404 : vector<8x256xf32>
    %406 = vector.broadcast %381 : vector<1x256xf32> to vector<8x256xf32>
    %407 = arith.mulf %405, %406 : vector<8x256xf32>
    %408 = vector.broadcast %382 : vector<1x256xf32> to vector<8x256xf32>
    %409 = arith.addf %407, %408 : vector<8x256xf32>
    %410 = arith.negf %409 : vector<8x256xf32>
    %411 = math.exp %410 : vector<8x256xf32>
    %cst_221 = arith.constant 1.000000e+00 : f32
    %412 = vector.broadcast %cst_221 : f32 to vector<8x256xf32>
    %413 = arith.addf %412, %411 : vector<8x256xf32>
    %414 = arith.divf %412, %413 : vector<8x256xf32>
    %415 = arith.mulf %409, %414 : vector<8x256xf32>
    %cst_222 = arith.constant dense<0.000000e+00> : vector<8x2xf32>
    %416 = tpu.matmul %415, %383, %cst_222 {dimension_numbers = #tpu.dot_dimension_numbers<[1], [0], [0], [1], [0, 0, 1, 1], [], []>} : vector<8x256xf32>, vector<256x2xf32>, vector<8x2xf32> -> vector<8x2xf32>
    %417 = vector.broadcast %384 : vector<1x2xf32> to vector<8x2xf32>
    %418 = arith.addf %416, %417 : vector<8x2xf32>
    %c0_223 = arith.constant 0 : index
    %c0_224 = arith.constant 0 : index
    %419 = vector.load %arg74[%c0_223, %c0_224] : memref<8x2xf32, #tpu.memory_space<vmem>>, vector<8x2xf32>
    tpu.vector_store %arg74[%c0_223, %c0_224], %418 {strides = array<i32>} : memref<8x2xf32, #tpu.memory_space<vmem>>, vector<8x2xf32>,
    return
  }
  func.func @transform_0(%arg0: i32) -> (i32, i32) {
    %c0_i32 = arith.constant 0 : i32
    %c0_i32_0 = arith.constant 0 : i32
    return %arg0, %c0_i32 : i32, i32
  }
  func.func @transform_1(%arg0: i32) -> (i32, i32) {
    %c0_i32 = arith.constant 0 : i32
    %c0_i32_0 = arith.constant 0 : i32
    return %arg0, %c0_i32 : i32, i32
  }
  func.func @transform_2(%arg0: i32) -> (i32, i32) {
    %c0_i32 = arith.constant 0 : i32
    %c0_i32_0 = arith.constant 0 : i32
    return %arg0, %c0_i32 : i32, i32
  }
  func.func @transform_3(%arg0: i32) -> (i32, i32) {
    %c0_i32 = arith.constant 0 : i32
    %c0_i32_0 = arith.constant 0 : i32
    %c0_i32_1 = arith.constant 0 : i32
    return %c0_i32, %c0_i32_0 : i32, i32
  }
  func.func @transform_4(%arg0: i32) -> (i32, i32) {
    %c0_i32 = arith.constant 0 : i32
    %c0_i32_0 = arith.constant 0 : i32
    %c0_i32_1 = arith.constant 0 : i32
    return %c0_i32, %c0_i32_0 : i32, i32
  }
  func.func @transform_5(%arg0: i32) -> (i32, i32) {
    %c0_i32 = arith.constant 0 : i32
    %c0_i32_0 = arith.constant 0 : i32
    %c0_i32_1 = arith.constant 0 : i32
    return %c0_i32, %c0_i32_0 : i32, i32
  }
  func.func @transform_6(%arg0: i32) -> (i32, i32) {
    %c0_i32 = arith.constant 0 : i32
    %c0_i32_0 = arith.constant 0 : i32
    %c0_i32_1 = arith.constant 0 : i32
    return %c0_i32, %c0_i32_0 : i32, i32
  }
  func.func @transform_7(%arg0: i32) -> (i32, i32) {
    %c0_i32 = arith.constant 0 : i32
    %c0_i32_0 = arith.constant 0 : i32
    %c0_i32_1 = arith.constant 0 : i32
    return %c0_i32, %c0_i32_0 : i32, i32
  }
  func.func @transform_8(%arg0: i32) -> (i32, i32) {
    %c0_i32 = arith.constant 0 : i32
    %c0_i32_0 = arith.constant 0 : i32
    %c0_i32_1 = arith.constant 0 : i32
    return %c0_i32, %c0_i32_0 : i32, i32
  }
  func.func @transform_9(%arg0: i32) -> (i32, i32) {
    %c0_i32 = arith.constant 0 : i32
    %c0_i32_0 = arith.constant 0 : i32
    %c0_i32_1 = arith.constant 0 : i32
    return %c0_i32, %c0_i32_0 : i32, i32
  }
  func.func @transform_10(%arg0: i32) -> (i32, i32) {
    %c0_i32 = arith.constant 0 : i32
    %c0_i32_0 = arith.constant 0 : i32
    %c0_i32_1 = arith.constant 0 : i32
    return %c0_i32, %c0_i32_0 : i32, i32
  }
  func.func @transform_11(%arg0: i32) -> (i32, i32) {
    %c0_i32 = arith.constant 0 : i32
    %c0_i32_0 = arith.constant 0 : i32
    %c0_i32_1 = arith.constant 0 : i32
    return %c0_i32, %c0_i32_0 : i32, i32
  }
  func.func @transform_12(%arg0: i32) -> (i32, i32) {
    %c0_i32 = arith.constant 0 : i32
    %c0_i32_0 = arith.constant 0 : i32
    %c0_i32_1 = arith.constant 0 : i32
    return %c0_i32, %c0_i32_0 : i32, i32
  }
  func.func @transform_13(%arg0: i32) -> (i32, i32) {
    %c0_i32 = arith.constant 0 : i32
    %c0_i32_0 = arith.constant 0 : i32
    %c0_i32_1 = arith.constant 0 : i32
    return %c0_i32, %c0_i32_0 : i32, i32
  }
  func.func @transform_14(%arg0: i32) -> (i32, i32) {
    %c0_i32 = arith.constant 0 : i32
    %c0_i32_0 = arith.constant 0 : i32
    %c0_i32_1 = arith.constant 0 : i32
    return %c0_i32, %c0_i32_0 : i32, i32
  }
  func.func @transform_15(%arg0: i32) -> (i32, i32) {
    %c0_i32 = arith.constant 0 : i32
    %c0_i32_0 = arith.constant 0 : i32
    %c0_i32_1 = arith.constant 0 : i32
    return %c0_i32, %c0_i32_0 : i32, i32
  }
  func.func @transform_16(%arg0: i32) -> (i32, i32) {
    %c0_i32 = arith.constant 0 : i32
    %c0_i32_0 = arith.constant 0 : i32
    %c0_i32_1 = arith.constant 0 : i32
    return %c0_i32, %c0_i32_0 : i32, i32
  }
  func.func @transform_17(%arg0: i32) -> (i32, i32) {
    %c0_i32 = arith.constant 0 : i32
    %c0_i32_0 = arith.constant 0 : i32
    %c0_i32_1 = arith.constant 0 : i32
    return %c0_i32, %c0_i32_0 : i32, i32
  }
  func.func @transform_18(%arg0: i32) -> (i32, i32) {
    %c0_i32 = arith.constant 0 : i32
    %c0_i32_0 = arith.constant 0 : i32
    %c0_i32_1 = arith.constant 0 : i32
    return %c0_i32, %c0_i32_0 : i32, i32
  }
  func.func @transform_19(%arg0: i32) -> (i32, i32) {
    %c0_i32 = arith.constant 0 : i32
    %c0_i32_0 = arith.constant 0 : i32
    %c0_i32_1 = arith.constant 0 : i32
    return %c0_i32, %c0_i32_0 : i32, i32
  }
  func.func @transform_20(%arg0: i32) -> (i32, i32) {
    %c0_i32 = arith.constant 0 : i32
    %c0_i32_0 = arith.constant 0 : i32
    %c0_i32_1 = arith.constant 0 : i32
    return %c0_i32, %c0_i32_0 : i32, i32
  }
  func.func @transform_21(%arg0: i32) -> (i32, i32) {
    %c0_i32 = arith.constant 0 : i32
    %c0_i32_0 = arith.constant 0 : i32
    %c0_i32_1 = arith.constant 0 : i32
    return %c0_i32, %c0_i32_0 : i32, i32
  }
  func.func @transform_22(%arg0: i32) -> (i32, i32) {
    %c0_i32 = arith.constant 0 : i32
    %c0_i32_0 = arith.constant 0 : i32
    %c0_i32_1 = arith.constant 0 : i32
    return %c0_i32, %c0_i32_0 : i32, i32
  }
  func.func @transform_23(%arg0: i32) -> (i32, i32) {
    %c0_i32 = arith.constant 0 : i32
    %c0_i32_0 = arith.constant 0 : i32
    %c0_i32_1 = arith.constant 0 : i32
    return %c0_i32, %c0_i32_0 : i32, i32
  }
  func.func @transform_24(%arg0: i32) -> (i32, i32) {
    %c0_i32 = arith.constant 0 : i32
    %c0_i32_0 = arith.constant 0 : i32
    %c0_i32_1 = arith.constant 0 : i32
    return %c0_i32, %c0_i32_0 : i32, i32
  }
  func.func @transform_25(%arg0: i32) -> (i32, i32) {
    %c0_i32 = arith.constant 0 : i32
    %c0_i32_0 = arith.constant 0 : i32
    %c0_i32_1 = arith.constant 0 : i32
    return %c0_i32, %c0_i32_0 : i32, i32
  }
  func.func @transform_26(%arg0: i32) -> (i32, i32) {
    %c0_i32 = arith.constant 0 : i32
    %c0_i32_0 = arith.constant 0 : i32
    %c0_i32_1 = arith.constant 0 : i32
    return %c0_i32, %c0_i32_0 : i32, i32
  }
  func.func @transform_27(%arg0: i32) -> (i32, i32) {
    %c0_i32 = arith.constant 0 : i32
    %c0_i32_0 = arith.constant 0 : i32
    %c0_i32_1 = arith.constant 0 : i32
    return %c0_i32, %c0_i32_0 : i32, i32
  }
  func.func @transform_28(%arg0: i32) -> (i32, i32) {
    %c0_i32 = arith.constant 0 : i32
    %c0_i32_0 = arith.constant 0 : i32
    %c0_i32_1 = arith.constant 0 : i32
    return %c0_i32, %c0_i32_0 : i32, i32
  }
  func.func @transform_29(%arg0: i32) -> (i32, i32) {
    %c0_i32 = arith.constant 0 : i32
    %c0_i32_0 = arith.constant 0 : i32
    %c0_i32_1 = arith.constant 0 : i32
    return %c0_i32, %c0_i32_0 : i32, i32
  }
  func.func @transform_30(%arg0: i32) -> (i32, i32) {
    %c0_i32 = arith.constant 0 : i32
    %c0_i32_0 = arith.constant 0 : i32
    %c0_i32_1 = arith.constant 0 : i32
    return %c0_i32, %c0_i32_0 : i32, i32
  }
  func.func @transform_31(%arg0: i32) -> (i32, i32) {
    %c0_i32 = arith.constant 0 : i32
    %c0_i32_0 = arith.constant 0 : i32
    %c0_i32_1 = arith.constant 0 : i32
    return %c0_i32, %c0_i32_0 : i32, i32
  }
  func.func @transform_32(%arg0: i32) -> (i32, i32) {
    %c0_i32 = arith.constant 0 : i32
    %c0_i32_0 = arith.constant 0 : i32
    %c0_i32_1 = arith.constant 0 : i32
    return %c0_i32, %c0_i32_0 : i32, i32
  }
  func.func @transform_33(%arg0: i32) -> (i32, i32) {
    %c0_i32 = arith.constant 0 : i32
    %c0_i32_0 = arith.constant 0 : i32
    %c0_i32_1 = arith.constant 0 : i32
    return %c0_i32, %c0_i32_0 : i32, i32
  }
  func.func @transform_34(%arg0: i32) -> (i32, i32) {
    %c0_i32 = arith.constant 0 : i32
    %c0_i32_0 = arith.constant 0 : i32
    %c0_i32_1 = arith.constant 0 : i32
    return %c0_i32, %c0_i32_0 : i32, i32
  }
  func.func @transform_35(%arg0: i32) -> (i32, i32) {
    %c0_i32 = arith.constant 0 : i32
    %c0_i32_0 = arith.constant 0 : i32
    %c0_i32_1 = arith.constant 0 : i32
    return %c0_i32, %c0_i32_0 : i32, i32
  }
  func.func @transform_36(%arg0: i32) -> (i32, i32) {
    %c0_i32 = arith.constant 0 : i32
    %c0_i32_0 = arith.constant 0 : i32
    %c0_i32_1 = arith.constant 0 : i32
    return %c0_i32, %c0_i32_0 : i32, i32
  }
  func.func @transform_37(%arg0: i32) -> (i32, i32) {
    %c0_i32 = arith.constant 0 : i32
    %c0_i32_0 = arith.constant 0 : i32
    %c0_i32_1 = arith.constant 0 : i32
    return %c0_i32, %c0_i32_0 : i32, i32
  }
  func.func @transform_38(%arg0: i32) -> (i32, i32) {
    %c0_i32 = arith.constant 0 : i32
    %c0_i32_0 = arith.constant 0 : i32
    %c0_i32_1 = arith.constant 0 : i32
    return %c0_i32, %c0_i32_0 : i32, i32
  }
  func.func @transform_39(%arg0: i32) -> (i32, i32) {
    %c0_i32 = arith.constant 0 : i32
    %c0_i32_0 = arith.constant 0 : i32
    %c0_i32_1 = arith.constant 0 : i32
    return %c0_i32, %c0_i32_0 : i32, i32
  }
  func.func @transform_40(%arg0: i32) -> (i32, i32) {
    %c0_i32 = arith.constant 0 : i32
    %c0_i32_0 = arith.constant 0 : i32
    %c0_i32_1 = arith.constant 0 : i32
    return %c0_i32, %c0_i32_0 : i32, i32
  }
  func.func @transform_41(%arg0: i32) -> (i32, i32) {
    %c0_i32 = arith.constant 0 : i32
    %c0_i32_0 = arith.constant 0 : i32
    %c0_i32_1 = arith.constant 0 : i32
    return %c0_i32, %c0_i32_0 : i32, i32
  }
  func.func @transform_42(%arg0: i32) -> (i32, i32) {
    %c0_i32 = arith.constant 0 : i32
    %c0_i32_0 = arith.constant 0 : i32
    %c0_i32_1 = arith.constant 0 : i32
    return %c0_i32, %c0_i32_0 : i32, i32
  }
  func.func @transform_43(%arg0: i32) -> (i32, i32) {
    %c0_i32 = arith.constant 0 : i32
    %c0_i32_0 = arith.constant 0 : i32
    %c0_i32_1 = arith.constant 0 : i32
    return %c0_i32, %c0_i32_0 : i32, i32
  }
  func.func @transform_44(%arg0: i32) -> (i32, i32) {
    %c0_i32 = arith.constant 0 : i32
    %c0_i32_0 = arith.constant 0 : i32
    %c0_i32_1 = arith.constant 0 : i32
    return %c0_i32, %c0_i32_0 : i32, i32
  }
  func.func @transform_45(%arg0: i32) -> (i32, i32) {
    %c0_i32 = arith.constant 0 : i32
    %c0_i32_0 = arith.constant 0 : i32
    %c0_i32_1 = arith.constant 0 : i32
    return %c0_i32, %c0_i32_0 : i32, i32
  }
  func.func @transform_46(%arg0: i32) -> (i32, i32) {
    %c0_i32 = arith.constant 0 : i32
    %c0_i32_0 = arith.constant 0 : i32
    %c0_i32_1 = arith.constant 0 : i32
    return %c0_i32, %c0_i32_0 : i32, i32
  }
  func.func @transform_47(%arg0: i32) -> (i32, i32) {
    %c0_i32 = arith.constant 0 : i32
    %c0_i32_0 = arith.constant 0 : i32
    %c0_i32_1 = arith.constant 0 : i32
    return %c0_i32, %c0_i32_0 : i32, i32
  }
  func.func @transform_48(%arg0: i32) -> (i32, i32) {
    %c0_i32 = arith.constant 0 : i32
    %c0_i32_0 = arith.constant 0 : i32
    %c0_i32_1 = arith.constant 0 : i32
    return %c0_i32, %c0_i32_0 : i32, i32
  }
  func.func @transform_49(%arg0: i32) -> (i32, i32) {
    %c0_i32 = arith.constant 0 : i32
    %c0_i32_0 = arith.constant 0 : i32
    %c0_i32_1 = arith.constant 0 : i32
    return %c0_i32, %c0_i32_0 : i32, i32
  }
  func.func @transform_50(%arg0: i32) -> (i32, i32) {
    %c0_i32 = arith.constant 0 : i32
    %c0_i32_0 = arith.constant 0 : i32
    %c0_i32_1 = arith.constant 0 : i32
    return %c0_i32, %c0_i32_0 : i32, i32
  }
  func.func @transform_51(%arg0: i32) -> (i32, i32) {
    %c0_i32 = arith.constant 0 : i32
    %c0_i32_0 = arith.constant 0 : i32
    %c0_i32_1 = arith.constant 0 : i32
    return %c0_i32, %c0_i32_0 : i32, i32
  }
  func.func @transform_52(%arg0: i32) -> (i32, i32) {
    %c0_i32 = arith.constant 0 : i32
    %c0_i32_0 = arith.constant 0 : i32
    %c0_i32_1 = arith.constant 0 : i32
    return %c0_i32, %c0_i32_0 : i32, i32
  }
  func.func @transform_53(%arg0: i32) -> (i32, i32) {
    %c0_i32 = arith.constant 0 : i32
    %c0_i32_0 = arith.constant 0 : i32
    %c0_i32_1 = arith.constant 0 : i32
    return %c0_i32, %c0_i32_0 : i32, i32
  }
  func.func @transform_54(%arg0: i32) -> (i32, i32) {
    %c0_i32 = arith.constant 0 : i32
    %c0_i32_0 = arith.constant 0 : i32
    %c0_i32_1 = arith.constant 0 : i32
    return %c0_i32, %c0_i32_0 : i32, i32
  }
  func.func @transform_55(%arg0: i32) -> (i32, i32) {
    %c0_i32 = arith.constant 0 : i32
    %c0_i32_0 = arith.constant 0 : i32
    %c0_i32_1 = arith.constant 0 : i32
    return %c0_i32, %c0_i32_0 : i32, i32
  }
  func.func @transform_56(%arg0: i32) -> (i32, i32) {
    %c0_i32 = arith.constant 0 : i32
    %c0_i32_0 = arith.constant 0 : i32
    %c0_i32_1 = arith.constant 0 : i32
    return %c0_i32, %c0_i32_0 : i32, i32
  }
  func.func @transform_57(%arg0: i32) -> (i32, i32) {
    %c0_i32 = arith.constant 0 : i32
    %c0_i32_0 = arith.constant 0 : i32
    %c0_i32_1 = arith.constant 0 : i32
    return %c0_i32, %c0_i32_0 : i32, i32
  }
  func.func @transform_58(%arg0: i32) -> (i32, i32) {
    %c0_i32 = arith.constant 0 : i32
    %c0_i32_0 = arith.constant 0 : i32
    %c0_i32_1 = arith.constant 0 : i32
    return %c0_i32, %c0_i32_0 : i32, i32
  }
  func.func @transform_59(%arg0: i32) -> (i32, i32) {
    %c0_i32 = arith.constant 0 : i32
    %c0_i32_0 = arith.constant 0 : i32
    %c0_i32_1 = arith.constant 0 : i32
    return %c0_i32, %c0_i32_0 : i32, i32
  }
  func.func @transform_60(%arg0: i32) -> (i32, i32) {
    %c0_i32 = arith.constant 0 : i32
    %c0_i32_0 = arith.constant 0 : i32
    %c0_i32_1 = arith.constant 0 : i32
    return %c0_i32, %c0_i32_0 : i32, i32
  }
  func.func @transform_61(%arg0: i32) -> (i32, i32) {
    %c0_i32 = arith.constant 0 : i32
    %c0_i32_0 = arith.constant 0 : i32
    %c0_i32_1 = arith.constant 0 : i32
    return %c0_i32, %c0_i32_0 : i32, i32
  }
  func.func @transform_62(%arg0: i32) -> (i32, i32) {
    %c0_i32 = arith.constant 0 : i32
    %c0_i32_0 = arith.constant 0 : i32
    %c0_i32_1 = arith.constant 0 : i32
    return %c0_i32, %c0_i32_0 : i32, i32
  }
  func.func @transform_63(%arg0: i32) -> (i32, i32) {
    %c0_i32 = arith.constant 0 : i32
    %c0_i32_0 = arith.constant 0 : i32
    %c0_i32_1 = arith.constant 0 : i32
    return %c0_i32, %c0_i32_0 : i32, i32
  }
  func.func @transform_64(%arg0: i32) -> (i32, i32) {
    %c0_i32 = arith.constant 0 : i32
    %c0_i32_0 = arith.constant 0 : i32
    %c0_i32_1 = arith.constant 0 : i32
    return %c0_i32, %c0_i32_0 : i32, i32
  }
  func.func @transform_65(%arg0: i32) -> (i32, i32) {
    %c0_i32 = arith.constant 0 : i32
    %c0_i32_0 = arith.constant 0 : i32
    %c0_i32_1 = arith.constant 0 : i32
    return %c0_i32, %c0_i32_0 : i32, i32
  }
  func.func @transform_66(%arg0: i32) -> (i32, i32) {
    %c0_i32 = arith.constant 0 : i32
    %c0_i32_0 = arith.constant 0 : i32
    %c0_i32_1 = arith.constant 0 : i32
    return %c0_i32, %c0_i32_0 : i32, i32
  }
  func.func @transform_67(%arg0: i32) -> (i32, i32) {
    %c0_i32 = arith.constant 0 : i32
    %c0_i32_0 = arith.constant 0 : i32
    %c0_i32_1 = arith.constant 0 : i32
    return %c0_i32, %c0_i32_0 : i32, i32
  }
  func.func @transform_68(%arg0: i32) -> (i32, i32) {
    %c0_i32 = arith.constant 0 : i32
    %c0_i32_0 = arith.constant 0 : i32
    %c0_i32_1 = arith.constant 0 : i32
    return %c0_i32, %c0_i32_0 : i32, i32
  }
  func.func @transform_69(%arg0: i32) -> (i32, i32) {
    %c0_i32 = arith.constant 0 : i32
    %c0_i32_0 = arith.constant 0 : i32
    %c0_i32_1 = arith.constant 0 : i32
    return %c0_i32, %c0_i32_0 : i32, i32
  }
  func.func @transform_70(%arg0: i32) -> (i32, i32) {
    %c0_i32 = arith.constant 0 : i32
    %c0_i32_0 = arith.constant 0 : i32
    %c0_i32_1 = arith.constant 0 : i32
    return %c0_i32, %c0_i32_0 : i32, i32
  }
  func.func @transform_71(%arg0: i32) -> (i32, i32) {
    %c0_i32 = arith.constant 0 : i32
    %c0_i32_0 = arith.constant 0 : i32
    %c0_i32_1 = arith.constant 0 : i32
    return %c0_i32, %c0_i32_0 : i32, i32
  }
  func.func @transform_72(%arg0: i32) -> (i32, i32) {
    %c0_i32 = arith.constant 0 : i32
    %c0_i32_0 = arith.constant 0 : i32
    %c0_i32_1 = arith.constant 0 : i32
    return %c0_i32, %c0_i32_0 : i32, i32
  }
  func.func @transform_73(%arg0: i32) -> (i32, i32) {
    %c0_i32 = arith.constant 0 : i32
    %c0_i32_0 = arith.constant 0 : i32
    return %arg0, %c0_i32 : i32, i32
  }
}

</mosaic_0001>

<llo_original>
// kernel: tpu_custom_call.1
$region0: #{tpu_custom_call.1}
  #allocation0 [shape = 'u32[]', space=smem, size = 0x4, offset = 0x4, fixed_abs, tag = 'smem constant byte address 0x4 - core index']
  #allocation1 [shape = 'u32[72,128]{1,0:T(1,128)}', space=vmem, size = 0x9000, scoped, tag = 'internal scratch']
  %s0 = inlined_call_operand.smem [shape: u32[74], index: -1, kind: input, shape index: {}]
  %s1 = sld [smem:[%s0]]
  %s2 = scalar_lea.smem %s0, 1
  %s3 = sld [smem:[%s2]]
  %s4 = scalar_lea.smem %s0, 2
  %s5 = sld [smem:[%s4]]
  %s6 = scalar_lea.smem %s0, 3
  %s7 = sld [smem:[%s6]]
  %s8 = scalar_lea.smem %s0, 4
  %s9 = sld [smem:[%s8]]
  %s10 = scalar_lea.smem %s0, 5
  %s11 = sld [smem:[%s10]]
  %s12 = scalar_lea.smem %s0, 6
  %s13 = sld [smem:[%s12]]
  %s14 = scalar_lea.smem %s0, 7
  %s15 = sld [smem:[%s14]]
  %s16 = scalar_lea.smem %s0, 8
  %s17 = sld [smem:[%s16]]
  %s18 = scalar_lea.smem %s0, 9
  %s19 = sld [smem:[%s18]]
  %s20 = scalar_lea.smem %s0, 10
  %s21 = sld [smem:[%s20]]
  %s22 = scalar_lea.smem %s0, 11
  %s23 = sld [smem:[%s22]]
  %s24 = scalar_lea.smem %s0, 12
  %s25 = sld [smem:[%s24]]
  %s26 = scalar_lea.smem %s0, 13
  %s27 = sld [smem:[%s26]]
  %s28 = scalar_lea.smem %s0, 14
  %s29 = sld [smem:[%s28]]
  %s30 = scalar_lea.smem %s0, 15
  %s31 = sld [smem:[%s30]]
  %s32 = scalar_lea.smem %s0, 16
  %s33 = sld [smem:[%s32]]
  %s34 = scalar_lea.smem %s0, 17
  %s35 = sld [smem:[%s34]]
  %s36 = scalar_lea.smem %s0, 18
  %s37 = sld [smem:[%s36]]
  %s38 = scalar_lea.smem %s0, 19
  %s39 = sld [smem:[%s38]]
  %s40 = scalar_lea.smem %s0, 20
  %s41 = sld [smem:[%s40]]
  %s42 = scalar_lea.smem %s0, 21
  %s43 = sld [smem:[%s42]]
  %s44 = scalar_lea.smem %s0, 22
  %s45 = sld [smem:[%s44]]
  %s46 = scalar_lea.smem %s0, 23
  %s47 = sld [smem:[%s46]]
  %s48 = scalar_lea.smem %s0, 24
  %s49 = sld [smem:[%s48]]
  %s50 = scalar_lea.smem %s0, 25
  %s51 = sld [smem:[%s50]]
  %s52 = scalar_lea.smem %s0, 26
  %s53 = sld [smem:[%s52]]
  %s54 = scalar_lea.smem %s0, 27
  %s55 = sld [smem:[%s54]]
  %s56 = scalar_lea.smem %s0, 28
  %s57 = sld [smem:[%s56]]
  %s58 = scalar_lea.smem %s0, 29
  %s59 = sld [smem:[%s58]]
  %s60 = scalar_lea.smem %s0, 30
  %s61 = sld [smem:[%s60]]
  %s62 = scalar_lea.smem %s0, 31
  %s63 = sld [smem:[%s62]]
  %s64 = scalar_lea.smem %s0, 32
  %s65 = sld [smem:[%s64]]
  %s66 = scalar_lea.smem %s0, 33
  %s67 = sld [smem:[%s66]]
  %s68 = scalar_lea.smem %s0, 34
  %s69 = sld [smem:[%s68]]
  %s70 = scalar_lea.smem %s0, 35
  %s71 = sld [smem:[%s70]]
  %s72 = scalar_lea.smem %s0, 36
  %s73 = sld [smem:[%s72]]
  %s74 = scalar_lea.smem %s0, 37
  %s75 = sld [smem:[%s74]]
  %s76 = scalar_lea.smem %s0, 38
  %s77 = sld [smem:[%s76]]
  %s78 = scalar_lea.smem %s0, 39
  %s79 = sld [smem:[%s78]]
  %s80 = scalar_lea.smem %s0, 40
  %s81 = sld [smem:[%s80]]
  %s82 = scalar_lea.smem %s0, 41
  %s83 = sld [smem:[%s82]]
  %s84 = scalar_lea.smem %s0, 42
  %s85 = sld [smem:[%s84]]
  %s86 = scalar_lea.smem %s0, 43
  %s87 = sld [smem:[%s86]]
  %s88 = scalar_lea.smem %s0, 44
  %s89 = sld [smem:[%s88]]
  %s90 = scalar_lea.smem %s0, 45
  %s91 = sld [smem:[%s90]]
  %s92 = scalar_lea.smem %s0, 46
  %s93 = sld [smem:[%s92]]
  %s94 = scalar_lea.smem %s0, 47
  %s95 = sld [smem:[%s94]]
  %s96 = scalar_lea.smem %s0, 48
  %s97 = sld [smem:[%s96]]
  %s98 = scalar_lea.smem %s0, 49
  %s99 = sld [smem:[%s98]]
  %s100 = scalar_lea.smem %s0, 50
  %s101 = sld [smem:[%s100]]
  %s102 = scalar_lea.smem %s0, 51
  %s103 = sld [smem:[%s102]]
  %s104 = scalar_lea.smem %s0, 52
  %s105 = sld [smem:[%s104]]
  %s106 = scalar_lea.smem %s0, 53
  %s107 = sld [smem:[%s106]]
  %s108 = scalar_lea.smem %s0, 54
  %s109 = sld [smem:[%s108]]
  %s110 = scalar_lea.smem %s0, 55
  %s111 = sld [smem:[%s110]]
  %s112 = scalar_lea.smem %s0, 56
  %s113 = sld [smem:[%s112]]
  %s114 = scalar_lea.smem %s0, 57
  %s115 = sld [smem:[%s114]]
  %s116 = scalar_lea.smem %s0, 58
  %s117 = sld [smem:[%s116]]
  %s118 = scalar_lea.smem %s0, 59
  %s119 = sld [smem:[%s118]]
  %s120 = scalar_lea.smem %s0, 60
  %s121 = sld [smem:[%s120]]
  %s122 = scalar_lea.smem %s0, 61
  %s123 = sld [smem:[%s122]]
  %s124 = scalar_lea.smem %s0, 62
  %s125 = sld [smem:[%s124]]
  %s126 = scalar_lea.smem %s0, 63
  %s127 = sld [smem:[%s126]]
  %s128 = scalar_lea.smem %s0, 64
  %s129 = sld [smem:[%s128]]
  %s130 = scalar_lea.smem %s0, 65
  %s131 = sld [smem:[%s130]]
  %s132 = scalar_lea.smem %s0, 66
  %s133 = sld [smem:[%s132]]
  %s134 = scalar_lea.smem %s0, 67
  %s135 = sld [smem:[%s134]]
  %s136 = scalar_lea.smem %s0, 68
  %s137 = sld [smem:[%s136]]
  %s138 = scalar_lea.smem %s0, 69
  %s139 = sld [smem:[%s138]]
  %s140 = scalar_lea.smem %s0, 70
  %s141 = sld [smem:[%s140]]
  %s142 = scalar_lea.smem %s0, 71
  %s143 = sld [smem:[%s142]]
  %s144 = scalar_lea.smem %s0, 72
  %s145 = sld [smem:[%s144]]
  %s146 = scalar_lea.smem %s0, 73
  %s147 = sld [smem:[%s146]]
  %s148 = sld [smem:[#allocation0]]
  $region430: #{tpu_custom_call.1} parent=0
    _
  %s150 = ssub.s32 1, %s148
  %s151 = scalar_select 0, %s150, %s148
  $region1: #{tpu_custom_call.1} parent=0
    #allocation2 [shape = 'u8[4096]{0}', space=vmem, size = 0x1000, scoped, tag = 'input window, operand 2, single buffered']
    #allocation3 [shape = 's32[1]{0}', space=sflag, size = 0x4, scoped, tag = 'scoped memory for tpu_custom_call.1']
    #allocation4 [shape = 'u8[65536]{0}', space=vmem, size = 0x10000, scoped, tag = 'input window, operand 3, single buffered']
    #allocation5 [shape = 's32[1]{0}', space=sflag, size = 0x4, scoped, tag = 'scoped memory for tpu_custom_call.1']
    #allocation6 [shape = 'u8[65536]{0}', space=vmem, size = 0x10000, scoped, tag = 'input window, operand 5, single buffered']
    #allocation7 [shape = 'u8[512]{0}', space=vmem, size = 0x400, scoped, tag = 'input window, operand 6, single buffered']
    #allocation8 [shape = 's32[1]{0}', space=sflag, size = 0x4, scoped, tag = 'scoped memory for tpu_custom_call.1']
    #allocation9 [shape = 'u8[4096]{0}', space=vmem, size = 0x1000, scoped, tag = 'input window, operand 7, single buffered']
    #allocation10 [shape = 'u8[512]{0}', space=vmem, size = 0x400, scoped, tag = 'input window, operand 8, single buffered']
    #allocation11 [shape = 's32[1]{0}', space=sflag, size = 0x4, scoped, tag = 'scoped memory for tpu_custom_call.1']
    #allocation12 [shape = 'u8[65536]{0}', space=vmem, size = 0x10000, scoped, tag = 'input window, operand 9, single buffered']
    #allocation13 [shape = 'u8[65536]{0}', space=vmem, size = 0x10000, scoped, tag = 'input window, operand 13, single buffered']
    #allocation14 [shape = 's32[1]{0}', space=sflag, size = 0x4, scoped, tag = 'scoped memory for tpu_custom_call.1']
    #allocation15 [shape = 'u8[65536]{0}', space=vmem, size = 0x10000, scoped, tag = 'input window, operand 15, single buffered']
    #allocation16 [shape = 'u8[65536]{0}', space=vmem, size = 0x10000, scoped, tag = 'input window, operand 19, single buffered']
    #allocation17 [shape = 's32[1]{0}', space=sflag, size = 0x4, scoped, tag = 'scoped memory for tpu_custom_call.1']
    #allocation18 [shape = 'u8[65536]{0}', space=vmem, size = 0x10000, scoped, tag = 'input window, operand 21, single buffered']
    #allocation19 [shape = 'u8[65536]{0}', space=vmem, size = 0x10000, scoped, tag = 'input window, operand 23, single buffered']
    #allocation20 [shape = 's32[1]{0}', space=sflag, size = 0x4, scoped, tag = 'scoped memory for tpu_custom_call.1']
    #allocation21 [shape = 'u8[65536]{0}', space=vmem, size = 0x10000, scoped, tag = 'input window, operand 27, single buffered']
    #allocation22 [shape = 'u8[65536]{0}', space=vmem, size = 0x10000, scoped, tag = 'input window, operand 29, single buffered']
    #allocation23 [shape = 's32[1]{0}', space=sflag, size = 0x4, scoped, tag = 'scoped memory for tpu_custom_call.1']
    #allocation24 [shape = 'u8[65536]{0}', space=vmem, size = 0x10000, scoped, tag = 'input window, operand 31, single buffered']
    #allocation25 [shape = 'u8[65536]{0}', space=vmem, size = 0x10000, scoped, tag = 'input window, operand 35, single buffered']
    #allocation26 [shape = 's32[1]{0}', space=sflag, size = 0x4, scoped, tag = 'scoped memory for tpu_custom_call.1']
    #allocation27 [shape = 'u8[65536]{0}', space=vmem, size = 0x10000, scoped, tag = 'input window, operand 37, single buffered']
    #allocation28 [shape = 'u8[65536]{0}', space=vmem, size = 0x10000, scoped, tag = 'input window, operand 39, single buffered']
    #allocation29 [shape = 's32[1]{0}', space=sflag, size = 0x4, scoped, tag = 'scoped memory for tpu_custom_call.1']
    #allocation30 [shape = 'u8[65536]{0}', space=vmem, size = 0x10000, scoped, tag = 'input window, operand 43, single buffered']
    #allocation31 [shape = 'u8[65536]{0}', space=vmem, size = 0x10000, scoped, tag = 'input window, operand 45, single buffered']
    #allocation32 [shape = 's32[1]{0}', space=sflag, size = 0x4, scoped, tag = 'scoped memory for tpu_custom_call.1']
    #allocation33 [shape = 'u8[65536]{0}', space=vmem, size = 0x10000, scoped, tag = 'input window, operand 47, single buffered']
    #allocation34 [shape = 'u8[65536]{0}', space=vmem, size = 0x10000, scoped, tag = 'input window, operand 51, single buffered']
    #allocation35 [shape = 's32[1]{0}', space=sflag, size = 0x4, scoped, tag = 'scoped memory for tpu_custom_call.1']
    #allocation36 [shape = 'u8[65536]{0}', space=vmem, size = 0x10000, scoped, tag = 'input window, operand 53, single buffered']
    #allocation37 [shape = 'u8[65536]{0}', space=vmem, size = 0x10000, scoped, tag = 'input window, operand 55, single buffered']
    #allocation38 [shape = 's32[1]{0}', space=sflag, size = 0x4, scoped, tag = 'scoped memory for tpu_custom_call.1']
    #allocation39 [shape = 'u8[65536]{0}', space=vmem, size = 0x10000, scoped, tag = 'input window, operand 59, single buffered']
    #allocation40 [shape = 'u8[65536]{0}', space=vmem, size = 0x10000, scoped, tag = 'input window, operand 61, single buffered']
    #allocation41 [shape = 's32[1]{0}', space=sflag, size = 0x4, scoped, tag = 'scoped memory for tpu_custom_call.1']
    #allocation42 [shape = 'u8[512]{0}', space=vmem, size = 0x400, scoped, tag = 'input window, operand 62, single buffered']
    #allocation43 [shape = 'u8[65536]{0}', space=vmem, size = 0x10000, scoped, tag = 'input window, operand 63, single buffered']
    #allocation44 [shape = 's32[1]{0}', space=sflag, size = 0x4, scoped, tag = 'scoped memory for tpu_custom_call.1']
    #allocation45 [shape = 'u8[512]{0}', space=vmem, size = 0x400, scoped, tag = 'input window, operand 64, single buffered']
    #allocation46 [shape = 'u8[512]{0}', space=vmem, size = 0x400, scoped, tag = 'input window, operand 65, single buffered']
    #allocation47 [shape = 's32[1]{0}', space=sflag, size = 0x4, scoped, tag = 'scoped memory for tpu_custom_call.1']
    #allocation48 [shape = 'u8[512]{0}', space=vmem, size = 0x400, scoped, tag = 'input window, operand 66, single buffered']
    #allocation49 [shape = 'u8[512]{0}', space=vmem, size = 0x400, scoped, tag = 'input window, operand 72, single buffered']
    #allocation50 [shape = 's32[1]{0}', space=sflag, size = 0x4, scoped, tag = 'scoped memory for tpu_custom_call.1']
    %152 = vsyncpa [#allocation3], 0
    %153 = vsyncpa [#allocation5], 0
    %154 = vsyncpa [#allocation8], 0
    %155 = vsyncpa [#allocation11], 0
    %156 = vsyncpa [#allocation14], 0
    %157 = vsyncpa [#allocation17], 0
    %158 = vsyncpa [#allocation20], 0
    %159 = vsyncpa [#allocation23], 0
    %160 = vsyncpa [#allocation26], 0
    %161 = vsyncpa [#allocation29], 0
    %162 = vsyncpa [#allocation32], 0
    %163 = vsyncpa [#allocation35], 0
    %164 = vsyncpa [#allocation38], 0
    %165 = vsyncpa [#allocation41], 0
    %166 = vsyncpa [#allocation44], 0
    %167 = vsyncpa [#allocation47], 0
    %168 = vsyncpa [#allocation50], 0
    // Predicated region
    $region2: #{tpu_custom_call.1} parent=1 // pred_check
      _
    $region3: #{tpu_custom_call.1} parent=1 // pred_check_branch
      %170 = sbr.rel (0) target = $region5
    $region4: #{tpu_custom_call.1} parent=1 // pred_region
      _
    $region5: #{tpu_custom_call.1} parent=1 // pred_fallthru
      _
    // Predicated region
    $region6: #{tpu_custom_call.1} parent=1 // pred_check
      _
    $region7: #{tpu_custom_call.1} parent=1 // pred_check_branch
      %172 = sbr.rel (0) target = $region9
    $region8: #{tpu_custom_call.1} parent=1 // pred_region
      _
    $region9: #{tpu_custom_call.1} parent=1 // pred_fallthru
      _
    // Predicated region
    $region10: #{tpu_custom_call.1} parent=1 // pred_check
      _
    $region11: #{tpu_custom_call.1} parent=1 // pred_check_branch
      %174 = sbr.rel (0) target = $region13
    $region12: #{tpu_custom_call.1} parent=1 // pred_region
      %176 = vsyncadd [#allocation3], 0
      %s178 = sshll.u32 %s5, 4
      %s179 = int_to_ptr.hbm [resolvable:$true] %s178
      %s180 = sshll.u32 [#allocation2], 4
      %s181 = int_to_ptr.vmem [resolvable:$true] %s180
      %183 = dma.hbm_to_vmem [thread:$0]  %s179, 128, %s181, [#allocation3]
    $region13: #{tpu_custom_call.1} parent=1 // pred_fallthru
      _
    // Predicated region
    $region14: #{tpu_custom_call.1} parent=1 // pred_check
      _
    $region15: #{tpu_custom_call.1} parent=1 // pred_check_branch
      %185 = sbr.rel (0) target = $region17
    $region16: #{tpu_custom_call.1} parent=1 // pred_region
      %187 = vsyncadd [#allocation5], 0
      %s188 = sshll.u32 %s7, 4
      %s189 = int_to_ptr.hbm [resolvable:$true] %s188
      %s190 = sshll.u32 [#allocation4], 4
      %s191 = int_to_ptr.vmem [resolvable:$true] %s190
      %196 = dma.hbm_to_vmem [thread:$0]  %s189, 2048, %s191, [#allocation5], 128, 128, 8
    $region17: #{tpu_custom_call.1} parent=1 // pred_fallthru
      _
    // Predicated region
    $region18: #{tpu_custom_call.1} parent=1 // pred_check
      _
    $region19: #{tpu_custom_call.1} parent=1 // pred_check_branch
      %198 = sbr.rel (0) target = $region21
    $region20: #{tpu_custom_call.1} parent=1 // pred_region
      _
    $region21: #{tpu_custom_call.1} parent=1 // pred_fallthru
      _
    // Predicated region
    $region22: #{tpu_custom_call.1} parent=1 // pred_check
      _
    $region23: #{tpu_custom_call.1} parent=1 // pred_check_branch
      %200 = sbr.rel (0) target = $region25
    $region24: #{tpu_custom_call.1} parent=1 // pred_region
      %202 = vsyncadd [#allocation5], 0
      %s203 = sshll.u32 %s11, 4
      %s204 = int_to_ptr.hbm [resolvable:$true] %s203
      %s205 = sshll.u32 [#allocation6], 4
      %s206 = int_to_ptr.vmem [resolvable:$true] %s205
      %211 = dma.hbm_to_vmem [thread:$0]  %s204, 2048, %s206, [#allocation5], 128, 128, 8
    $region25: #{tpu_custom_call.1} parent=1 // pred_fallthru
      _
    // Predicated region
    $region26: #{tpu_custom_call.1} parent=1 // pred_check
      _
    $region27: #{tpu_custom_call.1} parent=1 // pred_check_branch
      %213 = sbr.rel (0) target = $region29
    $region28: #{tpu_custom_call.1} parent=1 // pred_region
      %215 = vsyncadd [#allocation8], 0
      %s217 = sshll.u32 %s13, 4
      %s218 = int_to_ptr.hbm [resolvable:$true] %s217
      %s219 = sshll.u32 [#allocation7], 4
      %s220 = int_to_ptr.vmem [resolvable:$true] %s219
      %222 = dma.hbm_to_vmem [thread:$0]  %s218, 16, %s220, [#allocation8]
    $region29: #{tpu_custom_call.1} parent=1 // pred_fallthru
      _
    // Predicated region
    $region30: #{tpu_custom_call.1} parent=1 // pred_check
      _
    $region31: #{tpu_custom_call.1} parent=1 // pred_check_branch
      %224 = sbr.rel (0) target = $region33
    $region32: #{tpu_custom_call.1} parent=1 // pred_region
      %226 = vsyncadd [#allocation8], 0
      %s228 = sshll.u32 %s15, 4
      %s229 = int_to_ptr.hbm [resolvable:$true] %s228
      %s230 = sshll.u32 [#allocation9], 4
      %s231 = int_to_ptr.vmem [resolvable:$true] %s230
      %233 = dma.hbm_to_vmem [thread:$0]  %s229, 128, %s231, [#allocation8]
    $region33: #{tpu_custom_call.1} parent=1 // pred_fallthru
      _
    // Predicated region
    $region34: #{tpu_custom_call.1} parent=1 // pred_check
      _
    $region35: #{tpu_custom_call.1} parent=1 // pred_check_branch
      %235 = sbr.rel (0) target = $region37
    $region36: #{tpu_custom_call.1} parent=1 // pred_region
      %237 = vsyncadd [#allocation11], 0
      %s239 = sshll.u32 %s17, 4
      %s240 = int_to_ptr.hbm [resolvable:$true] %s239
      %s241 = sshll.u32 [#allocation10], 4
      %s242 = int_to_ptr.vmem [resolvable:$true] %s241
      %244 = dma.hbm_to_vmem [thread:$0]  %s240, 16, %s242, [#allocation11]
    $region37: #{tpu_custom_call.1} parent=1 // pred_fallthru
      _
    // Predicated region
    $region38: #{tpu_custom_call.1} parent=1 // pred_check
      _
    $region39: #{tpu_custom_call.1} parent=1 // pred_check_branch
      %246 = sbr.rel (0) target = $region41
    $region40: #{tpu_custom_call.1} parent=1 // pred_region
      %248 = vsyncadd [#allocation11], 0
      %s249 = sshll.u32 %s19, 4
      %s250 = int_to_ptr.hbm [resolvable:$true] %s249
      %s251 = sshll.u32 [#allocation12], 4
      %s252 = int_to_ptr.vmem [resolvable:$true] %s251
      %257 = dma.hbm_to_vmem [thread:$0]  %s250, 2048, %s252, [#allocation11], 128, 128, 8
    $region41: #{tpu_custom_call.1} parent=1 // pred_fallthru
      _
    // Predicated region
    $region42: #{tpu_custom_call.1} parent=1 // pred_check
      _
    $region43: #{tpu_custom_call.1} parent=1 // pred_check_branch
      %259 = sbr.rel (0) target = $region45
    $region44: #{tpu_custom_call.1} parent=1 // pred_region
      _
    $region45: #{tpu_custom_call.1} parent=1 // pred_fallthru
      _
    // Predicated region
    $region46: #{tpu_custom_call.1} parent=1 // pred_check
      _
    $region47: #{tpu_custom_call.1} parent=1 // pred_check_branch
      %261 = sbr.rel (0) target = $region49
    $region48: #{tpu_custom_call.1} parent=1 // pred_region
      _
    $region49: #{tpu_custom_call.1} parent=1 // pred_fallthru
      _
    // Predicated region
    $region50: #{tpu_custom_call.1} parent=1 // pred_check
      _
    $region51: #{tpu_custom_call.1} parent=1 // pred_check_branch
      %263 = sbr.rel (0) target = $region53
    $region52: #{tpu_custom_call.1} parent=1 // pred_region
      _
    $region53: #{tpu_custom_call.1} parent=1 // pred_fallthru
      _
    // Predicated region
    $region54: #{tpu_custom_call.1} parent=1 // pred_check
      _
    $region55: #{tpu_custom_call.1} parent=1 // pred_check_branch
      %265 = sbr.rel (0) target = $region57
    $region56: #{tpu_custom_call.1} parent=1 // pred_region
      %267 = vsyncadd [#allocation14], 0
      %s268 = sshll.u32 %s27, 4
      %s269 = int_to_ptr.hbm [resolvable:$true] %s268
      %s270 = sshll.u32 [#allocation13], 4
      %s271 = int_to_ptr.vmem [resolvable:$true] %s270
      %276 = dma.hbm_to_vmem [thread:$0]  %s269, 2048, %s271, [#allocation14], 128, 128, 8
    $region57: #{tpu_custom_call.1} parent=1 // pred_fallthru
      _
    // Predicated region
    $region58: #{tpu_custom_call.1} parent=1 // pred_check
      _
    $region59: #{tpu_custom_call.1} parent=1 // pred_check_branch
      %278 = sbr.rel (0) target = $region61
    $region60: #{tpu_custom_call.1} parent=1 // pred_region
      _
    $region61: #{tpu_custom_call.1} parent=1 // pred_fallthru
      _
    // Predicated region
    $region62: #{tpu_custom_call.1} parent=1 // pred_check
      _
    $region63: #{tpu_custom_call.1} parent=1 // pred_check_branch
      %280 = sbr.rel (0) target = $region65
    $region64: #{tpu_custom_call.1} parent=1 // pred_region
      %282 = vsyncadd [#allocation14], 0
      %s283 = sshll.u32 %s31, 4
      %s284 = int_to_ptr.hbm [resolvable:$true] %s283
      %s285 = sshll.u32 [#allocation15], 4
      %s286 = int_to_ptr.vmem [resolvable:$true] %s285
      %291 = dma.hbm_to_vmem [thread:$0]  %s284, 2048, %s286, [#allocation14], 128, 128, 8
    $region65: #{tpu_custom_call.1} parent=1 // pred_fallthru
      _
    // Predicated region
    $region66: #{tpu_custom_call.1} parent=1 // pred_check
      _
    $region67: #{tpu_custom_call.1} parent=1 // pred_check_branch
      %293 = sbr.rel (0) target = $region69
    $region68: #{tpu_custom_call.1} parent=1 // pred_region
      _
    $region69: #{tpu_custom_call.1} parent=1 // pred_fallthru
      _
    // Predicated region
    $region70: #{tpu_custom_call.1} parent=1 // pred_check
      _
    $region71: #{tpu_custom_call.1} parent=1 // pred_check_branch
      %295 = sbr.rel (0) target = $region73
    $region72: #{tpu_custom_call.1} parent=1 // pred_region
      _
    $region73: #{tpu_custom_call.1} parent=1 // pred_fallthru
      _
    // Predicated region
    $region74: #{tpu_custom_call.1} parent=1 // pred_check
      _
    $region75: #{tpu_custom_call.1} parent=1 // pred_check_branch
      %297 = sbr.rel (0) target = $region77
    $region76: #{tpu_custom_call.1} parent=1 // pred_region
      _
    $region77: #{tpu_custom_call.1} parent=1 // pred_fallthru
      _
    // Predicated region
    $region78: #{tpu_custom_call.1} parent=1 // pred_check
      _
    $region79: #{tpu_custom_call.1} parent=1 // pred_check_branch
      %299 = sbr.rel (0) target = $region81
    $region80: #{tpu_custom_call.1} parent=1 // pred_region
      %301 = vsyncadd [#allocation17], 0
      %s302 = sshll.u32 %s39, 4
      %s303 = int_to_ptr.hbm [resolvable:$true] %s302
      %s304 = sshll.u32 [#allocation16], 4
      %s305 = int_to_ptr.vmem [resolvable:$true] %s304
      %310 = dma.hbm_to_vmem [thread:$0]  %s303, 2048, %s305, [#allocation17], 128, 128, 8
    $region81: #{tpu_custom_call.1} parent=1 // pred_fallthru
      _
    // Predicated region
    $region82: #{tpu_custom_call.1} parent=1 // pred_check
      _
    $region83: #{tpu_custom_call.1} parent=1 // pred_check_branch
      %312 = sbr.rel (0) target = $region85
    $region84: #{tpu_custom_call.1} parent=1 // pred_region
      _
    $region85: #{tpu_custom_call.1} parent=1 // pred_fallthru
      _
    // Predicated region
    $region86: #{tpu_custom_call.1} parent=1 // pred_check
      _
    $region87: #{tpu_custom_call.1} parent=1 // pred_check_branch
      %314 = sbr.rel (0) target = $region89
    $region88: #{tpu_custom_call.1} parent=1 // pred_region
      %316 = vsyncadd [#allocation17], 0
      %s317 = sshll.u32 %s43, 4
      %s318 = int_to_ptr.hbm [resolvable:$true] %s317
      %s319 = sshll.u32 [#allocation18], 4
      %s320 = int_to_ptr.vmem [resolvable:$true] %s319
      %325 = dma.hbm_to_vmem [thread:$0]  %s318, 2048, %s320, [#allocation17], 128, 128, 8
    $region89: #{tpu_custom_call.1} parent=1 // pred_fallthru
      _
    // Predicated region
    $region90: #{tpu_custom_call.1} parent=1 // pred_check
      _
    $region91: #{tpu_custom_call.1} parent=1 // pred_check_branch
      %327 = sbr.rel (0) target = $region93
    $region92: #{tpu_custom_call.1} parent=1 // pred_region
      _
    $region93: #{tpu_custom_call.1} parent=1 // pred_fallthru
      _
    // Predicated region
    $region94: #{tpu_custom_call.1} parent=1 // pred_check
      _
    $region95: #{tpu_custom_call.1} parent=1 // pred_check_branch
      %329 = sbr.rel (0) target = $region97
    $region96: #{tpu_custom_call.1} parent=1 // pred_region
      %331 = vsyncadd [#allocation20], 0
      %s332 = sshll.u32 %s47, 4
      %s333 = int_to_ptr.hbm [resolvable:$true] %s332
      %s334 = sshll.u32 [#allocation19], 4
      %s335 = int_to_ptr.vmem [resolvable:$true] %s334
      %340 = dma.hbm_to_vmem [thread:$0]  %s333, 2048, %s335, [#allocation20], 128, 128, 8
    $region97: #{tpu_custom_call.1} parent=1 // pred_fallthru
      _
    // Predicated region
    $region98: #{tpu_custom_call.1} parent=1 // pred_check
      _
    $region99: #{tpu_custom_call.1} parent=1 // pred_check_branch
      %342 = sbr.rel (0) target = $region101
    $region100: #{tpu_custom_call.1} parent=1 // pred_region
      _
    $region101: #{tpu_custom_call.1} parent=1 // pred_fallthru
      _
    // Predicated region
    $region102: #{tpu_custom_call.1} parent=1 // pred_check
      _
    $region103: #{tpu_custom_call.1} parent=1 // pred_check_branch
      %344 = sbr.rel (0) target = $region105
    $region104: #{tpu_custom_call.1} parent=1 // pred_region
      _
    $region105: #{tpu_custom_call.1} parent=1 // pred_fallthru
      _
    // Predicated region
    $region106: #{tpu_custom_call.1} parent=1 // pred_check
      _
    $region107: #{tpu_custom_call.1} parent=1 // pred_check_branch
      %346 = sbr.rel (0) target = $region109
    $region108: #{tpu_custom_call.1} parent=1 // pred_region
      _
    $region109: #{tpu_custom_call.1} parent=1 // pred_fallthru
      _
    // Predicated region
    $region110: #{tpu_custom_call.1} parent=1 // pred_check
      _
    $region111: #{tpu_custom_call.1} parent=1 // pred_check_branch
      %348 = sbr.rel (0) target = $region113
    $region112: #{tpu_custom_call.1} parent=1 // pred_region
      %350 = vsyncadd [#allocation20], 0
      %s351 = sshll.u32 %s55, 4
      %s352 = int_to_ptr.hbm [resolvable:$true] %s351
      %s353 = sshll.u32 [#allocation21], 4
      %s354 = int_to_ptr.vmem [resolvable:$true] %s353
      %359 = dma.hbm_to_vmem [thread:$0]  %s352, 2048, %s354, [#allocation20], 128, 128, 8
    $region113: #{tpu_custom_call.1} parent=1 // pred_fallthru
      _
    // Predicated region
    $region114: #{tpu_custom_call.1} parent=1 // pred_check
      _
    $region115: #{tpu_custom_call.1} parent=1 // pred_check_branch
      %361 = sbr.rel (0) target = $region117
    $region116: #{tpu_custom_call.1} parent=1 // pred_region
      _
    $region117: #{tpu_custom_call.1} parent=1 // pred_fallthru
      _
    // Predicated region
    $region118: #{tpu_custom_call.1} parent=1 // pred_check
      _
    $region119: #{tpu_custom_call.1} parent=1 // pred_check_branch
      %363 = sbr.rel (0) target = $region121
    $region120: #{tpu_custom_call.1} parent=1 // pred_region
      %365 = vsyncadd [#allocation23], 0
      %s366 = sshll.u32 %s59, 4
      %s367 = int_to_ptr.hbm [resolvable:$true] %s366
      %s368 = sshll.u32 [#allocation22], 4
      %s369 = int_to_ptr.vmem [resolvable:$true] %s368
      %374 = dma.hbm_to_vmem [thread:$0]  %s367, 2048, %s369, [#allocation23], 128, 128, 8
    $region121: #{tpu_custom_call.1} parent=1 // pred_fallthru
      _
    // Predicated region
    $region122: #{tpu_custom_call.1} parent=1 // pred_check
      _
    $region123: #{tpu_custom_call.1} parent=1 // pred_check_branch
      %376 = sbr.rel (0) target = $region125
    $region124: #{tpu_custom_call.1} parent=1 // pred_region
      _
    $region125: #{tpu_custom_call.1} parent=1 // pred_fallthru
      _
    // Predicated region
    $region126: #{tpu_custom_call.1} parent=1 // pred_check
      _
    $region127: #{tpu_custom_call.1} parent=1 // pred_check_branch
      %378 = sbr.rel (0) target = $region129
    $region128: #{tpu_custom_call.1} parent=1 // pred_region
      %380 = vsyncadd [#allocation23], 0
      %s381 = sshll.u32 %s63, 4
      %s382 = int_to_ptr.hbm [resolvable:$true] %s381
      %s383 = sshll.u32 [#allocation24], 4
      %s384 = int_to_ptr.vmem [resolvable:$true] %s383
      %389 = dma.hbm_to_vmem [thread:$0]  %s382, 2048, %s384, [#allocation23], 128, 128, 8
    $region129: #{tpu_custom_call.1} parent=1 // pred_fallthru
      _
    // Predicated region
    $region130: #{tpu_custom_call.1} parent=1 // pred_check
      _
    $region131: #{tpu_custom_call.1} parent=1 // pred_check_branch
      %391 = sbr.rel (0) target = $region133
    $region132: #{tpu_custom_call.1} parent=1 // pred_region
      _
    $region133: #{tpu_custom_call.1} parent=1 // pred_fallthru
      _
    // Predicated region
    $region134: #{tpu_custom_call.1} parent=1 // pred_check
      _
    $region135: #{tpu_custom_call.1} parent=1 // pred_check_branch
      %393 = sbr.rel (0) target = $region137
    $region136: #{tpu_custom_call.1} parent=1 // pred_region
      _
    $region137: #{tpu_custom_call.1} parent=1 // pred_fallthru
      _
    // Predicated region
    $region138: #{tpu_custom_call.1} parent=1 // pred_check
      _
    $region139: #{tpu_custom_call.1} parent=1 // pred_check_branch
      %395 = sbr.rel (0) target = $region141
    $region140: #{tpu_custom_call.1} parent=1 // pred_region
      _
    $region141: #{tpu_custom_call.1} parent=1 // pred_fallthru
      _
    // Predicated region
    $region142: #{tpu_custom_call.1} parent=1 // pred_check
      _
    $region143: #{tpu_custom_call.1} parent=1 // pred_check_branch
      %397 = sbr.rel (0) target = $region145
    $region144: #{tpu_custom_call.1} parent=1 // pred_region
      %399 = vsyncadd [#allocation26], 0
      %s400 = sshll.u32 %s71, 4
      %s401 = int_to_ptr.hbm [resolvable:$true] %s400
      %s402 = sshll.u32 [#allocation25], 4
      %s403 = int_to_ptr.vmem [resolvable:$true] %s402
      %408 = dma.hbm_to_vmem [thread:$0]  %s401, 2048, %s403, [#allocation26], 128, 128, 8
    $region145: #{tpu_custom_call.1} parent=1 // pred_fallthru
      _
    // Predicated region
    $region146: #{tpu_custom_call.1} parent=1 // pred_check
      _
    $region147: #{tpu_custom_call.1} parent=1 // pred_check_branch
      %410 = sbr.rel (0) target = $region149
    $region148: #{tpu_custom_call.1} parent=1 // pred_region
      _
    $region149: #{tpu_custom_call.1} parent=1 // pred_fallthru
      _
    // Predicated region
    $region150: #{tpu_custom_call.1} parent=1 // pred_check
      _
    $region151: #{tpu_custom_call.1} parent=1 // pred_check_branch
      %412 = sbr.rel (0) target = $region153
    $region152: #{tpu_custom_call.1} parent=1 // pred_region
      %414 = vsyncadd [#allocation26], 0
      %s415 = sshll.u32 %s75, 4
      %s416 = int_to_ptr.hbm [resolvable:$true] %s415
      %s417 = sshll.u32 [#allocation27], 4
      %s418 = int_to_ptr.vmem [resolvable:$true] %s417
      %423 = dma.hbm_to_vmem [thread:$0]  %s416, 2048, %s418, [#allocation26], 128, 128, 8
    $region153: #{tpu_custom_call.1} parent=1 // pred_fallthru
      _
    // Predicated region
    $region154: #{tpu_custom_call.1} parent=1 // pred_check
      _
    $region155: #{tpu_custom_call.1} parent=1 // pred_check_branch
      %425 = sbr.rel (0) target = $region157
    $region156: #{tpu_custom_call.1} parent=1 // pred_region
      _
    $region157: #{tpu_custom_call.1} parent=1 // pred_fallthru
      _
    // Predicated region
    $region158: #{tpu_custom_call.1} parent=1 // pred_check
      _
    $region159: #{tpu_custom_call.1} parent=1 // pred_check_branch
      %427 = sbr.rel (0) target = $region161
    $region160: #{tpu_custom_call.1} parent=1 // pred_region
      %429 = vsyncadd [#allocation29], 0
      %s430 = sshll.u32 %s79, 4
      %s431 = int_to_ptr.hbm [resolvable:$true] %s430
      %s432 = sshll.u32 [#allocation28], 4
      %s433 = int_to_ptr.vmem [resolvable:$true] %s432
      %438 = dma.hbm_to_vmem [thread:$0]  %s431, 2048, %s433, [#allocation29], 128, 128, 8
    $region161: #{tpu_custom_call.1} parent=1 // pred_fallthru
      _
    // Predicated region
    $region162: #{tpu_custom_call.1} parent=1 // pred_check
      _
    $region163: #{tpu_custom_call.1} parent=1 // pred_check_branch
      %440 = sbr.rel (0) target = $region165
    $region164: #{tpu_custom_call.1} parent=1 // pred_region
      _
    $region165: #{tpu_custom_call.1} parent=1 // pred_fallthru
      _
    // Predicated region
    $region166: #{tpu_custom_call.1} parent=1 // pred_check
      _
    $region167: #{tpu_custom_call.1} parent=1 // pred_check_branch
      %442 = sbr.rel (0) target = $region169
    $region168: #{tpu_custom_call.1} parent=1 // pred_region
      _
    $region169: #{tpu_custom_call.1} parent=1 // pred_fallthru
      _
    // Predicated region
    $region170: #{tpu_custom_call.1} parent=1 // pred_check
      _
    $region171: #{tpu_custom_call.1} parent=1 // pred_check_branch
      %444 = sbr.rel (0) target = $region173
    $region172: #{tpu_custom_call.1} parent=1 // pred_region
      _
    $region173: #{tpu_custom_call.1} parent=1 // pred_fallthru
      _
    // Predicated region
    $region174: #{tpu_custom_call.1} parent=1 // pred_check
      _
    $region175: #{tpu_custom_call.1} parent=1 // pred_check_branch
      %446 = sbr.rel (0) target = $region177
    $region176: #{tpu_custom_call.1} parent=1 // pred_region
      %448 = vsyncadd [#allocation29], 0
      %s449 = sshll.u32 %s87, 4
      %s450 = int_to_ptr.hbm [resolvable:$true] %s449
      %s451 = sshll.u32 [#allocation30], 4
      %s452 = int_to_ptr.vmem [resolvable:$true] %s451
      %457 = dma.hbm_to_vmem [thread:$0]  %s450, 2048, %s452, [#allocation29], 128, 128, 8
    $region177: #{tpu_custom_call.1} parent=1 // pred_fallthru
      _
    // Predicated region
    $region178: #{tpu_custom_call.1} parent=1 // pred_check
      _
    $region179: #{tpu_custom_call.1} parent=1 // pred_check_branch
      %459 = sbr.rel (0) target = $region181
    $region180: #{tpu_custom_call.1} parent=1 // pred_region
      _
    $region181: #{tpu_custom_call.1} parent=1 // pred_fallthru
      _
    // Predicated region
    $region182: #{tpu_custom_call.1} parent=1 // pred_check
      _
    $region183: #{tpu_custom_call.1} parent=1 // pred_check_branch
      %461 = sbr.rel (0) target = $region185
    $region184: #{tpu_custom_call.1} parent=1 // pred_region
      %463 = vsyncadd [#allocation32], 0
      %s464 = sshll.u32 %s91, 4
      %s465 = int_to_ptr.hbm [resolvable:$true] %s464
      %s466 = sshll.u32 [#allocation31], 4
      %s467 = int_to_ptr.vmem [resolvable:$true] %s466
      %472 = dma.hbm_to_vmem [thread:$0]  %s465, 2048, %s467, [#allocation32], 128, 128, 8
    $region185: #{tpu_custom_call.1} parent=1 // pred_fallthru
      _
    // Predicated region
    $region186: #{tpu_custom_call.1} parent=1 // pred_check
      _
    $region187: #{tpu_custom_call.1} parent=1 // pred_check_branch
      %474 = sbr.rel (0) target = $region189
    $region188: #{tpu_custom_call.1} parent=1 // pred_region
      _
    $region189: #{tpu_custom_call.1} parent=1 // pred_fallthru
      _
    // Predicated region
    $region190: #{tpu_custom_call.1} parent=1 // pred_check
      _
    $region191: #{tpu_custom_call.1} parent=1 // pred_check_branch
      %476 = sbr.rel (0) target = $region193
    $region192: #{tpu_custom_call.1} parent=1 // pred_region
      %478 = vsyncadd [#allocation32], 0
      %s479 = sshll.u32 %s95, 4
      %s480 = int_to_ptr.hbm [resolvable:$true] %s479
      %s481 = sshll.u32 [#allocation33], 4
      %s482 = int_to_ptr.vmem [resolvable:$true] %s481
      %487 = dma.hbm_to_vmem [thread:$0]  %s480, 2048, %s482, [#allocation32], 128, 128, 8
    $region193: #{tpu_custom_call.1} parent=1 // pred_fallthru
      _
    // Predicated region
    $region194: #{tpu_custom_call.1} parent=1 // pred_check
      _
    $region195: #{tpu_custom_call.1} parent=1 // pred_check_branch
      %489 = sbr.rel (0) target = $region197
    $region196: #{tpu_custom_call.1} parent=1 // pred_region
      _
    $region197: #{tpu_custom_call.1} parent=1 // pred_fallthru
      _
    // Predicated region
    $region198: #{tpu_custom_call.1} parent=1 // pred_check
      _
    $region199: #{tpu_custom_call.1} parent=1 // pred_check_branch
      %491 = sbr.rel (0) target = $region201
    $region200: #{tpu_custom_call.1} parent=1 // pred_region
      _
    $region201: #{tpu_custom_call.1} parent=1 // pred_fallthru
      _
    // Predicated region
    $region202: #{tpu_custom_call.1} parent=1 // pred_check
      _
    $region203: #{tpu_custom_call.1} parent=1 // pred_check_branch
      %493 = sbr.rel (0) target = $region205
    $region204: #{tpu_custom_call.1} parent=1 // pred_region
      _
    $region205: #{tpu_custom_call.1} parent=1 // pred_fallthru
      _
    // Predicated region
    $region206: #{tpu_custom_call.1} parent=1 // pred_check
      _
    $region207: #{tpu_custom_call.1} parent=1 // pred_check_branch
      %495 = sbr.rel (0) target = $region209
    $region208: #{tpu_custom_call.1} parent=1 // pred_region
      %497 = vsyncadd [#allocation35], 0
      %s498 = sshll.u32 %s103, 4
      %s499 = int_to_ptr.hbm [resolvable:$true] %s498
      %s500 = sshll.u32 [#allocation34], 4
      %s501 = int_to_ptr.vmem [resolvable:$true] %s500
      %506 = dma.hbm_to_vmem [thread:$0]  %s499, 2048, %s501, [#allocation35], 128, 128, 8
    $region209: #{tpu_custom_call.1} parent=1 // pred_fallthru
      _
    // Predicated region
    $region210: #{tpu_custom_call.1} parent=1 // pred_check
      _
    $region211: #{tpu_custom_call.1} parent=1 // pred_check_branch
      %508 = sbr.rel (0) target = $region213
    $region212: #{tpu_custom_call.1} parent=1 // pred_region
      _
    $region213: #{tpu_custom_call.1} parent=1 // pred_fallthru
      _
    // Predicated region
    $region214: #{tpu_custom_call.1} parent=1 // pred_check
      _
    $region215: #{tpu_custom_call.1} parent=1 // pred_check_branch
      %510 = sbr.rel (0) target = $region217
    $region216: #{tpu_custom_call.1} parent=1 // pred_region
      %512 = vsyncadd [#allocation35], 0
      %s513 = sshll.u32 %s107, 4
      %s514 = int_to_ptr.hbm [resolvable:$true] %s513
      %s515 = sshll.u32 [#allocation36], 4
      %s516 = int_to_ptr.vmem [resolvable:$true] %s515
      %521 = dma.hbm_to_vmem [thread:$0]  %s514, 2048, %s516, [#allocation35], 128, 128, 8
    $region217: #{tpu_custom_call.1} parent=1 // pred_fallthru
      _
    // Predicated region
    $region218: #{tpu_custom_call.1} parent=1 // pred_check
      _
    $region219: #{tpu_custom_call.1} parent=1 // pred_check_branch
      %523 = sbr.rel (0) target = $region221
    $region220: #{tpu_custom_call.1} parent=1 // pred_region
      _
    $region221: #{tpu_custom_call.1} parent=1 // pred_fallthru
      _
    // Predicated region
    $region222: #{tpu_custom_call.1} parent=1 // pred_check
      _
    $region223: #{tpu_custom_call.1} parent=1 // pred_check_branch
      %525 = sbr.rel (0) target = $region225
    $region224: #{tpu_custom_call.1} parent=1 // pred_region
      %527 = vsyncadd [#allocation38], 0
      %s528 = sshll.u32 %s111, 4
      %s529 = int_to_ptr.hbm [resolvable:$true] %s528
      %s530 = sshll.u32 [#allocation37], 4
      %s531 = int_to_ptr.vmem [resolvable:$true] %s530
      %536 = dma.hbm_to_vmem [thread:$0]  %s529, 2048, %s531, [#allocation38], 128, 128, 8
    $region225: #{tpu_custom_call.1} parent=1 // pred_fallthru
      _
    // Predicated region
    $region226: #{tpu_custom_call.1} parent=1 // pred_check
      _
    $region227: #{tpu_custom_call.1} parent=1 // pred_check_branch
      %538 = sbr.rel (0) target = $region229
    $region228: #{tpu_custom_call.1} parent=1 // pred_region
      _
    $region229: #{tpu_custom_call.1} parent=1 // pred_fallthru
      _
    // Predicated region
    $region230: #{tpu_custom_call.1} parent=1 // pred_check
      _
    $region231: #{tpu_custom_call.1} parent=1 // pred_check_branch
      %540 = sbr.rel (0) target = $region233
    $region232: #{tpu_custom_call.1} parent=1 // pred_region
      _
    $region233: #{tpu_custom_call.1} parent=1 // pred_fallthru
      _
    // Predicated region
    $region234: #{tpu_custom_call.1} parent=1 // pred_check
      _
    $region235: #{tpu_custom_call.1} parent=1 // pred_check_branch
      %542 = sbr.rel (0) target = $region237
    $region236: #{tpu_custom_call.1} parent=1 // pred_region
      _
    $region237: #{tpu_custom_call.1} parent=1 // pred_fallthru
      _
    // Predicated region
    $region238: #{tpu_custom_call.1} parent=1 // pred_check
      _
    $region239: #{tpu_custom_call.1} parent=1 // pred_check_branch
      %544 = sbr.rel (0) target = $region241
    $region240: #{tpu_custom_call.1} parent=1 // pred_region
      %546 = vsyncadd [#allocation38], 0
      %s547 = sshll.u32 %s119, 4
      %s548 = int_to_ptr.hbm [resolvable:$true] %s547
      %s549 = sshll.u32 [#allocation39], 4
      %s550 = int_to_ptr.vmem [resolvable:$true] %s549
      %555 = dma.hbm_to_vmem [thread:$0]  %s548, 2048, %s550, [#allocation38], 128, 128, 8
    $region241: #{tpu_custom_call.1} parent=1 // pred_fallthru
      _
    // Predicated region
    $region242: #{tpu_custom_call.1} parent=1 // pred_check
      _
    $region243: #{tpu_custom_call.1} parent=1 // pred_check_branch
      %557 = sbr.rel (0) target = $region245
    $region244: #{tpu_custom_call.1} parent=1 // pred_region
      _
    $region245: #{tpu_custom_call.1} parent=1 // pred_fallthru
      _
    // Predicated region
    $region246: #{tpu_custom_call.1} parent=1 // pred_check
      _
    $region247: #{tpu_custom_call.1} parent=1 // pred_check_branch
      %559 = sbr.rel (0) target = $region249
    $region248: #{tpu_custom_call.1} parent=1 // pred_region
      %561 = vsyncadd [#allocation41], 0
      %s562 = sshll.u32 %s123, 4
      %s563 = int_to_ptr.hbm [resolvable:$true] %s562
      %s564 = sshll.u32 [#allocation40], 4
      %s565 = int_to_ptr.vmem [resolvable:$true] %s564
      %570 = dma.hbm_to_vmem [thread:$0]  %s563, 2048, %s565, [#allocation41], 128, 128, 8
    $region249: #{tpu_custom_call.1} parent=1 // pred_fallthru
      _
    // Predicated region
    $region250: #{tpu_custom_call.1} parent=1 // pred_check
      _
    $region251: #{tpu_custom_call.1} parent=1 // pred_check_branch
      %572 = sbr.rel (0) target = $region253
    $region252: #{tpu_custom_call.1} parent=1 // pred_region
      %574 = vsyncadd [#allocation41], 0
      %s576 = sshll.u32 %s125, 4
      %s577 = int_to_ptr.hbm [resolvable:$true] %s576
      %s578 = sshll.u32 [#allocation42], 4
      %s579 = int_to_ptr.vmem [resolvable:$true] %s578
      %581 = dma.hbm_to_vmem [thread:$0]  %s577, 16, %s579, [#allocation41]
    $region253: #{tpu_custom_call.1} parent=1 // pred_fallthru
      _
    // Predicated region
    $region254: #{tpu_custom_call.1} parent=1 // pred_check
      _
    $region255: #{tpu_custom_call.1} parent=1 // pred_check_branch
      %583 = sbr.rel (0) target = $region257
    $region256: #{tpu_custom_call.1} parent=1 // pred_region
      %585 = vsyncadd [#allocation44], 0
      %s586 = sshll.u32 %s127, 4
      %s587 = int_to_ptr.hbm [resolvable:$true] %s586
      %s588 = sshll.u32 [#allocation43], 4
      %s589 = int_to_ptr.vmem [resolvable:$true] %s588
      %594 = dma.hbm_to_vmem [thread:$0]  %s587, 2048, %s589, [#allocation44], 128, 128, 8
    $region257: #{tpu_custom_call.1} parent=1 // pred_fallthru
      _
    // Predicated region
    $region258: #{tpu_custom_call.1} parent=1 // pred_check
      _
    $region259: #{tpu_custom_call.1} parent=1 // pred_check_branch
      %596 = sbr.rel (0) target = $region261
    $region260: #{tpu_custom_call.1} parent=1 // pred_region
      %598 = vsyncadd [#allocation44], 0
      %s600 = sshll.u32 %s129, 4
      %s601 = int_to_ptr.hbm [resolvable:$true] %s600
      %s602 = sshll.u32 [#allocation45], 4
      %s603 = int_to_ptr.vmem [resolvable:$true] %s602
      %605 = dma.hbm_to_vmem [thread:$0]  %s601, 16, %s603, [#allocation44]
    $region261: #{tpu_custom_call.1} parent=1 // pred_fallthru
      _
    // Predicated region
    $region262: #{tpu_custom_call.1} parent=1 // pred_check
      _
    $region263: #{tpu_custom_call.1} parent=1 // pred_check_branch
      %607 = sbr.rel (0) target = $region265
    $region264: #{tpu_custom_call.1} parent=1 // pred_region
      %609 = vsyncadd [#allocation47], 0
      %s611 = sshll.u32 %s131, 4
      %s612 = int_to_ptr.hbm [resolvable:$true] %s611
      %s613 = sshll.u32 [#allocation46], 4
      %s614 = int_to_ptr.vmem [resolvable:$true] %s613
      %616 = dma.hbm_to_vmem [thread:$0]  %s612, 16, %s614, [#allocation47]
    $region265: #{tpu_custom_call.1} parent=1 // pred_fallthru
      _
    // Predicated region
    $region266: #{tpu_custom_call.1} parent=1 // pred_check
      _
    $region267: #{tpu_custom_call.1} parent=1 // pred_check_branch
      %618 = sbr.rel (0) target = $region269
    $region268: #{tpu_custom_call.1} parent=1 // pred_region
      %620 = vsyncadd [#allocation47], 0
      %s622 = sshll.u32 %s133, 4
      %s623 = int_to_ptr.hbm [resolvable:$true] %s622
      %s624 = sshll.u32 [#allocation48], 4
      %s625 = int_to_ptr.vmem [resolvable:$true] %s624
      %627 = dma.hbm_to_vmem [thread:$0]  %s623, 16, %s625, [#allocation47]
    $region269: #{tpu_custom_call.1} parent=1 // pred_fallthru
      _
    // Predicated region
    $region270: #{tpu_custom_call.1} parent=1 // pred_check
      _
    $region271: #{tpu_custom_call.1} parent=1 // pred_check_branch
      %629 = sbr.rel (0) target = $region273
    $region272: #{tpu_custom_call.1} parent=1 // pred_region
      _
    $region273: #{tpu_custom_call.1} parent=1 // pred_fallthru
      _
    // Predicated region
    $region274: #{tpu_custom_call.1} parent=1 // pred_check
      _
    $region275: #{tpu_custom_call.1} parent=1 // pred_check_branch
      %631 = sbr.rel (0) target = $region277
    $region276: #{tpu_custom_call.1} parent=1 // pred_region
      _
    $region277: #{tpu_custom_call.1} parent=1 // pred_fallthru
      _
    // Predicated region
    $region278: #{tpu_custom_call.1} parent=1 // pred_check
      _
    $region279: #{tpu_custom_call.1} parent=1 // pred_check_branch
      %633 = sbr.rel (0) target = $region281
    $region280: #{tpu_custom_call.1} parent=1 // pred_region
      _
    $region281: #{tpu_custom_call.1} parent=1 // pred_fallthru
      _
    // Predicated region
    $region282: #{tpu_custom_call.1} parent=1 // pred_check
      _
    $region283: #{tpu_custom_call.1} parent=1 // pred_check_branch
      %635 = sbr.rel (0) target = $region285
    $region284: #{tpu_custom_call.1} parent=1 // pred_region
      _
    $region285: #{tpu_custom_call.1} parent=1 // pred_fallthru
      _
    // Predicated region
    $region286: #{tpu_custom_call.1} parent=1 // pred_check
      _
    $region287: #{tpu_custom_call.1} parent=1 // pred_check_branch
      %637 = sbr.rel (0) target = $region289
    $region288: #{tpu_custom_call.1} parent=1 // pred_region
      _
    $region289: #{tpu_custom_call.1} parent=1 // pred_fallthru
      _
    // Predicated region
    $region290: #{tpu_custom_call.1} parent=1 // pred_check
      _
    $region291: #{tpu_custom_call.1} parent=1 // pred_check_branch
      %639 = sbr.rel (0) target = $region293
    $region292: #{tpu_custom_call.1} parent=1 // pred_region
      %641 = vsyncadd [#allocation50], 0
      %s643 = sshll.u32 %s145, 4
      %s644 = int_to_ptr.hbm [resolvable:$true] %s643
      %s645 = sshll.u32 [#allocation49], 4
      %s646 = int_to_ptr.vmem [resolvable:$true] %s645
      %648 = dma.hbm_to_vmem [thread:$0]  %s644, 16, %s646, [#allocation50]
    $region293: #{tpu_custom_call.1} parent=1 // pred_fallthru
      _
    // Predicated region
    $region294: #{tpu_custom_call.1} parent=1 // pred_check
      _
    $region295: #{tpu_custom_call.1} parent=1 // pred_check_branch
      %650 = sbr.rel (0) target = $region297
    $region296: #{tpu_custom_call.1} parent=1 // pred_region
      %652 = dma.done [#allocation3], 128
    $region297: #{tpu_custom_call.1} parent=1 // pred_fallthru
      _
    // Predicated region
    $region298: #{tpu_custom_call.1} parent=1 // pred_check
      _
    $region299: #{tpu_custom_call.1} parent=1 // pred_check_branch
      %654 = sbr.rel (0) target = $region301
    $region300: #{tpu_custom_call.1} parent=1 // pred_region
      %656 = dma.done [#allocation5], 2048
    $region301: #{tpu_custom_call.1} parent=1 // pred_fallthru
      _
    // Predicated region
    $region302: #{tpu_custom_call.1} parent=1 // pred_check
      _
    $region303: #{tpu_custom_call.1} parent=1 // pred_check_branch
      %658 = sbr.rel (0) target = $region305
    $region304: #{tpu_custom_call.1} parent=1 // pred_region
      %660 = dma.done [#allocation5], 2048
    $region305: #{tpu_custom_call.1} parent=1 // pred_fallthru
      _
    // Predicated region
    $region306: #{tpu_custom_call.1} parent=1 // pred_check
      _
    $region307: #{tpu_custom_call.1} parent=1 // pred_check_branch
      %662 = sbr.rel (0) target = $region309
    $region308: #{tpu_custom_call.1} parent=1 // pred_region
      %664 = dma.done [#allocation8], 16
    $region309: #{tpu_custom_call.1} parent=1 // pred_fallthru
      _
    // Predicated region
    $region310: #{tpu_custom_call.1} parent=1 // pred_check
      _
    $region311: #{tpu_custom_call.1} parent=1 // pred_check_branch
      %666 = sbr.rel (0) target = $region313
    $region312: #{tpu_custom_call.1} parent=1 // pred_region
      %668 = dma.done [#allocation8], 128
    $region313: #{tpu_custom_call.1} parent=1 // pred_fallthru
      _
    // Predicated region
    $region314: #{tpu_custom_call.1} parent=1 // pred_check
      _
    $region315: #{tpu_custom_call.1} parent=1 // pred_check_branch
      %670 = sbr.rel (0) target = $region317
    $region316: #{tpu_custom_call.1} parent=1 // pred_region
      %672 = dma.done [#allocation11], 16
    $region317: #{tpu_custom_call.1} parent=1 // pred_fallthru
      _
    // Predicated region
    $region318: #{tpu_custom_call.1} parent=1 // pred_check
      _
    $region319: #{tpu_custom_call.1} parent=1 // pred_check_branch
      %674 = sbr.rel (0) target = $region321
    $region320: #{tpu_custom_call.1} parent=1 // pred_region
      %676 = dma.done [#allocation11], 2048
    $region321: #{tpu_custom_call.1} parent=1 // pred_fallthru
      _
    // Predicated region
    $region322: #{tpu_custom_call.1} parent=1 // pred_check
      _
    $region323: #{tpu_custom_call.1} parent=1 // pred_check_branch
      %678 = sbr.rel (0) target = $region325
    $region324: #{tpu_custom_call.1} parent=1 // pred_region
      %680 = dma.done [#allocation14], 2048
    $region325: #{tpu_custom_call.1} parent=1 // pred_fallthru
      _
    // Predicated region
    $region326: #{tpu_custom_call.1} parent=1 // pred_check
      _
    $region327: #{tpu_custom_call.1} parent=1 // pred_check_branch
      %682 = sbr.rel (0) target = $region329
    $region328: #{tpu_custom_call.1} parent=1 // pred_region
      %684 = dma.done [#allocation14], 2048
    $region329: #{tpu_custom_call.1} parent=1 // pred_fallthru
      _
    // Predicated region
    $region330: #{tpu_custom_call.1} parent=1 // pred_check
      _
    $region331: #{tpu_custom_call.1} parent=1 // pred_check_branch
      %686 = sbr.rel (0) target = $region333
    $region332: #{tpu_custom_call.1} parent=1 // pred_region
      %688 = dma.done [#allocation17], 2048
    $region333: #{tpu_custom_call.1} parent=1 // pred_fallthru
      _
    // Predicated region
    $region334: #{tpu_custom_call.1} parent=1 // pred_check
      _
    $region335: #{tpu_custom_call.1} parent=1 // pred_check_branch
      %690 = sbr.rel (0) target = $region337
    $region336: #{tpu_custom_call.1} parent=1 // pred_region
      %692 = dma.done [#allocation17], 2048
    $region337: #{tpu_custom_call.1} parent=1 // pred_fallthru
      _
    // Predicated region
    $region338: #{tpu_custom_call.1} parent=1 // pred_check
      _
    $region339: #{tpu_custom_call.1} parent=1 // pred_check_branch
      %694 = sbr.rel (0) target = $region341
    $region340: #{tpu_custom_call.1} parent=1 // pred_region
      %696 = dma.done [#allocation20], 2048
    $region341: #{tpu_custom_call.1} parent=1 // pred_fallthru
      _
    // Predicated region
    $region342: #{tpu_custom_call.1} parent=1 // pred_check
      _
    $region343: #{tpu_custom_call.1} parent=1 // pred_check_branch
      %698 = sbr.rel (0) target = $region345
    $region344: #{tpu_custom_call.1} parent=1 // pred_region
      %700 = dma.done [#allocation20], 2048
    $region345: #{tpu_custom_call.1} parent=1 // pred_fallthru
      _
    // Predicated region
    $region346: #{tpu_custom_call.1} parent=1 // pred_check
      _
    $region347: #{tpu_custom_call.1} parent=1 // pred_check_branch
      %702 = sbr.rel (0) target = $region349
    $region348: #{tpu_custom_call.1} parent=1 // pred_region
      %704 = dma.done [#allocation23], 2048
    $region349: #{tpu_custom_call.1} parent=1 // pred_fallthru
      _
    // Predicated region
    $region350: #{tpu_custom_call.1} parent=1 // pred_check
      _
    $region351: #{tpu_custom_call.1} parent=1 // pred_check_branch
      %706 = sbr.rel (0) target = $region353
    $region352: #{tpu_custom_call.1} parent=1 // pred_region
      %708 = dma.done [#allocation23], 2048
    $region353: #{tpu_custom_call.1} parent=1 // pred_fallthru
      _
    // Predicated region
    $region354: #{tpu_custom_call.1} parent=1 // pred_check
      _
    $region355: #{tpu_custom_call.1} parent=1 // pred_check_branch
      %710 = sbr.rel (0) target = $region357
    $region356: #{tpu_custom_call.1} parent=1 // pred_region
      %712 = dma.done [#allocation26], 2048
    $region357: #{tpu_custom_call.1} parent=1 // pred_fallthru
      _
    // Predicated region
    $region358: #{tpu_custom_call.1} parent=1 // pred_check
      _
    $region359: #{tpu_custom_call.1} parent=1 // pred_check_branch
      %714 = sbr.rel (0) target = $region361
    $region360: #{tpu_custom_call.1} parent=1 // pred_region
      %716 = dma.done [#allocation26], 2048
    $region361: #{tpu_custom_call.1} parent=1 // pred_fallthru
      _
    // Predicated region
    $region362: #{tpu_custom_call.1} parent=1 // pred_check
      _
    $region363: #{tpu_custom_call.1} parent=1 // pred_check_branch
      %718 = sbr.rel (0) target = $region365
    $region364: #{tpu_custom_call.1} parent=1 // pred_region
      %720 = dma.done [#allocation29], 2048
    $region365: #{tpu_custom_call.1} parent=1 // pred_fallthru
      _
    // Predicated region
    $region366: #{tpu_custom_call.1} parent=1 // pred_check
      _
    $region367: #{tpu_custom_call.1} parent=1 // pred_check_branch
      %722 = sbr.rel (0) target = $region369
    $region368: #{tpu_custom_call.1} parent=1 // pred_region
      %724 = dma.done [#allocation29], 2048
    $region369: #{tpu_custom_call.1} parent=1 // pred_fallthru
      _
    // Predicated region
    $region370: #{tpu_custom_call.1} parent=1 // pred_check
      _
    $region371: #{tpu_custom_call.1} parent=1 // pred_check_branch
      %726 = sbr.rel (0) target = $region373
    $region372: #{tpu_custom_call.1} parent=1 // pred_region
      %728 = dma.done [#allocation32], 2048
    $region373: #{tpu_custom_call.1} parent=1 // pred_fallthru
      _
    // Predicated region
    $region374: #{tpu_custom_call.1} parent=1 // pred_check
      _
    $region375: #{tpu_custom_call.1} parent=1 // pred_check_branch
      %730 = sbr.rel (0) target = $region377
    $region376: #{tpu_custom_call.1} parent=1 // pred_region
      %732 = dma.done [#allocation32], 2048
    $region377: #{tpu_custom_call.1} parent=1 // pred_fallthru
      _
    // Predicated region
    $region378: #{tpu_custom_call.1} parent=1 // pred_check
      _
    $region379: #{tpu_custom_call.1} parent=1 // pred_check_branch
      %734 = sbr.rel (0) target = $region381
    $region380: #{tpu_custom_call.1} parent=1 // pred_region
      %736 = dma.done [#allocation35], 2048
    $region381: #{tpu_custom_call.1} parent=1 // pred_fallthru
      _
    // Predicated region
    $region382: #{tpu_custom_call.1} parent=1 // pred_check
      _
    $region383: #{tpu_custom_call.1} parent=1 // pred_check_branch
      %738 = sbr.rel (0) target = $region385
    $region384: #{tpu_custom_call.1} parent=1 // pred_region
      %740 = dma.done [#allocation35], 2048
    $region385: #{tpu_custom_call.1} parent=1 // pred_fallthru
      _
    // Predicated region
    $region386: #{tpu_custom_call.1} parent=1 // pred_check
      _
    $region387: #{tpu_custom_call.1} parent=1 // pred_check_branch
      %742 = sbr.rel (0) target = $region389
    $region388: #{tpu_custom_call.1} parent=1 // pred_region
      %744 = dma.done [#allocation38], 2048
    $region389: #{tpu_custom_call.1} parent=1 // pred_fallthru
      _
    // Predicated region
    $region390: #{tpu_custom_call.1} parent=1 // pred_check
      _
    $region391: #{tpu_custom_call.1} parent=1 // pred_check_branch
      %746 = sbr.rel (0) target = $region393
    $region392: #{tpu_custom_call.1} parent=1 // pred_region
      %748 = dma.done [#allocation38], 2048
    $region393: #{tpu_custom_call.1} parent=1 // pred_fallthru
      _
    // Predicated region
    $region394: #{tpu_custom_call.1} parent=1 // pred_check
      _
    $region395: #{tpu_custom_call.1} parent=1 // pred_check_branch
      %750 = sbr.rel (0) target = $region397
    $region396: #{tpu_custom_call.1} parent=1 // pred_region
      %752 = dma.done [#allocation41], 2048
    $region397: #{tpu_custom_call.1} parent=1 // pred_fallthru
      _
    // Predicated region
    $region398: #{tpu_custom_call.1} parent=1 // pred_check
      _
    $region399: #{tpu_custom_call.1} parent=1 // pred_check_branch
      %754 = sbr.rel (0) target = $region401
    $region400: #{tpu_custom_call.1} parent=1 // pred_region
      %756 = dma.done [#allocation41], 16
    $region401: #{tpu_custom_call.1} parent=1 // pred_fallthru
      _
    // Predicated region
    $region402: #{tpu_custom_call.1} parent=1 // pred_check
      _
    $region403: #{tpu_custom_call.1} parent=1 // pred_check_branch
      %758 = sbr.rel (0) target = $region405
    $region404: #{tpu_custom_call.1} parent=1 // pred_region
      %760 = dma.done [#allocation44], 2048
    $region405: #{tpu_custom_call.1} parent=1 // pred_fallthru
      _
    // Predicated region
    $region406: #{tpu_custom_call.1} parent=1 // pred_check
      _
    $region407: #{tpu_custom_call.1} parent=1 // pred_check_branch
      %762 = sbr.rel (0) target = $region409
    $region408: #{tpu_custom_call.1} parent=1 // pred_region
      %764 = dma.done [#allocation44], 16
    $region409: #{tpu_custom_call.1} parent=1 // pred_fallthru
      _
    // Predicated region
    $region410: #{tpu_custom_call.1} parent=1 // pred_check
      _
    $region411: #{tpu_custom_call.1} parent=1 // pred_check_branch
      %766 = sbr.rel (0) target = $region413
    $region412: #{tpu_custom_call.1} parent=1 // pred_region
      %768 = dma.done [#allocation47], 16
    $region413: #{tpu_custom_call.1} parent=1 // pred_fallthru
      _
    // Predicated region
    $region414: #{tpu_custom_call.1} parent=1 // pred_check
      _
    $region415: #{tpu_custom_call.1} parent=1 // pred_check_branch
      %770 = sbr.rel (0) target = $region417
    $region416: #{tpu_custom_call.1} parent=1 // pred_region
      %772 = dma.done [#allocation47], 16
    $region417: #{tpu_custom_call.1} parent=1 // pred_fallthru
      _
    // Predicated region
    $region418: #{tpu_custom_call.1} parent=1 // pred_check
      _
    $region419: #{tpu_custom_call.1} parent=1 // pred_check_branch
      %774 = sbr.rel (0) target = $region421
    $region420: #{tpu_custom_call.1} parent=1 // pred_region
      %776 = dma.done [#allocation50], 16
    $region421: #{tpu_custom_call.1} parent=1 // pred_fallthru
      _
    %v777 = vld [vmem:[%s1] sm:$0xff]
    %v778 = vld [vmem:[%s3] sm:$0xff]
    %v779 = vld [vmem:[#allocation2] sm:$0xff]
    %v780 = vld [vmem:[#allocation4] sm:$0xff]
    %v781 = vld [vmem:[#allocation4 + $0x8] sm:$0xff]
    %v782 = vld [vmem:[#allocation4 + $0x10] sm:$0xff]
    %v783 = vld [vmem:[#allocation4 + $0x18] sm:$0xff]
    %v784 = vld [vmem:[#allocation4 + $0x20] sm:$0xff]
    %v785 = vld [vmem:[#allocation4 + $0x28] sm:$0xff]
    %v786 = vld [vmem:[#allocation4 + $0x30] sm:$0xff]
    %v787 = vld [vmem:[#allocation4 + $0x38] sm:$0xff]
    %v788 = vld [vmem:[#allocation4 + $0x40] sm:$0xff]
    %v789 = vld [vmem:[#allocation4 + $0x48] sm:$0xff]
    %v790 = vld [vmem:[#allocation4 + $0x50] sm:$0xff]
    %v791 = vld [vmem:[#allocation4 + $0x58] sm:$0xff]
    %v792 = vld [vmem:[#allocation4 + $0x60] sm:$0xff]
    %v793 = vld [vmem:[#allocation4 + $0x68] sm:$0xff]
    %v794 = vld [vmem:[#allocation4 + $0x70] sm:$0xff]
    %v795 = vld [vmem:[#allocation4 + $0x78] sm:$0xff]
    %v796 = vld [vmem:[%s9] sm:$0x1]
    %v797 = vld [vmem:[#allocation6] sm:$0xff]
    %v798 = vld [vmem:[#allocation6 + $0x8] sm:$0xff]
    %v799 = vld [vmem:[#allocation6 + $0x10] sm:$0xff]
    %v800 = vld [vmem:[#allocation6 + $0x18] sm:$0xff]
    %v801 = vld [vmem:[#allocation6 + $0x20] sm:$0xff]
    %v802 = vld [vmem:[#allocation6 + $0x28] sm:$0xff]
    %v803 = vld [vmem:[#allocation6 + $0x30] sm:$0xff]
    %v804 = vld [vmem:[#allocation6 + $0x38] sm:$0xff]
    %v805 = vld [vmem:[#allocation6 + $0x40] sm:$0xff]
    %v806 = vld [vmem:[#allocation6 + $0x48] sm:$0xff]
    %v807 = vld [vmem:[#allocation6 + $0x50] sm:$0xff]
    %v808 = vld [vmem:[#allocation6 + $0x58] sm:$0xff]
    %v809 = vld [vmem:[#allocation6 + $0x60] sm:$0xff]
    %v810 = vld [vmem:[#allocation6 + $0x68] sm:$0xff]
    %v811 = vld [vmem:[#allocation6 + $0x70] sm:$0xff]
    %v812 = vld [vmem:[#allocation6 + $0x78] sm:$0xff]
    %v813 = vld [vmem:[#allocation7] sm:$0x1]
    %v814 = vld [vmem:[#allocation9] sm:$0x7f]
    %v815 = vld [vmem:[#allocation10] sm:$0x1]
    %v816 = vld [vmem:[#allocation12] sm:$0xff]
    %v817 = vld [vmem:[#allocation12 + $0x8] sm:$0xff]
    %v818 = vld [vmem:[#allocation12 + $0x10] sm:$0xff]
    %v819 = vld [vmem:[#allocation12 + $0x18] sm:$0xff]
    %v820 = vld [vmem:[#allocation12 + $0x20] sm:$0xff]
    %v821 = vld [vmem:[#allocation12 + $0x28] sm:$0xff]
    %v822 = vld [vmem:[#allocation12 + $0x30] sm:$0xff]
    %v823 = vld [vmem:[#allocation12 + $0x38] sm:$0xff]
    %v824 = vld [vmem:[#allocation12 + $0x40] sm:$0xff]
    %v825 = vld [vmem:[#allocation12 + $0x48] sm:$0xff]
    %v826 = vld [vmem:[#allocation12 + $0x50] sm:$0xff]
    %v827 = vld [vmem:[#allocation12 + $0x58] sm:$0xff]
    %v828 = vld [vmem:[#allocation12 + $0x60] sm:$0xff]
    %v829 = vld [vmem:[#allocation12 + $0x68] sm:$0xff]
    %v830 = vld [vmem:[#allocation12 + $0x70] sm:$0xff]
    %v831 = vld [vmem:[#allocation12 + $0x78] sm:$0xff]
    %v832 = vld [vmem:[%s21] sm:$0x1]
    %v834 = vperm.slane %v796, 0
    %836 = vmatpush.msra.mxu0 %v795
    %837 = vmatpush.msra.mxu0 %v794
    %838 = vmatpush.msra.mxu0 %v793
    %839 = vmatpush.msra.mxu0 %v792
    %840 = vmatpush.msra.mxu0 %v791
    %841 = vmatpush.msra.mxu0 %v790
    %842 = vmatpush.msra.mxu0 %v789
    %843 = vmatpush.msra.mxu0 %v788
    %844 = vmatpush.msra.mxu0 %v787
    %845 = vmatpush.msra.mxu0 %v786
    %846 = vmatpush.msra.mxu0 %v785
    %847 = vmatpush.msra.mxu0 %v784
    %848 = vmatpush.msra.mxu0 %v783
    %849 = vmatpush.msra.mxu0 %v782
    %850 = vmatpush.msra.mxu0 %v781
    %851 = vmatpush.msra.mxu0 %v780
    %852 = vmatmul.f32.gmra.mxu0 %v778
    %v853 = vpop.f32.mrf.mxu0
    %v854 = vadd.f32 %v834, %v853
    %855 = vdwg.mxu0
    %v856 = vxor.u32 %v854, 2147483648
    %v857 = vmul.f32 %v856, 1.442695
    %v858 = vpow.pop %v857
    %v859 = vadd.f32 %v858, 1.0
    %v860 = vrcp.pop %v859
    %v861 = vmul.f32 %v859, %v860
    %v862 = vsub.f32 1.0, %v861
    %v863 = vmul.f32 %v860, %v862
    %v864 = vadd.f32 %v860, %v863
    %vm865 = vweird.f32 %v859
    %vm866 = vweird.f32 %v860
    %vm867 = vmor %vm865, %vm866
    %v868 = vsel %vm867, %v860, %v864
    %v869 = vand.u32 2147483647, %v859
    %vm870 = vcmp.eq.f32.partialorder %v869, 8.507059e+37
    %v871 = vand.u32 %v859, 2147483648
    %v872 = vor.u32 1.1754944e-38, %v871
    %v873 = vsel %vm870, %v872, %v868
    %v874 = vmul.f32 1.0, %v873
    %v875 = vmul.f32 %v854, %v874
    %v877 = vperm.slane %v813, 0
    %879 = vmatpush.msra.mxu0 %v812
    %880 = vmatpush.msra.mxu0 %v811
    %881 = vmatpush.msra.mxu0 %v810
    %882 = vmatpush.msra.mxu0 %v809
    %883 = vmatpush.msra.mxu0 %v808
    %884 = vmatpush.msra.mxu0 %v807
    %885 = vmatpush.msra.mxu0 %v806
    %886 = vmatpush.msra.mxu0 %v805
    %887 = vmatpush.msra.mxu0 %v804
    %888 = vmatpush.msra.mxu0 %v803
    %889 = vmatpush.msra.mxu0 %v802
    %890 = vmatpush.msra.mxu0 %v801
    %891 = vmatpush.msra.mxu0 %v800
    %892 = vmatpush.msra.mxu0 %v799
    %893 = vmatpush.msra.mxu0 %v798
    %894 = vmatpush.msra.mxu0 %v797
    %895 = vmatmul.f32.gmra.mxu0 %v875
    %v896 = vpop.f32.mrf.mxu0
    %v897 = vadd.f32 %v877, %v896
    %898 = vdwg.mxu0
    %v899 = vxor.u32 %v897, 2147483648
    %v900 = vmul.f32 %v899, 1.442695
    %v901 = vpow.pop %v900
    %v902 = vadd.f32 %v901, 1.0
    %v903 = vrcp.pop %v902
    %v904 = vmul.f32 %v902, %v903
    %v905 = vsub.f32 1.0, %v904
    %v906 = vmul.f32 %v903, %v905
    %v907 = vadd.f32 %v903, %v906
    %vm908 = vweird.f32 %v902
    %vm909 = vweird.f32 %v903
    %vm910 = vmor %vm908, %vm909
    %v911 = vsel %vm910, %v903, %v907
    %v912 = vand.u32 2147483647, %v902
    %vm913 = vcmp.eq.f32.partialorder %v912, 8.507059e+37
    %v914 = vand.u32 %v902, 2147483648
    %v915 = vor.u32 1.1754944e-38, %v914
    %v916 = vsel %vm913, %v915, %v911
    %v917 = vmul.f32 1.0, %v916
    %v918 = vmul.f32 %v897, %v917
    %v920 = vperm.slane %v815, 0
    %vm922 = vcmask 56320
    %v924 = vsel %vm922, %v779, 0
    %vm926 = vcmask 1046528
    %v928 = vsel %vm926, %v814, 0
    %930 = vmatpush.msra.mxu0 0.0
    %931 = vmatpush.msra.mxu0 0.0
    %932 = vmatpush.msra.mxu0 0.0
    %933 = vmatpush.msra.mxu0 0.0
    %934 = vmatpush.msra.mxu0 0.0
    %935 = vmatpush.msra.mxu0 0.0
    %936 = vmatpush.msra.mxu0 0.0
    %937 = vmatpush.msra.mxu0 0.0
    %938 = vmatpush.msra.mxu0 0.0
    %939 = vmatpush.msra.mxu0 0.0
    %940 = vmatpush.msra.mxu0 0.0
    %941 = vmatpush.msra.mxu0 0.0
    %942 = vmatpush.msra.mxu0 0.0
    %943 = vmatpush.msra.mxu0 0.0
    %944 = vmatpush.msra.mxu0 0.0
    %945 = vmatpush.msra.mxu0 %v928
    %946 = vmatmul.f32.gmra.mxu0 %v924
    %v947 = vpop.f32.mrf.mxu0
    %v948 = vadd.f32 %v920, %v947
    %949 = vdwg.mxu0
    %v950 = vxor.u32 %v948, 2147483648
    %v951 = vmul.f32 %v950, 1.442695
    %v952 = vpow.pop %v951
    %v953 = vadd.f32 %v952, 1.0
    %v954 = vrcp.pop %v953
    %v955 = vmul.f32 %v953, %v954
    %v956 = vsub.f32 1.0, %v955
    %v957 = vmul.f32 %v954, %v956
    %v958 = vadd.f32 %v954, %v957
    %vm959 = vweird.f32 %v953
    %vm960 = vweird.f32 %v954
    %vm961 = vmor %vm959, %vm960
    %v962 = vsel %vm961, %v954, %v958
    %v963 = vand.u32 2147483647, %v953
    %vm964 = vcmp.eq.f32.partialorder %v963, 8.507059e+37
    %v965 = vand.u32 %v953, 2147483648
    %v966 = vor.u32 1.1754944e-38, %v965
    %v967 = vsel %vm964, %v966, %v962
    %v968 = vmul.f32 1.0, %v967
    %v969 = vmul.f32 %v948, %v968
    %v971 = vperm.slane %v832, 0
    %973 = vmatpush.msra.mxu0 %v831
    %974 = vmatpush.msra.mxu0 %v830
    %975 = vmatpush.msra.mxu0 %v829
    %976 = vmatpush.msra.mxu0 %v828
    %977 = vmatpush.msra.mxu0 %v827
    %978 = vmatpush.msra.mxu0 %v826
    %979 = vmatpush.msra.mxu0 %v825
    %980 = vmatpush.msra.mxu0 %v824
    %981 = vmatpush.msra.mxu0 %v823
    %982 = vmatpush.msra.mxu0 %v822
    %983 = vmatpush.msra.mxu0 %v821
    %984 = vmatpush.msra.mxu0 %v820
    %985 = vmatpush.msra.mxu0 %v819
    %986 = vmatpush.msra.mxu0 %v818
    %987 = vmatpush.msra.mxu0 %v817
    %988 = vmatpush.msra.mxu0 %v816
    %989 = vmatmul.f32.gmra.mxu0 %v969
    %v990 = vpop.f32.mrf.mxu0
    %v991 = vadd.f32 %v971, %v990
    %992 = vdwg.mxu0
    %v993 = vxor.u32 %v991, 2147483648
    %v994 = vmul.f32 %v993, 1.442695
    %v995 = vpow.pop %v994
    %v996 = vadd.f32 %v995, 1.0
    %v997 = vrcp.pop %v996
    %v998 = vmul.f32 %v996, %v997
    %v999 = vsub.f32 1.0, %v998
    %v1000 = vmul.f32 %v997, %v999
    %v1001 = vadd.f32 %v997, %v1000
    %vm1002 = vweird.f32 %v996
    %vm1003 = vweird.f32 %v997
    %vm1004 = vmor %vm1002, %vm1003
    %v1005 = vsel %vm1004, %v997, %v1001
    %v1006 = vand.u32 2147483647, %v996
    %vm1007 = vcmp.eq.f32.partialorder %v1006, 8.507059e+37
    %v1008 = vand.u32 %v996, 2147483648
    %v1009 = vor.u32 1.1754944e-38, %v1008
    %v1010 = vsel %vm1007, %v1009, %v1005
    %v1011 = vmul.f32 1.0, %v1010
    %v1012 = vmul.f32 %v991, %v1011
    %v1013 = vld [vmem:[%s23] sm:$0x3]
    %v1014 = vld [vmem:[%s25] sm:$0x1]
    %v1015 = vld [vmem:[#allocation13] sm:$0xff]
    %v1016 = vld [vmem:[#allocation13 + $0x8] sm:$0xff]
    %v1017 = vld [vmem:[#allocation13 + $0x10] sm:$0xff]
    %v1018 = vld [vmem:[#allocation13 + $0x18] sm:$0xff]
    %v1019 = vld [vmem:[#allocation13 + $0x20] sm:$0xff]
    %v1020 = vld [vmem:[#allocation13 + $0x28] sm:$0xff]
    %v1021 = vld [vmem:[#allocation13 + $0x30] sm:$0xff]
    %v1022 = vld [vmem:[#allocation13 + $0x38] sm:$0xff]
    %v1023 = vld [vmem:[#allocation13 + $0x40] sm:$0xff]
    %v1024 = vld [vmem:[#allocation13 + $0x48] sm:$0xff]
    %v1025 = vld [vmem:[#allocation13 + $0x50] sm:$0xff]
    %v1026 = vld [vmem:[#allocation13 + $0x58] sm:$0xff]
    %v1027 = vld [vmem:[#allocation13 + $0x60] sm:$0xff]
    %v1028 = vld [vmem:[#allocation13 + $0x68] sm:$0xff]
    %v1029 = vld [vmem:[#allocation13 + $0x70] sm:$0xff]
    %v1030 = vld [vmem:[#allocation13 + $0x78] sm:$0xff]
    %v1031 = vld [vmem:[%s29] sm:$0x1]
    %v1032 = vld [vmem:[#allocation15] sm:$0xff]
    %v1033 = vld [vmem:[#allocation15 + $0x8] sm:$0xff]
    %v1034 = vld [vmem:[#allocation15 + $0x10] sm:$0xff]
    %v1035 = vld [vmem:[#allocation15 + $0x18] sm:$0xff]
    %v1036 = vld [vmem:[#allocation15 + $0x20] sm:$0xff]
    %v1037 = vld [vmem:[#allocation15 + $0x28] sm:$0xff]
    %v1038 = vld [vmem:[#allocation15 + $0x30] sm:$0xff]
    %v1039 = vld [vmem:[#allocation15 + $0x38] sm:$0xff]
    %v1040 = vld [vmem:[#allocation15 + $0x40] sm:$0xff]
    %v1041 = vld [vmem:[#allocation15 + $0x48] sm:$0xff]
    %v1042 = vld [vmem:[#allocation15 + $0x50] sm:$0xff]
    %v1043 = vld [vmem:[#allocation15 + $0x58] sm:$0xff]
    %v1044 = vld [vmem:[#allocation15 + $0x60] sm:$0xff]
    %v1045 = vld [vmem:[#allocation15 + $0x68] sm:$0xff]
    %v1046 = vld [vmem:[#allocation15 + $0x70] sm:$0xff]
    %v1047 = vld [vmem:[#allocation15 + $0x78] sm:$0xff]
    %v1048 = vld [vmem:[%s33] sm:$0x1]
    %v1049 = vld [vmem:[%s35] sm:$0x1]
    %v1050 = vld [vmem:[%s37] sm:$0x1]
    %v1052 = vperm.slane %v1014, 0
    %vm1054 = vcmask 15360
    %v1056 = vsel %vm1054, %v777, 0
    %vm1058 = vcmask 1041408
    %v1060 = vsel %vm1058, %v1013, 0
    %1062 = vmatpush.msra.mxu0 0.0
    %1063 = vmatpush.msra.mxu0 0.0
    %1064 = vmatpush.msra.mxu0 0.0
    %1065 = vmatpush.msra.mxu0 0.0
    %1066 = vmatpush.msra.mxu0 0.0
    %1067 = vmatpush.msra.mxu0 0.0
    %1068 = vmatpush.msra.mxu0 0.0
    %1069 = vmatpush.msra.mxu0 0.0
    %1070 = vmatpush.msra.mxu0 0.0
    %1071 = vmatpush.msra.mxu0 0.0
    %1072 = vmatpush.msra.mxu0 0.0
    %1073 = vmatpush.msra.mxu0 0.0
    %1074 = vmatpush.msra.mxu0 0.0
    %1075 = vmatpush.msra.mxu0 0.0
    %1076 = vmatpush.msra.mxu0 0.0
    %1077 = vmatpush.msra.mxu0 %v1060
    %1078 = vmatmul.f32.gmra.mxu0 %v1056
    %v1079 = vpop.f32.mrf.mxu0
    %v1080 = vadd.f32 %v1052, %v1079
    %1081 = vdwg.mxu0
    %v1083 = vperm.slane %v1031, 0
    %1085 = vmatpush.msra.mxu0 %v1030
    %1086 = vmatpush.msra.mxu0 %v1029
    %1087 = vmatpush.msra.mxu0 %v1028
    %1088 = vmatpush.msra.mxu0 %v1027
    %1089 = vmatpush.msra.mxu0 %v1026
    %1090 = vmatpush.msra.mxu0 %v1025
    %1091 = vmatpush.msra.mxu0 %v1024
    %1092 = vmatpush.msra.mxu0 %v1023
    %1093 = vmatpush.msra.mxu0 %v1022
    %1094 = vmatpush.msra.mxu0 %v1021
    %1095 = vmatpush.msra.mxu0 %v1020
    %1096 = vmatpush.msra.mxu0 %v1019
    %1097 = vmatpush.msra.mxu0 %v1018
    %1098 = vmatpush.msra.mxu0 %v1017
    %1099 = vmatpush.msra.mxu0 %v1016
    %1100 = vmatpush.msra.mxu0 %v1015
    %1101 = vmatmul.f32.gmra.mxu0 %v1012
    %v1102 = vpop.f32.mrf.mxu0
    %v1103 = vadd.f32 %v1083, %v1102
    %1104 = vdwg.mxu0
    %v1106 = vperm.slane %v1048, 0
    %1108 = vmatpush.msra.mxu0 %v1047
    %1109 = vmatpush.msra.mxu0 %v1046
    %1110 = vmatpush.msra.mxu0 %v1045
    %1111 = vmatpush.msra.mxu0 %v1044
    %1112 = vmatpush.msra.mxu0 %v1043
    %1113 = vmatpush.msra.mxu0 %v1042
    %1114 = vmatpush.msra.mxu0 %v1041
    %1115 = vmatpush.msra.mxu0 %v1040
    %1116 = vmatpush.msra.mxu0 %v1039
    %1117 = vmatpush.msra.mxu0 %v1038
    %1118 = vmatpush.msra.mxu0 %v1037
    %1119 = vmatpush.msra.mxu0 %v1036
    %1120 = vmatpush.msra.mxu0 %v1035
    %1121 = vmatpush.msra.mxu0 %v1034
    %1122 = vmatpush.msra.mxu0 %v1033
    %1123 = vmatpush.msra.mxu0 %v1032
    %1124 = vmatmul.f32.gmra.mxu0 %v918
    %v1125 = vpop.f32.mrf.mxu0
    %v1126 = vadd.f32 %v1106, %v1125
    %1127 = vdwg.mxu0
    %v1128 = vmul.f32 %v1080, %v1103
    %v1129 = vadd.f32 %v1128, %v1126
    %1130 = vadd.xlane.f32.xlu0 %v1129
    %v1131 = vpop.xlane.xlu0 %1130
    %v1132 = vrcp.pop 128.0
    %v1133 = vmul.f32 128.0, %v1132
    %v1134 = vsub.f32 1.0, %v1133
    %v1135 = vmul.f32 %v1132, %v1134
    %v1136 = vadd.f32 %v1132, %v1135
    %vm1137 = vweird.f32 %v1132
    %v1138 = vsel %vm1137, %v1132, %v1136
    %v1139 = vmul.f32 %v1131, %v1138
    %v1140 = vsub.f32 %v1129, %v1139
    %v1141 = vmul.f32 %v1140, %v1140
    %1142 = vadd.xlane.f32.xlu0 %v1141
    %v1143 = vpop.xlane.xlu0 %1142
    %v1144 = vmul.f32 %v1143, %v1138
    %v1145 = vadd.f32 %v1144, 1e-05
    %v1146 = vrsqrt.pop %v1145
    %v1147 = vmul.f32 %v1146, %v1145
    %v1148 = vmul.f32 %v1147, %v1146
    %v1149 = vmul.f32 0.5, %v1148
    %v1150 = vsub.f32 1.5, %v1149
    %v1151 = vmul.f32 %v1146, %v1150
    %vm1152 = vweird.f32 %v1145
    %vm1153 = vweird.f32 %v1146
    %vm1154 = vmor %vm1152, %vm1153
    %v1155 = vsel %vm1154, %v1146, %v1151
    %v1156 = vmul.f32 %v1140, %v1155
    %v1158 = vperm.slane %v1049, 0
    %v1160 = vmul.f32 %v1156, %v1158
    %v1162 = vperm.slane %v1050, 0
    %v1164 = vadd.f32 %v1160, %v1162
    %v1165 = vxor.u32 %v1164, 2147483648
    %v1166 = vmul.f32 %v1165, 1.442695
    %v1167 = vpow.pop %v1166
    %v1168 = vadd.f32 %v1167, 1.0
    %v1169 = vrcp.pop %v1168
    %v1170 = vmul.f32 %v1168, %v1169
    %v1171 = vsub.f32 1.0, %v1170
    %v1172 = vmul.f32 %v1169, %v1171
    %v1173 = vadd.f32 %v1169, %v1172
    %vm1174 = vweird.f32 %v1168
    %vm1175 = vweird.f32 %v1169
    %vm1176 = vmor %vm1174, %vm1175
    %v1177 = vsel %vm1176, %v1169, %v1173
    %v1178 = vand.u32 2147483647, %v1168
    %vm1179 = vcmp.eq.f32.partialorder %v1178, 8.507059e+37
    %v1180 = vand.u32 %v1168, 2147483648
    %v1181 = vor.u32 1.1754944e-38, %v1180
    %v1182 = vsel %vm1179, %v1181, %v1177
    %v1183 = vmul.f32 1.0, %v1182
    %v1184 = vmul.f32 %v1164, %v1183
    %v1185 = vld [vmem:[#allocation16] sm:$0xff]
    %v1186 = vld [vmem:[#allocation16 + $0x8] sm:$0xff]
    %v1187 = vld [vmem:[#allocation16 + $0x10] sm:$0xff]
    %v1188 = vld [vmem:[#allocation16 + $0x18] sm:$0xff]
    %v1189 = vld [vmem:[#allocation16 + $0x20] sm:$0xff]
    %v1190 = vld [vmem:[#allocation16 + $0x28] sm:$0xff]
    %v1191 = vld [vmem:[#allocation16 + $0x30] sm:$0xff]
    %v1192 = vld [vmem:[#allocation16 + $0x38] sm:$0xff]
    %v1193 = vld [vmem:[#allocation16 + $0x40] sm:$0xff]
    %v1194 = vld [vmem:[#allocation16 + $0x48] sm:$0xff]
    %v1195 = vld [vmem:[#allocation16 + $0x50] sm:$0xff]
    %v1196 = vld [vmem:[#allocation16 + $0x58] sm:$0xff]
    %v1197 = vld [vmem:[#allocation16 + $0x60] sm:$0xff]
    %v1198 = vld [vmem:[#allocation16 + $0x68] sm:$0xff]
    %v1199 = vld [vmem:[#allocation16 + $0x70] sm:$0xff]
    %v1200 = vld [vmem:[#allocation16 + $0x78] sm:$0xff]
    %v1201 = vld [vmem:[%s41] sm:$0x1]
    %v1202 = vld [vmem:[#allocation18] sm:$0xff]
    %v1203 = vld [vmem:[#allocation18 + $0x8] sm:$0xff]
    %v1204 = vld [vmem:[#allocation18 + $0x10] sm:$0xff]
    %v1205 = vld [vmem:[#allocation18 + $0x18] sm:$0xff]
    %v1206 = vld [vmem:[#allocation18 + $0x20] sm:$0xff]
    %v1207 = vld [vmem:[#allocation18 + $0x28] sm:$0xff]
    %v1208 = vld [vmem:[#allocation18 + $0x30] sm:$0xff]
    %v1209 = vld [vmem:[#allocation18 + $0x38] sm:$0xff]
    %v1210 = vld [vmem:[#allocation18 + $0x40] sm:$0xff]
    %v1211 = vld [vmem:[#allocation18 + $0x48] sm:$0xff]
    %v1212 = vld [vmem:[#allocation18 + $0x50] sm:$0xff]
    %v1213 = vld [vmem:[#allocation18 + $0x58] sm:$0xff]
    %v1214 = vld [vmem:[#allocation18 + $0x60] sm:$0xff]
    %v1215 = vld [vmem:[#allocation18 + $0x68] sm:$0xff]
    %v1216 = vld [vmem:[#allocation18 + $0x70] sm:$0xff]
    %v1217 = vld [vmem:[#allocation18 + $0x78] sm:$0xff]
    %v1218 = vld [vmem:[%s45] sm:$0x1]
    %v1219 = vld [vmem:[#allocation19] sm:$0xff]
    %v1220 = vld [vmem:[#allocation19 + $0x8] sm:$0xff]
    %v1221 = vld [vmem:[#allocation19 + $0x10] sm:$0xff]
    %v1222 = vld [vmem:[#allocation19 + $0x18] sm:$0xff]
    %v1223 = vld [vmem:[#allocation19 + $0x20] sm:$0xff]
    %v1224 = vld [vmem:[#allocation19 + $0x28] sm:$0xff]
    %v1225 = vld [vmem:[#allocation19 + $0x30] sm:$0xff]
    %v1226 = vld [vmem:[#allocation19 + $0x38] sm:$0xff]
    %v1227 = vld [vmem:[#allocation19 + $0x40] sm:$0xff]
    %v1228 = vld [vmem:[#allocation19 + $0x48] sm:$0xff]
    %v1229 = vld [vmem:[#allocation19 + $0x50] sm:$0xff]
    %v1230 = vld [vmem:[#allocation19 + $0x58] sm:$0xff]
    %v1231 = vld [vmem:[#allocation19 + $0x60] sm:$0xff]
    %v1232 = vld [vmem:[#allocation19 + $0x68] sm:$0xff]
    %v1233 = vld [vmem:[#allocation19 + $0x70] sm:$0xff]
    %v1234 = vld [vmem:[#allocation19 + $0x78] sm:$0xff]
    %v1235 = vld [vmem:[%s49] sm:$0x1]
    %v1236 = vld [vmem:[%s51] sm:$0x1]
    %v1237 = vld [vmem:[%s53] sm:$0x1]
    %v1239 = vperm.slane %v1201, 0
    %1241 = vmatpush.msra.mxu0 %v1200
    %1242 = vmatpush.msra.mxu0 %v1199
    %1243 = vmatpush.msra.mxu0 %v1198
    %1244 = vmatpush.msra.mxu0 %v1197
    %1245 = vmatpush.msra.mxu0 %v1196
    %1246 = vmatpush.msra.mxu0 %v1195
    %1247 = vmatpush.msra.mxu0 %v1194
    %1248 = vmatpush.msra.mxu0 %v1193
    %1249 = vmatpush.msra.mxu0 %v1192
    %1250 = vmatpush.msra.mxu0 %v1191
    %1251 = vmatpush.msra.mxu0 %v1190
    %1252 = vmatpush.msra.mxu0 %v1189
    %1253 = vmatpush.msra.mxu0 %v1188
    %1254 = vmatpush.msra.mxu0 %v1187
    %1255 = vmatpush.msra.mxu0 %v1186
    %1256 = vmatpush.msra.mxu0 %v1185
    %1257 = vmatmul.f32.gmra.mxu0 %v1184
    %v1258 = vpop.f32.mrf.mxu0
    %v1259 = vadd.f32 %v1239, %v1258
    %1260 = vdwg.mxu0
    %v1262 = vperm.slane %v1218, 0
    %1264 = vmatpush.msra.mxu0 %v1217
    %1265 = vmatpush.msra.mxu0 %v1216
    %1266 = vmatpush.msra.mxu0 %v1215
    %1267 = vmatpush.msra.mxu0 %v1214
    %1268 = vmatpush.msra.mxu0 %v1213
    %1269 = vmatpush.msra.mxu0 %v1212
    %1270 = vmatpush.msra.mxu0 %v1211
    %1271 = vmatpush.msra.mxu0 %v1210
    %1272 = vmatpush.msra.mxu0 %v1209
    %1273 = vmatpush.msra.mxu0 %v1208
    %1274 = vmatpush.msra.mxu0 %v1207
    %1275 = vmatpush.msra.mxu0 %v1206
    %1276 = vmatpush.msra.mxu0 %v1205
    %1277 = vmatpush.msra.mxu0 %v1204
    %1278 = vmatpush.msra.mxu0 %v1203
    %1279 = vmatpush.msra.mxu0 %v1202
    %1280 = vmatmul.f32.gmra.mxu0 %v1012
    %v1281 = vpop.f32.mrf.mxu0
    %v1282 = vadd.f32 %v1262, %v1281
    %1283 = vdwg.mxu0
    %v1285 = vperm.slane %v1235, 0
    %1287 = vmatpush.msra.mxu0 %v1234
    %1288 = vmatpush.msra.mxu0 %v1233
    %1289 = vmatpush.msra.mxu0 %v1232
    %1290 = vmatpush.msra.mxu0 %v1231
    %1291 = vmatpush.msra.mxu0 %v1230
    %1292 = vmatpush.msra.mxu0 %v1229
    %1293 = vmatpush.msra.mxu0 %v1228
    %1294 = vmatpush.msra.mxu0 %v1227
    %1295 = vmatpush.msra.mxu0 %v1226
    %1296 = vmatpush.msra.mxu0 %v1225
    %1297 = vmatpush.msra.mxu0 %v1224
    %1298 = vmatpush.msra.mxu0 %v1223
    %1299 = vmatpush.msra.mxu0 %v1222
    %1300 = vmatpush.msra.mxu0 %v1221
    %1301 = vmatpush.msra.mxu0 %v1220
    %1302 = vmatpush.msra.mxu0 %v1219
    %1303 = vmatmul.f32.gmra.mxu0 %v918
    %v1304 = vpop.f32.mrf.mxu0
    %v1305 = vadd.f32 %v1285, %v1304
    %1306 = vdwg.mxu0
    %v1307 = vmul.f32 %v1259, %v1282
    %v1308 = vadd.f32 %v1307, %v1305
    %1309 = vadd.xlane.f32.xlu0 %v1308
    %v1310 = vpop.xlane.xlu0 %1309
    %v1311 = vmul.f32 %v1310, %v1138
    %v1312 = vsub.f32 %v1308, %v1311
    %v1313 = vmul.f32 %v1312, %v1312
    %1314 = vadd.xlane.f32.xlu0 %v1313
    %v1315 = vpop.xlane.xlu0 %1314
    %v1316 = vmul.f32 %v1315, %v1138
    %v1317 = vadd.f32 %v1316, 1e-05
    %v1318 = vrsqrt.pop %v1317
    %v1319 = vmul.f32 %v1318, %v1317
    %v1320 = vmul.f32 %v1319, %v1318
    %v1321 = vmul.f32 0.5, %v1320
    %v1322 = vsub.f32 1.5, %v1321
    %v1323 = vmul.f32 %v1318, %v1322
    %vm1324 = vweird.f32 %v1317
    %vm1325 = vweird.f32 %v1318
    %vm1326 = vmor %vm1324, %vm1325
    %v1327 = vsel %vm1326, %v1318, %v1323
    %v1328 = vmul.f32 %v1312, %v1327
    %v1330 = vperm.slane %v1236, 0
    %v1332 = vmul.f32 %v1328, %v1330
    %v1334 = vperm.slane %v1237, 0
    %v1336 = vadd.f32 %v1332, %v1334
    %v1337 = vxor.u32 %v1336, 2147483648
    %v1338 = vmul.f32 %v1337, 1.442695
    %v1339 = vpow.pop %v1338
    %v1340 = vadd.f32 %v1339, 1.0
    %v1341 = vrcp.pop %v1340
    %v1342 = vmul.f32 %v1340, %v1341
    %v1343 = vsub.f32 1.0, %v1342
    %v1344 = vmul.f32 %v1341, %v1343
    %v1345 = vadd.f32 %v1341, %v1344
    %vm1346 = vweird.f32 %v1340
    %vm1347 = vweird.f32 %v1341
    %vm1348 = vmor %vm1346, %vm1347
    %v1349 = vsel %vm1348, %v1341, %v1345
    %v1350 = vand.u32 2147483647, %v1340
    %vm1351 = vcmp.eq.f32.partialorder %v1350, 8.507059e+37
    %v1352 = vand.u32 %v1340, 2147483648
    %v1353 = vor.u32 1.1754944e-38, %v1352
    %v1354 = vsel %vm1351, %v1353, %v1349
    %v1355 = vmul.f32 1.0, %v1354
    %v1356 = vmul.f32 %v1336, %v1355
    %v1357 = vld [vmem:[#allocation21] sm:$0xff]
    %v1358 = vld [vmem:[#allocation21 + $0x8] sm:$0xff]
    %v1359 = vld [vmem:[#allocation21 + $0x10] sm:$0xff]
    %v1360 = vld [vmem:[#allocation21 + $0x18] sm:$0xff]
    %v1361 = vld [vmem:[#allocation21 + $0x20] sm:$0xff]
    %v1362 = vld [vmem:[#allocation21 + $0x28] sm:$0xff]
    %v1363 = vld [vmem:[#allocation21 + $0x30] sm:$0xff]
    %v1364 = vld [vmem:[#allocation21 + $0x38] sm:$0xff]
    %v1365 = vld [vmem:[#allocation21 + $0x40] sm:$0xff]
    %v1366 = vld [vmem:[#allocation21 + $0x48] sm:$0xff]
    %v1367 = vld [vmem:[#allocation21 + $0x50] sm:$0xff]
    %v1368 = vld [vmem:[#allocation21 + $0x58] sm:$0xff]
    %v1369 = vld [vmem:[#allocation21 + $0x60] sm:$0xff]
    %v1370 = vld [vmem:[#allocation21 + $0x68] sm:$0xff]
    %v1371 = vld [vmem:[#allocation21 + $0x70] sm:$0xff]
    %v1372 = vld [vmem:[#allocation21 + $0x78] sm:$0xff]
    %v1373 = vld [vmem:[%s57] sm:$0x1]
    %v1374 = vld [vmem:[#allocation22] sm:$0xff]
    %v1375 = vld [vmem:[#allocation22 + $0x8] sm:$0xff]
    %v1376 = vld [vmem:[#allocation22 + $0x10] sm:$0xff]
    %v1377 = vld [vmem:[#allocation22 + $0x18] sm:$0xff]
    %v1378 = vld [vmem:[#allocation22 + $0x20] sm:$0xff]
    %v1379 = vld [vmem:[#allocation22 + $0x28] sm:$0xff]
    %v1380 = vld [vmem:[#allocation22 + $0x30] sm:$0xff]
    %v1381 = vld [vmem:[#allocation22 + $0x38] sm:$0xff]
    %v1382 = vld [vmem:[#allocation22 + $0x40] sm:$0xff]
    %v1383 = vld [vmem:[#allocation22 + $0x48] sm:$0xff]
    %v1384 = vld [vmem:[#allocation22 + $0x50] sm:$0xff]
    %v1385 = vld [vmem:[#allocation22 + $0x58] sm:$0xff]
    %v1386 = vld [vmem:[#allocation22 + $0x60] sm:$0xff]
    %v1387 = vld [vmem:[#allocation22 + $0x68] sm:$0xff]
    %v1388 = vld [vmem:[#allocation22 + $0x70] sm:$0xff]
    %v1389 = vld [vmem:[#allocation22 + $0x78] sm:$0xff]
    %v1390 = vld [vmem:[%s61] sm:$0x1]
    %v1391 = vld [vmem:[#allocation24] sm:$0xff]
    %v1392 = vld [vmem:[#allocation24 + $0x8] sm:$0xff]
    %v1393 = vld [vmem:[#allocation24 + $0x10] sm:$0xff]
    %v1394 = vld [vmem:[#allocation24 + $0x18] sm:$0xff]
    %v1395 = vld [vmem:[#allocation24 + $0x20] sm:$0xff]
    %v1396 = vld [vmem:[#allocation24 + $0x28] sm:$0xff]
    %v1397 = vld [vmem:[#allocation24 + $0x30] sm:$0xff]
    %v1398 = vld [vmem:[#allocation24 + $0x38] sm:$0xff]
    %v1399 = vld [vmem:[#allocation24 + $0x40] sm:$0xff]
    %v1400 = vld [vmem:[#allocation24 + $0x48] sm:$0xff]
    %v1401 = vld [vmem:[#allocation24 + $0x50] sm:$0xff]
    %v1402 = vld [vmem:[#allocation24 + $0x58] sm:$0xff]
    %v1403 = vld [vmem:[#allocation24 + $0x60] sm:$0xff]
    %v1404 = vld [vmem:[#allocation24 + $0x68] sm:$0xff]
    %v1405 = vld [vmem:[#allocation24 + $0x70] sm:$0xff]
    %v1406 = vld [vmem:[#allocation24 + $0x78] sm:$0xff]
    %v1407 = vld [vmem:[%s65] sm:$0x1]
    %v1408 = vld [vmem:[%s67] sm:$0x1]
    %v1409 = vld [vmem:[%s69] sm:$0x1]
    %v1411 = vperm.slane %v1373, 0
    %1413 = vmatpush.msra.mxu0 %v1372
    %1414 = vmatpush.msra.mxu0 %v1371
    %1415 = vmatpush.msra.mxu0 %v1370
    %1416 = vmatpush.msra.mxu0 %v1369
    %1417 = vmatpush.msra.mxu0 %v1368
    %1418 = vmatpush.msra.mxu0 %v1367
    %1419 = vmatpush.msra.mxu0 %v1366
    %1420 = vmatpush.msra.mxu0 %v1365
    %1421 = vmatpush.msra.mxu0 %v1364
    %1422 = vmatpush.msra.mxu0 %v1363
    %1423 = vmatpush.msra.mxu0 %v1362
    %1424 = vmatpush.msra.mxu0 %v1361
    %1425 = vmatpush.msra.mxu0 %v1360
    %1426 = vmatpush.msra.mxu0 %v1359
    %1427 = vmatpush.msra.mxu0 %v1358
    %1428 = vmatpush.msra.mxu0 %v1357
    %1429 = vmatmul.f32.gmra.mxu0 %v1356
    %v1430 = vpop.f32.mrf.mxu0
    %v1431 = vadd.f32 %v1411, %v1430
    %1432 = vdwg.mxu0
    %v1434 = vperm.slane %v1390, 0
    %1436 = vmatpush.msra.mxu0 %v1389
    %1437 = vmatpush.msra.mxu0 %v1388
    %1438 = vmatpush.msra.mxu0 %v1387
    %1439 = vmatpush.msra.mxu0 %v1386
    %1440 = vmatpush.msra.mxu0 %v1385
    %1441 = vmatpush.msra.mxu0 %v1384
    %1442 = vmatpush.msra.mxu0 %v1383
    %1443 = vmatpush.msra.mxu0 %v1382
    %1444 = vmatpush.msra.mxu0 %v1381
    %1445 = vmatpush.msra.mxu0 %v1380
    %1446 = vmatpush.msra.mxu0 %v1379
    %1447 = vmatpush.msra.mxu0 %v1378
    %1448 = vmatpush.msra.mxu0 %v1377
    %1449 = vmatpush.msra.mxu0 %v1376
    %1450 = vmatpush.msra.mxu0 %v1375
    %1451 = vmatpush.msra.mxu0 %v1374
    %1452 = vmatmul.f32.gmra.mxu0 %v1012
    %v1453 = vpop.f32.mrf.mxu0
    %v1454 = vadd.f32 %v1434, %v1453
    %1455 = vdwg.mxu0
    %v1457 = vperm.slane %v1407, 0
    %1459 = vmatpush.msra.mxu0 %v1406
    %1460 = vmatpush.msra.mxu0 %v1405
    %1461 = vmatpush.msra.mxu0 %v1404
    %1462 = vmatpush.msra.mxu0 %v1403
    %1463 = vmatpush.msra.mxu0 %v1402
    %1464 = vmatpush.msra.mxu0 %v1401
    %1465 = vmatpush.msra.mxu0 %v1400
    %1466 = vmatpush.msra.mxu0 %v1399
    %1467 = vmatpush.msra.mxu0 %v1398
    %1468 = vmatpush.msra.mxu0 %v1397
    %1469 = vmatpush.msra.mxu0 %v1396
    %1470 = vmatpush.msra.mxu0 %v1395
    %1471 = vmatpush.msra.mxu0 %v1394
    %1472 = vmatpush.msra.mxu0 %v1393
    %1473 = vmatpush.msra.mxu0 %v1392
    %1474 = vmatpush.msra.mxu0 %v1391
    %1475 = vmatmul.f32.gmra.mxu0 %v918
    %v1476 = vpop.f32.mrf.mxu0
    %v1477 = vadd.f32 %v1457, %v1476
    %1478 = vdwg.mxu0
    %v1479 = vmul.f32 %v1431, %v1454
    %v1480 = vadd.f32 %v1479, %v1477
    %1481 = vadd.xlane.f32.xlu0 %v1480
    %v1482 = vpop.xlane.xlu0 %1481
    %v1483 = vmul.f32 %v1482, %v1138
    %v1484 = vsub.f32 %v1480, %v1483
    %v1485 = vmul.f32 %v1484, %v1484
    %1486 = vadd.xlane.f32.xlu0 %v1485
    %v1487 = vpop.xlane.xlu0 %1486
    %v1488 = vmul.f32 %v1487, %v1138
    %v1489 = vadd.f32 %v1488, 1e-05
    %v1490 = vrsqrt.pop %v1489
    %v1491 = vmul.f32 %v1490, %v1489
    %v1492 = vmul.f32 %v1491, %v1490
    %v1493 = vmul.f32 0.5, %v1492
    %v1494 = vsub.f32 1.5, %v1493
    %v1495 = vmul.f32 %v1490, %v1494
    %vm1496 = vweird.f32 %v1489
    %vm1497 = vweird.f32 %v1490
    %vm1498 = vmor %vm1496, %vm1497
    %v1499 = vsel %vm1498, %v1490, %v1495
    %v1500 = vmul.f32 %v1484, %v1499
    %v1502 = vperm.slane %v1408, 0
    %v1504 = vmul.f32 %v1500, %v1502
    %v1506 = vperm.slane %v1409, 0
    %v1508 = vadd.f32 %v1504, %v1506
    %v1509 = vxor.u32 %v1508, 2147483648
    %v1510 = vmul.f32 %v1509, 1.442695
    %v1511 = vpow.pop %v1510
    %v1512 = vadd.f32 %v1511, 1.0
    %v1513 = vrcp.pop %v1512
    %v1514 = vmul.f32 %v1512, %v1513
    %v1515 = vsub.f32 1.0, %v1514
    %v1516 = vmul.f32 %v1513, %v1515
    %v1517 = vadd.f32 %v1513, %v1516
    %vm1518 = vweird.f32 %v1512
    %vm1519 = vweird.f32 %v1513
    %vm1520 = vmor %vm1518, %vm1519
    %v1521 = vsel %vm1520, %v1513, %v1517
    %v1522 = vand.u32 2147483647, %v1512
    %vm1523 = vcmp.eq.f32.partialorder %v1522, 8.507059e+37
    %v1524 = vand.u32 %v1512, 2147483648
    %v1525 = vor.u32 1.1754944e-38, %v1524
    %v1526 = vsel %vm1523, %v1525, %v1521
    %v1527 = vmul.f32 1.0, %v1526
    %v1528 = vmul.f32 %v1508, %v1527
    %v1529 = vld [vmem:[#allocation25] sm:$0xff]
    %v1530 = vld [vmem:[#allocation25 + $0x8] sm:$0xff]
    %v1531 = vld [vmem:[#allocation25 + $0x10] sm:$0xff]
    %v1532 = vld [vmem:[#allocation25 + $0x18] sm:$0xff]
    %v1533 = vld [vmem:[#allocation25 + $0x20] sm:$0xff]
    %v1534 = vld [vmem:[#allocation25 + $0x28] sm:$0xff]
    %v1535 = vld [vmem:[#allocation25 + $0x30] sm:$0xff]
    %v1536 = vld [vmem:[#allocation25 + $0x38] sm:$0xff]
    %v1537 = vld [vmem:[#allocation25 + $0x40] sm:$0xff]
    %v1538 = vld [vmem:[#allocation25 + $0x48] sm:$0xff]
    %v1539 = vld [vmem:[#allocation25 + $0x50] sm:$0xff]
    %v1540 = vld [vmem:[#allocation25 + $0x58] sm:$0xff]
    %v1541 = vld [vmem:[#allocation25 + $0x60] sm:$0xff]
    %v1542 = vld [vmem:[#allocation25 + $0x68] sm:$0xff]
    %v1543 = vld [vmem:[#allocation25 + $0x70] sm:$0xff]
    %v1544 = vld [vmem:[#allocation25 + $0x78] sm:$0xff]
    %v1545 = vld [vmem:[%s73] sm:$0x1]
    %v1546 = vld [vmem:[#allocation27] sm:$0xff]
    %v1547 = vld [vmem:[#allocation27 + $0x8] sm:$0xff]
    %v1548 = vld [vmem:[#allocation27 + $0x10] sm:$0xff]
    %v1549 = vld [vmem:[#allocation27 + $0x18] sm:$0xff]
    %v1550 = vld [vmem:[#allocation27 + $0x20] sm:$0xff]
    %v1551 = vld [vmem:[#allocation27 + $0x28] sm:$0xff]
    %v1552 = vld [vmem:[#allocation27 + $0x30] sm:$0xff]
    %v1553 = vld [vmem:[#allocation27 + $0x38] sm:$0xff]
    %v1554 = vld [vmem:[#allocation27 + $0x40] sm:$0xff]
    %v1555 = vld [vmem:[#allocation27 + $0x48] sm:$0xff]
    %v1556 = vld [vmem:[#allocation27 + $0x50] sm:$0xff]
    %v1557 = vld [vmem:[#allocation27 + $0x58] sm:$0xff]
    %v1558 = vld [vmem:[#allocation27 + $0x60] sm:$0xff]
    %v1559 = vld [vmem:[#allocation27 + $0x68] sm:$0xff]
    %v1560 = vld [vmem:[#allocation27 + $0x70] sm:$0xff]
    %v1561 = vld [vmem:[#allocation27 + $0x78] sm:$0xff]
    %v1562 = vld [vmem:[%s77] sm:$0x1]
    %v1563 = vld [vmem:[#allocation28] sm:$0xff]
    %v1564 = vld [vmem:[#allocation28 + $0x8] sm:$0xff]
    %v1565 = vld [vmem:[#allocation28 + $0x10] sm:$0xff]
    %v1566 = vld [vmem:[#allocation28 + $0x18] sm:$0xff]
    %v1567 = vld [vmem:[#allocation28 + $0x20] sm:$0xff]
    %v1568 = vld [vmem:[#allocation28 + $0x28] sm:$0xff]
    %v1569 = vld [vmem:[#allocation28 + $0x30] sm:$0xff]
    %v1570 = vld [vmem:[#allocation28 + $0x38] sm:$0xff]
    %v1571 = vld [vmem:[#allocation28 + $0x40] sm:$0xff]
    %v1572 = vld [vmem:[#allocation28 + $0x48] sm:$0xff]
    %v1573 = vld [vmem:[#allocation28 + $0x50] sm:$0xff]
    %v1574 = vld [vmem:[#allocation28 + $0x58] sm:$0xff]
    %v1575 = vld [vmem:[#allocation28 + $0x60] sm:$0xff]
    %v1576 = vld [vmem:[#allocation28 + $0x68] sm:$0xff]
    %v1577 = vld [vmem:[#allocation28 + $0x70] sm:$0xff]
    %v1578 = vld [vmem:[#allocation28 + $0x78] sm:$0xff]
    %v1579 = vld [vmem:[%s81] sm:$0x1]
    %v1580 = vld [vmem:[%s83] sm:$0x1]
    %v1581 = vld [vmem:[%s85] sm:$0x1]
    %v1583 = vperm.slane %v1545, 0
    %1585 = vmatpush.msra.mxu0 %v1544
    %1586 = vmatpush.msra.mxu0 %v1543
    %1587 = vmatpush.msra.mxu0 %v1542
    %1588 = vmatpush.msra.mxu0 %v1541
    %1589 = vmatpush.msra.mxu0 %v1540
    %1590 = vmatpush.msra.mxu0 %v1539
    %1591 = vmatpush.msra.mxu0 %v1538
    %1592 = vmatpush.msra.mxu0 %v1537
    %1593 = vmatpush.msra.mxu0 %v1536
    %1594 = vmatpush.msra.mxu0 %v1535
    %1595 = vmatpush.msra.mxu0 %v1534
    %1596 = vmatpush.msra.mxu0 %v1533
    %1597 = vmatpush.msra.mxu0 %v1532
    %1598 = vmatpush.msra.mxu0 %v1531
    %1599 = vmatpush.msra.mxu0 %v1530
    %1600 = vmatpush.msra.mxu0 %v1529
    %1601 = vmatmul.f32.gmra.mxu0 %v1528
    %v1602 = vpop.f32.mrf.mxu0
    %v1603 = vadd.f32 %v1583, %v1602
    %1604 = vdwg.mxu0
    %v1606 = vperm.slane %v1562, 0
    %1608 = vmatpush.msra.mxu0 %v1561
    %1609 = vmatpush.msra.mxu0 %v1560
    %1610 = vmatpush.msra.mxu0 %v1559
    %1611 = vmatpush.msra.mxu0 %v1558
    %1612 = vmatpush.msra.mxu0 %v1557
    %1613 = vmatpush.msra.mxu0 %v1556
    %1614 = vmatpush.msra.mxu0 %v1555
    %1615 = vmatpush.msra.mxu0 %v1554
    %1616 = vmatpush.msra.mxu0 %v1553
    %1617 = vmatpush.msra.mxu0 %v1552
    %1618 = vmatpush.msra.mxu0 %v1551
    %1619 = vmatpush.msra.mxu0 %v1550
    %1620 = vmatpush.msra.mxu0 %v1549
    %1621 = vmatpush.msra.mxu0 %v1548
    %1622 = vmatpush.msra.mxu0 %v1547
    %1623 = vmatpush.msra.mxu0 %v1546
    %1624 = vmatmul.f32.gmra.mxu0 %v1012
    %v1625 = vpop.f32.mrf.mxu0
    %v1626 = vadd.f32 %v1606, %v1625
    %1627 = vdwg.mxu0
    %v1629 = vperm.slane %v1579, 0
    %1631 = vmatpush.msra.mxu0 %v1578
    %1632 = vmatpush.msra.mxu0 %v1577
    %1633 = vmatpush.msra.mxu0 %v1576
    %1634 = vmatpush.msra.mxu0 %v1575
    %1635 = vmatpush.msra.mxu0 %v1574
    %1636 = vmatpush.msra.mxu0 %v1573
    %1637 = vmatpush.msra.mxu0 %v1572
    %1638 = vmatpush.msra.mxu0 %v1571
    %1639 = vmatpush.msra.mxu0 %v1570
    %1640 = vmatpush.msra.mxu0 %v1569
    %1641 = vmatpush.msra.mxu0 %v1568
    %1642 = vmatpush.msra.mxu0 %v1567
    %1643 = vmatpush.msra.mxu0 %v1566
    %1644 = vmatpush.msra.mxu0 %v1565
    %1645 = vmatpush.msra.mxu0 %v1564
    %1646 = vmatpush.msra.mxu0 %v1563
    %1647 = vmatmul.f32.gmra.mxu0 %v918
    %v1648 = vpop.f32.mrf.mxu0
    %v1649 = vadd.f32 %v1629, %v1648
    %1650 = vdwg.mxu0
    %v1651 = vmul.f32 %v1603, %v1626
    %v1652 = vadd.f32 %v1651, %v1649
    %1653 = vadd.xlane.f32.xlu0 %v1652
    %v1654 = vpop.xlane.xlu0 %1653
    %v1655 = vmul.f32 %v1654, %v1138
    %v1656 = vsub.f32 %v1652, %v1655
    %v1657 = vmul.f32 %v1656, %v1656
    %1658 = vadd.xlane.f32.xlu0 %v1657
    %v1659 = vpop.xlane.xlu0 %1658
    %v1660 = vmul.f32 %v1659, %v1138
    %v1661 = vadd.f32 %v1660, 1e-05
    %v1662 = vrsqrt.pop %v1661
    %v1663 = vmul.f32 %v1662, %v1661
    %v1664 = vmul.f32 %v1663, %v1662
    %v1665 = vmul.f32 0.5, %v1664
    %v1666 = vsub.f32 1.5, %v1665
    %v1667 = vmul.f32 %v1662, %v1666
    %vm1668 = vweird.f32 %v1661
    %vm1669 = vweird.f32 %v1662
    %vm1670 = vmor %vm1668, %vm1669
    %v1671 = vsel %vm1670, %v1662, %v1667
    %v1672 = vmul.f32 %v1656, %v1671
    %v1674 = vperm.slane %v1580, 0
    %v1676 = vmul.f32 %v1672, %v1674
    %v1678 = vperm.slane %v1581, 0
    %v1680 = vadd.f32 %v1676, %v1678
    %v1681 = vxor.u32 %v1680, 2147483648
    %v1682 = vmul.f32 %v1681, 1.442695
    %v1683 = vpow.pop %v1682
    %v1684 = vadd.f32 %v1683, 1.0
    %v1685 = vrcp.pop %v1684
    %v1686 = vmul.f32 %v1684, %v1685
    %v1687 = vsub.f32 1.0, %v1686
    %v1688 = vmul.f32 %v1685, %v1687
    %v1689 = vadd.f32 %v1685, %v1688
    %vm1690 = vweird.f32 %v1684
    %vm1691 = vweird.f32 %v1685
    %vm1692 = vmor %vm1690, %vm1691
    %v1693 = vsel %vm1692, %v1685, %v1689
    %v1694 = vand.u32 2147483647, %v1684
    %vm1695 = vcmp.eq.f32.partialorder %v1694, 8.507059e+37
    %v1696 = vand.u32 %v1684, 2147483648
    %v1697 = vor.u32 1.1754944e-38, %v1696
    %v1698 = vsel %vm1695, %v1697, %v1693
    %v1699 = vmul.f32 1.0, %v1698
    %v1700 = vmul.f32 %v1680, %v1699
    %v1701 = vld [vmem:[#allocation30] sm:$0xff]
    %v1702 = vld [vmem:[#allocation30 + $0x8] sm:$0xff]
    %v1703 = vld [vmem:[#allocation30 + $0x10] sm:$0xff]
    %v1704 = vld [vmem:[#allocation30 + $0x18] sm:$0xff]
    %v1705 = vld [vmem:[#allocation30 + $0x20] sm:$0xff]
    %v1706 = vld [vmem:[#allocation30 + $0x28] sm:$0xff]
    %v1707 = vld [vmem:[#allocation30 + $0x30] sm:$0xff]
    %v1708 = vld [vmem:[#allocation30 + $0x38] sm:$0xff]
    %v1709 = vld [vmem:[#allocation30 + $0x40] sm:$0xff]
    %v1710 = vld [vmem:[#allocation30 + $0x48] sm:$0xff]
    %v1711 = vld [vmem:[#allocation30 + $0x50] sm:$0xff]
    %v1712 = vld [vmem:[#allocation30 + $0x58] sm:$0xff]
    %v1713 = vld [vmem:[#allocation30 + $0x60] sm:$0xff]
    %v1714 = vld [vmem:[#allocation30 + $0x68] sm:$0xff]
    %v1715 = vld [vmem:[#allocation30 + $0x70] sm:$0xff]
    %v1716 = vld [vmem:[#allocation30 + $0x78] sm:$0xff]
    %v1717 = vld [vmem:[%s89] sm:$0x1]
    %v1718 = vld [vmem:[#allocation31] sm:$0xff]
    %v1719 = vld [vmem:[#allocation31 + $0x8] sm:$0xff]
    %v1720 = vld [vmem:[#allocation31 + $0x10] sm:$0xff]
    %v1721 = vld [vmem:[#allocation31 + $0x18] sm:$0xff]
    %v1722 = vld [vmem:[#allocation31 + $0x20] sm:$0xff]
    %v1723 = vld [vmem:[#allocation31 + $0x28] sm:$0xff]
    %v1724 = vld [vmem:[#allocation31 + $0x30] sm:$0xff]
    %v1725 = vld [vmem:[#allocation31 + $0x38] sm:$0xff]
    %v1726 = vld [vmem:[#allocation31 + $0x40] sm:$0xff]
    %v1727 = vld [vmem:[#allocation31 + $0x48] sm:$0xff]
    %v1728 = vld [vmem:[#allocation31 + $0x50] sm:$0xff]
    %v1729 = vld [vmem:[#allocation31 + $0x58] sm:$0xff]
    %v1730 = vld [vmem:[#allocation31 + $0x60] sm:$0xff]
    %v1731 = vld [vmem:[#allocation31 + $0x68] sm:$0xff]
    %v1732 = vld [vmem:[#allocation31 + $0x70] sm:$0xff]
    %v1733 = vld [vmem:[#allocation31 + $0x78] sm:$0xff]
    %v1734 = vld [vmem:[%s93] sm:$0x1]
    %v1735 = vld [vmem:[#allocation33] sm:$0xff]
    %v1736 = vld [vmem:[#allocation33 + $0x8] sm:$0xff]
    %v1737 = vld [vmem:[#allocation33 + $0x10] sm:$0xff]
    %v1738 = vld [vmem:[#allocation33 + $0x18] sm:$0xff]
    %v1739 = vld [vmem:[#allocation33 + $0x20] sm:$0xff]
    %v1740 = vld [vmem:[#allocation33 + $0x28] sm:$0xff]
    %v1741 = vld [vmem:[#allocation33 + $0x30] sm:$0xff]
    %v1742 = vld [vmem:[#allocation33 + $0x38] sm:$0xff]
    %v1743 = vld [vmem:[#allocation33 + $0x40] sm:$0xff]
    %v1744 = vld [vmem:[#allocation33 + $0x48] sm:$0xff]
    %v1745 = vld [vmem:[#allocation33 + $0x50] sm:$0xff]
    %v1746 = vld [vmem:[#allocation33 + $0x58] sm:$0xff]
    %v1747 = vld [vmem:[#allocation33 + $0x60] sm:$0xff]
    %v1748 = vld [vmem:[#allocation33 + $0x68] sm:$0xff]
    %v1749 = vld [vmem:[#allocation33 + $0x70] sm:$0xff]
    %v1750 = vld [vmem:[#allocation33 + $0x78] sm:$0xff]
    %v1751 = vld [vmem:[%s97] sm:$0x1]
    %v1752 = vld [vmem:[%s99] sm:$0x1]
    %v1753 = vld [vmem:[%s101] sm:$0x1]
    %v1755 = vperm.slane %v1717, 0
    %1757 = vmatpush.msra.mxu0 %v1716
    %1758 = vmatpush.msra.mxu0 %v1715
    %1759 = vmatpush.msra.mxu0 %v1714
    %1760 = vmatpush.msra.mxu0 %v1713
    %1761 = vmatpush.msra.mxu0 %v1712
    %1762 = vmatpush.msra.mxu0 %v1711
    %1763 = vmatpush.msra.mxu0 %v1710
    %1764 = vmatpush.msra.mxu0 %v1709
    %1765 = vmatpush.msra.mxu0 %v1708
    %1766 = vmatpush.msra.mxu0 %v1707
    %1767 = vmatpush.msra.mxu0 %v1706
    %1768 = vmatpush.msra.mxu0 %v1705
    %1769 = vmatpush.msra.mxu0 %v1704
    %1770 = vmatpush.msra.mxu0 %v1703
    %1771 = vmatpush.msra.mxu0 %v1702
    %1772 = vmatpush.msra.mxu0 %v1701
    %1773 = vmatmul.f32.gmra.mxu0 %v1700
    %v1774 = vpop.f32.mrf.mxu0
    %v1775 = vadd.f32 %v1755, %v1774
    %1776 = vdwg.mxu0
    %v1778 = vperm.slane %v1734, 0
    %1780 = vmatpush.msra.mxu0 %v1733
    %1781 = vmatpush.msra.mxu0 %v1732
    %1782 = vmatpush.msra.mxu0 %v1731
    %1783 = vmatpush.msra.mxu0 %v1730
    %1784 = vmatpush.msra.mxu0 %v1729
    %1785 = vmatpush.msra.mxu0 %v1728
    %1786 = vmatpush.msra.mxu0 %v1727
    %1787 = vmatpush.msra.mxu0 %v1726
    %1788 = vmatpush.msra.mxu0 %v1725
    %1789 = vmatpush.msra.mxu0 %v1724
    %1790 = vmatpush.msra.mxu0 %v1723
    %1791 = vmatpush.msra.mxu0 %v1722
    %1792 = vmatpush.msra.mxu0 %v1721
    %1793 = vmatpush.msra.mxu0 %v1720
    %1794 = vmatpush.msra.mxu0 %v1719
    %1795 = vmatpush.msra.mxu0 %v1718
    %1796 = vmatmul.f32.gmra.mxu0 %v1012
    %v1797 = vpop.f32.mrf.mxu0
    %v1798 = vadd.f32 %v1778, %v1797
    %1799 = vdwg.mxu0
    %v1801 = vperm.slane %v1751, 0
    %1803 = vmatpush.msra.mxu0 %v1750
    %1804 = vmatpush.msra.mxu0 %v1749
    %1805 = vmatpush.msra.mxu0 %v1748
    %1806 = vmatpush.msra.mxu0 %v1747
    %1807 = vmatpush.msra.mxu0 %v1746
    %1808 = vmatpush.msra.mxu0 %v1745
    %1809 = vmatpush.msra.mxu0 %v1744
    %1810 = vmatpush.msra.mxu0 %v1743
    %1811 = vmatpush.msra.mxu0 %v1742
    %1812 = vmatpush.msra.mxu0 %v1741
    %1813 = vmatpush.msra.mxu0 %v1740
    %1814 = vmatpush.msra.mxu0 %v1739
    %1815 = vmatpush.msra.mxu0 %v1738
    %1816 = vmatpush.msra.mxu0 %v1737
    %1817 = vmatpush.msra.mxu0 %v1736
    %1818 = vmatpush.msra.mxu0 %v1735
    %1819 = vmatmul.f32.gmra.mxu0 %v918
    %v1820 = vpop.f32.mrf.mxu0
    %v1821 = vadd.f32 %v1801, %v1820
    %1822 = vdwg.mxu0
    %v1823 = vmul.f32 %v1775, %v1798
    %v1824 = vadd.f32 %v1823, %v1821
    %1825 = vadd.xlane.f32.xlu0 %v1824
    %v1826 = vpop.xlane.xlu0 %1825
    %v1827 = vmul.f32 %v1826, %v1138
    %v1828 = vsub.f32 %v1824, %v1827
    %v1829 = vmul.f32 %v1828, %v1828
    %1830 = vadd.xlane.f32.xlu0 %v1829
    %v1831 = vpop.xlane.xlu0 %1830
    %v1832 = vmul.f32 %v1831, %v1138
    %v1833 = vadd.f32 %v1832, 1e-05
    %v1834 = vrsqrt.pop %v1833
    %v1835 = vmul.f32 %v1834, %v1833
    %v1836 = vmul.f32 %v1835, %v1834
    %v1837 = vmul.f32 0.5, %v1836
    %v1838 = vsub.f32 1.5, %v1837
    %v1839 = vmul.f32 %v1834, %v1838
    %vm1840 = vweird.f32 %v1833
    %vm1841 = vweird.f32 %v1834
    %vm1842 = vmor %vm1840, %vm1841
    %v1843 = vsel %vm1842, %v1834, %v1839
    %v1844 = vmul.f32 %v1828, %v1843
    %v1846 = vperm.slane %v1752, 0
    %v1848 = vmul.f32 %v1844, %v1846
    %v1850 = vperm.slane %v1753, 0
    %v1852 = vadd.f32 %v1848, %v1850
    %v1853 = vxor.u32 %v1852, 2147483648
    %v1854 = vmul.f32 %v1853, 1.442695
    %v1855 = vpow.pop %v1854
    %v1856 = vadd.f32 %v1855, 1.0
    %v1857 = vrcp.pop %v1856
    %v1858 = vmul.f32 %v1856, %v1857
    %v1859 = vsub.f32 1.0, %v1858
    %v1860 = vmul.f32 %v1857, %v1859
    %v1861 = vadd.f32 %v1857, %v1860
    %vm1862 = vweird.f32 %v1856
    %vm1863 = vweird.f32 %v1857
    %vm1864 = vmor %vm1862, %vm1863
    %v1865 = vsel %vm1864, %v1857, %v1861
    %v1866 = vand.u32 2147483647, %v1856
    %vm1867 = vcmp.eq.f32.partialorder %v1866, 8.507059e+37
    %v1868 = vand.u32 %v1856, 2147483648
    %v1869 = vor.u32 1.1754944e-38, %v1868
    %v1870 = vsel %vm1867, %v1869, %v1865
    %v1871 = vmul.f32 1.0, %v1870
    %v1872 = vmul.f32 %v1852, %v1871
    %v1873 = vadd.f32 %v1872, %v1528
    %v1874 = vld [vmem:[#allocation34] sm:$0xff]
    %v1875 = vld [vmem:[#allocation34 + $0x8] sm:$0xff]
    %v1876 = vld [vmem:[#allocation34 + $0x10] sm:$0xff]
    %v1877 = vld [vmem:[#allocation34 + $0x18] sm:$0xff]
    %v1878 = vld [vmem:[#allocation34 + $0x20] sm:$0xff]
    %v1879 = vld [vmem:[#allocation34 + $0x28] sm:$0xff]
    %v1880 = vld [vmem:[#allocation34 + $0x30] sm:$0xff]
    %v1881 = vld [vmem:[#allocation34 + $0x38] sm:$0xff]
    %v1882 = vld [vmem:[#allocation34 + $0x40] sm:$0xff]
    %v1883 = vld [vmem:[#allocation34 + $0x48] sm:$0xff]
    %v1884 = vld [vmem:[#allocation34 + $0x50] sm:$0xff]
    %v1885 = vld [vmem:[#allocation34 + $0x58] sm:$0xff]
    %v1886 = vld [vmem:[#allocation34 + $0x60] sm:$0xff]
    %v1887 = vld [vmem:[#allocation34 + $0x68] sm:$0xff]
    %v1888 = vld [vmem:[#allocation34 + $0x70] sm:$0xff]
    %v1889 = vld [vmem:[#allocation34 + $0x78] sm:$0xff]
    %v1890 = vld [vmem:[%s105] sm:$0x1]
    %v1891 = vld [vmem:[#allocation36] sm:$0xff]
    %v1892 = vld [vmem:[#allocation36 + $0x8] sm:$0xff]
    %v1893 = vld [vmem:[#allocation36 + $0x10] sm:$0xff]
    %v1894 = vld [vmem:[#allocation36 + $0x18] sm:$0xff]
    %v1895 = vld [vmem:[#allocation36 + $0x20] sm:$0xff]
    %v1896 = vld [vmem:[#allocation36 + $0x28] sm:$0xff]
    %v1897 = vld [vmem:[#allocation36 + $0x30] sm:$0xff]
    %v1898 = vld [vmem:[#allocation36 + $0x38] sm:$0xff]
    %v1899 = vld [vmem:[#allocation36 + $0x40] sm:$0xff]
    %v1900 = vld [vmem:[#allocation36 + $0x48] sm:$0xff]
    %v1901 = vld [vmem:[#allocation36 + $0x50] sm:$0xff]
    %v1902 = vld [vmem:[#allocation36 + $0x58] sm:$0xff]
    %v1903 = vld [vmem:[#allocation36 + $0x60] sm:$0xff]
    %v1904 = vld [vmem:[#allocation36 + $0x68] sm:$0xff]
    %v1905 = vld [vmem:[#allocation36 + $0x70] sm:$0xff]
    %v1906 = vld [vmem:[#allocation36 + $0x78] sm:$0xff]
    %v1907 = vld [vmem:[%s109] sm:$0x1]
    %v1908 = vld [vmem:[#allocation37] sm:$0xff]
    %v1909 = vld [vmem:[#allocation37 + $0x8] sm:$0xff]
    %v1910 = vld [vmem:[#allocation37 + $0x10] sm:$0xff]
    %v1911 = vld [vmem:[#allocation37 + $0x18] sm:$0xff]
    %v1912 = vld [vmem:[#allocation37 + $0x20] sm:$0xff]
    %v1913 = vld [vmem:[#allocation37 + $0x28] sm:$0xff]
    %v1914 = vld [vmem:[#allocation37 + $0x30] sm:$0xff]
    %v1915 = vld [vmem:[#allocation37 + $0x38] sm:$0xff]
    %v1916 = vld [vmem:[#allocation37 + $0x40] sm:$0xff]
    %v1917 = vld [vmem:[#allocation37 + $0x48] sm:$0xff]
    %v1918 = vld [vmem:[#allocation37 + $0x50] sm:$0xff]
    %v1919 = vld [vmem:[#allocation37 + $0x58] sm:$0xff]
    %v1920 = vld [vmem:[#allocation37 + $0x60] sm:$0xff]
    %v1921 = vld [vmem:[#allocation37 + $0x68] sm:$0xff]
    %v1922 = vld [vmem:[#allocation37 + $0x70] sm:$0xff]
    %v1923 = vld [vmem:[#allocation37 + $0x78] sm:$0xff]
    %v1924 = vld [vmem:[%s113] sm:$0x1]
    %v1925 = vld [vmem:[%s115] sm:$0x1]
    %v1926 = vld [vmem:[%s117] sm:$0x1]
    %v1928 = vperm.slane %v1890, 0
    %1930 = vmatpush.msra.mxu0 %v1889
    %1931 = vmatpush.msra.mxu0 %v1888
    %1932 = vmatpush.msra.mxu0 %v1887
    %1933 = vmatpush.msra.mxu0 %v1886
    %1934 = vmatpush.msra.mxu0 %v1885
    %1935 = vmatpush.msra.mxu0 %v1884
    %1936 = vmatpush.msra.mxu0 %v1883
    %1937 = vmatpush.msra.mxu0 %v1882
    %1938 = vmatpush.msra.mxu0 %v1881
    %1939 = vmatpush.msra.mxu0 %v1880
    %1940 = vmatpush.msra.mxu0 %v1879
    %1941 = vmatpush.msra.mxu0 %v1878
    %1942 = vmatpush.msra.mxu0 %v1877
    %1943 = vmatpush.msra.mxu0 %v1876
    %1944 = vmatpush.msra.mxu0 %v1875
    %1945 = vmatpush.msra.mxu0 %v1874
    %1946 = vmatmul.f32.gmra.mxu0 %v1873
    %v1947 = vpop.f32.mrf.mxu0
    %v1948 = vadd.f32 %v1928, %v1947
    %1949 = vdwg.mxu0
    %v1951 = vperm.slane %v1907, 0
    %1953 = vmatpush.msra.mxu0 %v1906
    %1954 = vmatpush.msra.mxu0 %v1905
    %1955 = vmatpush.msra.mxu0 %v1904
    %1956 = vmatpush.msra.mxu0 %v1903
    %1957 = vmatpush.msra.mxu0 %v1902
    %1958 = vmatpush.msra.mxu0 %v1901
    %1959 = vmatpush.msra.mxu0 %v1900
    %1960 = vmatpush.msra.mxu0 %v1899
    %1961 = vmatpush.msra.mxu0 %v1898
    %1962 = vmatpush.msra.mxu0 %v1897
    %1963 = vmatpush.msra.mxu0 %v1896
    %1964 = vmatpush.msra.mxu0 %v1895
    %1965 = vmatpush.msra.mxu0 %v1894
    %1966 = vmatpush.msra.mxu0 %v1893
    %1967 = vmatpush.msra.mxu0 %v1892
    %1968 = vmatpush.msra.mxu0 %v1891
    %1969 = vmatmul.f32.gmra.mxu0 %v1012
    %v1970 = vpop.f32.mrf.mxu0
    %v1971 = vadd.f32 %v1951, %v1970
    %1972 = vdwg.mxu0
    %v1974 = vperm.slane %v1924, 0
    %1976 = vmatpush.msra.mxu0 %v1923
    %1977 = vmatpush.msra.mxu0 %v1922
    %1978 = vmatpush.msra.mxu0 %v1921
    %1979 = vmatpush.msra.mxu0 %v1920
    %1980 = vmatpush.msra.mxu0 %v1919
    %1981 = vmatpush.msra.mxu0 %v1918
    %1982 = vmatpush.msra.mxu0 %v1917
    %1983 = vmatpush.msra.mxu0 %v1916
    %1984 = vmatpush.msra.mxu0 %v1915
    %1985 = vmatpush.msra.mxu0 %v1914
    %1986 = vmatpush.msra.mxu0 %v1913
    %1987 = vmatpush.msra.mxu0 %v1912
    %1988 = vmatpush.msra.mxu0 %v1911
    %1989 = vmatpush.msra.mxu0 %v1910
    %1990 = vmatpush.msra.mxu0 %v1909
    %1991 = vmatpush.msra.mxu0 %v1908
    %1992 = vmatmul.f32.gmra.mxu0 %v918
    %v1993 = vpop.f32.mrf.mxu0
    %v1994 = vadd.f32 %v1974, %v1993
    %1995 = vdwg.mxu0
    %v1996 = vmul.f32 %v1948, %v1971
    %v1997 = vadd.f32 %v1996, %v1994
    %1998 = vadd.xlane.f32.xlu0 %v1997
    %v1999 = vpop.xlane.xlu0 %1998
    %v2000 = vmul.f32 %v1999, %v1138
    %v2001 = vsub.f32 %v1997, %v2000
    %v2002 = vmul.f32 %v2001, %v2001
    %2003 = vadd.xlane.f32.xlu0 %v2002
    %v2004 = vpop.xlane.xlu0 %2003
    %v2005 = vmul.f32 %v2004, %v1138
    %v2006 = vadd.f32 %v2005, 1e-05
    %v2007 = vrsqrt.pop %v2006
    %v2008 = vmul.f32 %v2007, %v2006
    %v2009 = vmul.f32 %v2008, %v2007
    %v2010 = vmul.f32 0.5, %v2009
    %v2011 = vsub.f32 1.5, %v2010
    %v2012 = vmul.f32 %v2007, %v2011
    %vm2013 = vweird.f32 %v2006
    %vm2014 = vweird.f32 %v2007
    %vm2015 = vmor %vm2013, %vm2014
    %v2016 = vsel %vm2015, %v2007, %v2012
    %v2017 = vmul.f32 %v2001, %v2016
    %v2019 = vperm.slane %v1925, 0
    %v2021 = vmul.f32 %v2017, %v2019
    %v2023 = vperm.slane %v1926, 0
    %v2025 = vadd.f32 %v2021, %v2023
    %v2026 = vxor.u32 %v2025, 2147483648
    %v2027 = vmul.f32 %v2026, 1.442695
    %v2028 = vpow.pop %v2027
    %v2029 = vadd.f32 %v2028, 1.0
    %v2030 = vrcp.pop %v2029
    %v2031 = vmul.f32 %v2029, %v2030
    %v2032 = vsub.f32 1.0, %v2031
    %v2033 = vmul.f32 %v2030, %v2032
    %v2034 = vadd.f32 %v2030, %v2033
    %vm2035 = vweird.f32 %v2029
    %vm2036 = vweird.f32 %v2030
    %vm2037 = vmor %vm2035, %vm2036
    %v2038 = vsel %vm2037, %v2030, %v2034
    %v2039 = vand.u32 2147483647, %v2029
    %vm2040 = vcmp.eq.f32.partialorder %v2039, 8.507059e+37
    %v2041 = vand.u32 %v2029, 2147483648
    %v2042 = vor.u32 1.1754944e-38, %v2041
    %v2043 = vsel %vm2040, %v2042, %v2038
    %v2044 = vmul.f32 1.0, %v2043
    %v2045 = vmul.f32 %v2025, %v2044
    %v2046 = vadd.f32 %v2045, %v1356
    %v2047 = vld [vmem:[#allocation39] sm:$0xff]
    %v2048 = vld [vmem:[#allocation39 + $0x8] sm:$0xff]
    %v2049 = vld [vmem:[#allocation39 + $0x10] sm:$0xff]
    %v2050 = vld [vmem:[#allocation39 + $0x18] sm:$0xff]
    %v2051 = vld [vmem:[#allocation39 + $0x20] sm:$0xff]
    %v2052 = vld [vmem:[#allocation39 + $0x28] sm:$0xff]
    %v2053 = vld [vmem:[#allocation39 + $0x30] sm:$0xff]
    %v2054 = vld [vmem:[#allocation39 + $0x38] sm:$0xff]
    %v2055 = vld [vmem:[#allocation39 + $0x40] sm:$0xff]
    %v2056 = vld [vmem:[#allocation39 + $0x48] sm:$0xff]
    %v2057 = vld [vmem:[#allocation39 + $0x50] sm:$0xff]
    %v2058 = vld [vmem:[#allocation39 + $0x58] sm:$0xff]
    %v2059 = vld [vmem:[#allocation39 + $0x60] sm:$0xff]
    %v2060 = vld [vmem:[#allocation39 + $0x68] sm:$0xff]
    %v2061 = vld [vmem:[#allocation39 + $0x70] sm:$0xff]
    %v2062 = vld [vmem:[#allocation39 + $0x78] sm:$0xff]
    %v2063 = vld [vmem:[%s121] sm:$0x1]
    %v2064 = vld [vmem:[#allocation40] sm:$0xff]
    %v2065 = vld [vmem:[#allocation40 + $0x8] sm:$0xff]
    %v2066 = vld [vmem:[#allocation40 + $0x10] sm:$0xff]
    %v2067 = vld [vmem:[#allocation40 + $0x18] sm:$0xff]
    %v2068 = vld [vmem:[#allocation40 + $0x20] sm:$0xff]
    %v2069 = vld [vmem:[#allocation40 + $0x28] sm:$0xff]
    %v2070 = vld [vmem:[#allocation40 + $0x30] sm:$0xff]
    %v2071 = vld [vmem:[#allocation40 + $0x38] sm:$0xff]
    %v2072 = vld [vmem:[#allocation40 + $0x40] sm:$0xff]
    %v2073 = vld [vmem:[#allocation40 + $0x48] sm:$0xff]
    %v2074 = vld [vmem:[#allocation40 + $0x50] sm:$0xff]
    %v2075 = vld [vmem:[#allocation40 + $0x58] sm:$0xff]
    %v2076 = vld [vmem:[#allocation40 + $0x60] sm:$0xff]
    %v2077 = vld [vmem:[#allocation40 + $0x68] sm:$0xff]
    %v2078 = vld [vmem:[#allocation40 + $0x70] sm:$0xff]
    %v2079 = vld [vmem:[#allocation40 + $0x78] sm:$0xff]
    %v2080 = vld [vmem:[#allocation42] sm:$0x1]
    %v2081 = vld [vmem:[#allocation43] sm:$0xff]
    %v2082 = vld [vmem:[#allocation43 + $0x8] sm:$0xff]
    %v2083 = vld [vmem:[#allocation43 + $0x10] sm:$0xff]
    %v2084 = vld [vmem:[#allocation43 + $0x18] sm:$0xff]
    %v2085 = vld [vmem:[#allocation43 + $0x20] sm:$0xff]
    %v2086 = vld [vmem:[#allocation43 + $0x28] sm:$0xff]
    %v2087 = vld [vmem:[#allocation43 + $0x30] sm:$0xff]
    %v2088 = vld [vmem:[#allocation43 + $0x38] sm:$0xff]
    %v2089 = vld [vmem:[#allocation43 + $0x40] sm:$0xff]
    %v2090 = vld [vmem:[#allocation43 + $0x48] sm:$0xff]
    %v2091 = vld [vmem:[#allocation43 + $0x50] sm:$0xff]
    %v2092 = vld [vmem:[#allocation43 + $0x58] sm:$0xff]
    %v2093 = vld [vmem:[#allocation43 + $0x60] sm:$0xff]
    %v2094 = vld [vmem:[#allocation43 + $0x68] sm:$0xff]
    %v2095 = vld [vmem:[#allocation43 + $0x70] sm:$0xff]
    %v2096 = vld [vmem:[#allocation43 + $0x78] sm:$0xff]
    %v2097 = vld [vmem:[#allocation45] sm:$0x1]
    %v2098 = vld [vmem:[#allocation46] sm:$0x1]
    %v2099 = vld [vmem:[#allocation48] sm:$0x1]
    %v2101 = vperm.slane %v2063, 0
    %2103 = vmatpush.msra.mxu0 %v2062
    %2104 = vmatpush.msra.mxu0 %v2061
    %2105 = vmatpush.msra.mxu0 %v2060
    %2106 = vmatpush.msra.mxu0 %v2059
    %2107 = vmatpush.msra.mxu0 %v2058
    %2108 = vmatpush.msra.mxu0 %v2057
    %2109 = vmatpush.msra.mxu0 %v2056
    %2110 = vmatpush.msra.mxu0 %v2055
    %2111 = vmatpush.msra.mxu0 %v2054
    %2112 = vmatpush.msra.mxu0 %v2053
    %2113 = vmatpush.msra.mxu0 %v2052
    %2114 = vmatpush.msra.mxu0 %v2051
    %2115 = vmatpush.msra.mxu0 %v2050
    %2116 = vmatpush.msra.mxu0 %v2049
    %2117 = vmatpush.msra.mxu0 %v2048
    %2118 = vmatpush.msra.mxu0 %v2047
    %2119 = vmatmul.f32.gmra.mxu0 %v2046
    %v2120 = vpop.f32.mrf.mxu0
    %v2121 = vadd.f32 %v2101, %v2120
    %2122 = vdwg.mxu0
    %v2124 = vperm.slane %v2080, 0
    %2126 = vmatpush.msra.mxu0 %v2079
    %2127 = vmatpush.msra.mxu0 %v2078
    %2128 = vmatpush.msra.mxu0 %v2077
    %2129 = vmatpush.msra.mxu0 %v2076
    %2130 = vmatpush.msra.mxu0 %v2075
    %2131 = vmatpush.msra.mxu0 %v2074
    %2132 = vmatpush.msra.mxu0 %v2073
    %2133 = vmatpush.msra.mxu0 %v2072
    %2134 = vmatpush.msra.mxu0 %v2071
    %2135 = vmatpush.msra.mxu0 %v2070
    %2136 = vmatpush.msra.mxu0 %v2069
    %2137 = vmatpush.msra.mxu0 %v2068
    %2138 = vmatpush.msra.mxu0 %v2067
    %2139 = vmatpush.msra.mxu0 %v2066
    %2140 = vmatpush.msra.mxu0 %v2065
    %2141 = vmatpush.msra.mxu0 %v2064
    %2142 = vmatmul.f32.gmra.mxu0 %v1012
    %v2143 = vpop.f32.mrf.mxu0
    %v2144 = vadd.f32 %v2124, %v2143
    %2145 = vdwg.mxu0
    %v2147 = vperm.slane %v2097, 0
    %2149 = vmatpush.msra.mxu0 %v2096
    %2150 = vmatpush.msra.mxu0 %v2095
    %2151 = vmatpush.msra.mxu0 %v2094
    %2152 = vmatpush.msra.mxu0 %v2093
    %2153 = vmatpush.msra.mxu0 %v2092
    %2154 = vmatpush.msra.mxu0 %v2091
    %2155 = vmatpush.msra.mxu0 %v2090
    %2156 = vmatpush.msra.mxu0 %v2089
    %2157 = vmatpush.msra.mxu0 %v2088
    %2158 = vmatpush.msra.mxu0 %v2087
    %2159 = vmatpush.msra.mxu0 %v2086
    %2160 = vmatpush.msra.mxu0 %v2085
    %2161 = vmatpush.msra.mxu0 %v2084
    %2162 = vmatpush.msra.mxu0 %v2083
    %2163 = vmatpush.msra.mxu0 %v2082
    %2164 = vmatpush.msra.mxu0 %v2081
    %2165 = vmatmul.f32.gmra.mxu0 %v918
    %v2166 = vpop.f32.mrf.mxu0
    %v2167 = vadd.f32 %v2147, %v2166
    %2168 = vdwg.mxu0
    %v2169 = vmul.f32 %v2121, %v2144
    %v2170 = vadd.f32 %v2169, %v2167
    %2171 = vadd.xlane.f32.xlu0 %v2170
    %v2172 = vpop.xlane.xlu0 %2171
    %v2173 = vmul.f32 %v2172, %v1138
    %v2174 = vsub.f32 %v2170, %v2173
    %v2175 = vmul.f32 %v2174, %v2174
    %2176 = vadd.xlane.f32.xlu0 %v2175
    %v2177 = vpop.xlane.xlu0 %2176
    %v2178 = vmul.f32 %v2177, %v1138
    %v2179 = vadd.f32 %v2178, 1e-05
    %v2180 = vrsqrt.pop %v2179
    %v2181 = vmul.f32 %v2180, %v2179
    %v2182 = vmul.f32 %v2181, %v2180
    %v2183 = vmul.f32 0.5, %v2182
    %v2184 = vsub.f32 1.5, %v2183
    %v2185 = vmul.f32 %v2180, %v2184
    %vm2186 = vweird.f32 %v2179
    %vm2187 = vweird.f32 %v2180
    %vm2188 = vmor %vm2186, %vm2187
    %v2189 = vsel %vm2188, %v2180, %v2185
    %v2190 = vmul.f32 %v2174, %v2189
    %v2192 = vperm.slane %v2098, 0
    %v2194 = vmul.f32 %v2190, %v2192
    %v2196 = vperm.slane %v2099, 0
    %v2198 = vadd.f32 %v2194, %v2196
    %v2199 = vxor.u32 %v2198, 2147483648
    %v2200 = vmul.f32 %v2199, 1.442695
    %v2201 = vpow.pop %v2200
    %v2202 = vadd.f32 %v2201, 1.0
    %v2203 = vrcp.pop %v2202
    %v2204 = vmul.f32 %v2202, %v2203
    %v2205 = vsub.f32 1.0, %v2204
    %v2206 = vmul.f32 %v2203, %v2205
    %v2207 = vadd.f32 %v2203, %v2206
    %vm2208 = vweird.f32 %v2202
    %vm2209 = vweird.f32 %v2203
    %vm2210 = vmor %vm2208, %vm2209
    %v2211 = vsel %vm2210, %v2203, %v2207
    %v2212 = vand.u32 2147483647, %v2202
    %vm2213 = vcmp.eq.f32.partialorder %v2212, 8.507059e+37
    %v2214 = vand.u32 %v2202, 2147483648
    %v2215 = vor.u32 1.1754944e-38, %v2214
    %v2216 = vsel %vm2213, %v2215, %v2211
    %v2217 = vmul.f32 1.0, %v2216
    %v2218 = vmul.f32 %v2198, %v2217
    %v2219 = vadd.f32 %v2218, %v1184
    %v2220 = vld [vmem:[%s135] sm:$0xff]
    %v2221 = vld [vmem:[%s135 + $0x8] sm:$0xff]
    %v2222 = vld [vmem:[%s135 + $0x10] sm:$0xff]
    %v2223 = vld [vmem:[%s135 + $0x18] sm:$0xff]
    %v2224 = vld [vmem:[%s135 + $0x20] sm:$0xff]
    %v2225 = vld [vmem:[%s135 + $0x28] sm:$0xff]
    %v2226 = vld [vmem:[%s135 + $0x30] sm:$0xff]
    %v2227 = vld [vmem:[%s135 + $0x38] sm:$0xff]
    %v2228 = vld [vmem:[%s135 + $0x40] sm:$0xff]
    %v2229 = vld [vmem:[%s135 + $0x48] sm:$0xff]
    %v2230 = vld [vmem:[%s135 + $0x50] sm:$0xff]
    %v2231 = vld [vmem:[%s135 + $0x58] sm:$0xff]
    %v2232 = vld [vmem:[%s135 + $0x60] sm:$0xff]
    %v2233 = vld [vmem:[%s135 + $0x68] sm:$0xff]
    %v2234 = vld [vmem:[%s135 + $0x70] sm:$0xff]
    %v2235 = vld [vmem:[%s135 + $0x78] sm:$0xff]
    %v2236 = vld [vmem:[%s135 + $0x80] sm:$0xff]
    %v2237 = vld [vmem:[%s135 + $0x88] sm:$0xff]
    %v2238 = vld [vmem:[%s135 + $0x90] sm:$0xff]
    %v2239 = vld [vmem:[%s135 + $0x98] sm:$0xff]
    %v2240 = vld [vmem:[%s135 + $0xa0] sm:$0xff]
    %v2241 = vld [vmem:[%s135 + $0xa8] sm:$0xff]
    %v2242 = vld [vmem:[%s135 + $0xb0] sm:$0xff]
    %v2243 = vld [vmem:[%s135 + $0xb8] sm:$0xff]
    %v2244 = vld [vmem:[%s135 + $0xc0] sm:$0xff]
    %v2245 = vld [vmem:[%s135 + $0xc8] sm:$0xff]
    %v2246 = vld [vmem:[%s135 + $0xd0] sm:$0xff]
    %v2247 = vld [vmem:[%s135 + $0xd8] sm:$0xff]
    %v2248 = vld [vmem:[%s135 + $0xe0] sm:$0xff]
    %v2249 = vld [vmem:[%s135 + $0xe8] sm:$0xff]
    %v2250 = vld [vmem:[%s135 + $0xf0] sm:$0xff]
    %v2251 = vld [vmem:[%s135 + $0xf8] sm:$0xff]
    %v2252 = vld [vmem:[%s137] sm:$0x3]
    %v2253 = vld [vmem:[%s139] sm:$0x3]
    %v2254 = vld [vmem:[%s141] sm:$0x3]
    %v2255 = vld [vmem:[%s143] sm:$0xff]
    %v2256 = vld [vmem:[%s143 + $0x8] sm:$0xff]
    %v2257 = vld [vmem:[%s143 + $0x10] sm:$0xff]
    %v2258 = vld [vmem:[%s143 + $0x18] sm:$0xff]
    %v2259 = vld [vmem:[%s143 + $0x20] sm:$0xff]
    %v2260 = vld [vmem:[%s143 + $0x28] sm:$0xff]
    %v2261 = vld [vmem:[%s143 + $0x30] sm:$0xff]
    %v2262 = vld [vmem:[%s143 + $0x38] sm:$0xff]
    %v2263 = vld [vmem:[%s143 + $0x40] sm:$0xff]
    %v2264 = vld [vmem:[%s143 + $0x48] sm:$0xff]
    %v2265 = vld [vmem:[%s143 + $0x50] sm:$0xff]
    %v2266 = vld [vmem:[%s143 + $0x58] sm:$0xff]
    %v2267 = vld [vmem:[%s143 + $0x60] sm:$0xff]
    %v2268 = vld [vmem:[%s143 + $0x68] sm:$0xff]
    %v2269 = vld [vmem:[%s143 + $0x70] sm:$0xff]
    %v2270 = vld [vmem:[%s143 + $0x78] sm:$0xff]
    %v2271 = vld [vmem:[%s143 + $0x80] sm:$0xff]
    %v2272 = vld [vmem:[%s143 + $0x88] sm:$0xff]
    %v2273 = vld [vmem:[%s143 + $0x90] sm:$0xff]
    %v2274 = vld [vmem:[%s143 + $0x98] sm:$0xff]
    %v2275 = vld [vmem:[%s143 + $0xa0] sm:$0xff]
    %v2276 = vld [vmem:[%s143 + $0xa8] sm:$0xff]
    %v2277 = vld [vmem:[%s143 + $0xb0] sm:$0xff]
    %v2278 = vld [vmem:[%s143 + $0xb8] sm:$0xff]
    %v2279 = vld [vmem:[%s143 + $0xc0] sm:$0xff]
    %v2280 = vld [vmem:[%s143 + $0xc8] sm:$0xff]
    %v2281 = vld [vmem:[%s143 + $0xd0] sm:$0xff]
    %v2282 = vld [vmem:[%s143 + $0xd8] sm:$0xff]
    %v2283 = vld [vmem:[%s143 + $0xe0] sm:$0xff]
    %v2284 = vld [vmem:[%s143 + $0xe8] sm:$0xff]
    %v2285 = vld [vmem:[%s143 + $0xf0] sm:$0xff]
    %v2286 = vld [vmem:[%s143 + $0xf8] sm:$0xff]
    %v2287 = vld [vmem:[#allocation49] sm:$0x1]
    %v2289 = vperm.slane %v2252, 0
    %v2290 = vperm.slane %v2252, 1
    %2293 = vmatpush.msra.mxu0 %v2250
    %2294 = vmatpush.msra.mxu0 %v2248
    %2295 = vmatpush.msra.mxu0 %v2246
    %2296 = vmatpush.msra.mxu0 %v2244
    %2297 = vmatpush.msra.mxu0 %v2242
    %2298 = vmatpush.msra.mxu0 %v2240
    %2299 = vmatpush.msra.mxu0 %v2238
    %2300 = vmatpush.msra.mxu0 %v2236
    %2301 = vmatpush.msra.mxu0 %v2234
    %2302 = vmatpush.msra.mxu0 %v2232
    %2303 = vmatpush.msra.mxu0 %v2230
    %2304 = vmatpush.msra.mxu0 %v2228
    %2305 = vmatpush.msra.mxu0 %v2226
    %2306 = vmatpush.msra.mxu0 %v2224
    %2307 = vmatpush.msra.mxu0 %v2222
    %2308 = vmatpush.msra.mxu0 %v2220
    %2309 = vmatmul.f32.gmra.mxu0 %v2219
    %v2310 = vpop.f32.mrf.mxu0
    %v2311 = vadd.f32 %v2289, %v2310
    %2312 = vdwg.mxu0
    %2313 = vmatpush.msra.mxu0 %v2251
    %2314 = vmatpush.msra.mxu0 %v2249
    %2315 = vmatpush.msra.mxu0 %v2247
    %2316 = vmatpush.msra.mxu0 %v2245
    %2317 = vmatpush.msra.mxu0 %v2243
    %2318 = vmatpush.msra.mxu0 %v2241
    %2319 = vmatpush.msra.mxu0 %v2239
    %2320 = vmatpush.msra.mxu0 %v2237
    %2321 = vmatpush.msra.mxu0 %v2235
    %2322 = vmatpush.msra.mxu0 %v2233
    %2323 = vmatpush.msra.mxu0 %v2231
    %2324 = vmatpush.msra.mxu0 %v2229
    %2325 = vmatpush.msra.mxu0 %v2227
    %2326 = vmatpush.msra.mxu0 %v2225
    %2327 = vmatpush.msra.mxu0 %v2223
    %2328 = vmatpush.msra.mxu0 %v2221
    %2329 = vmatmul.f32.gmra.mxu0 %v2219
    %v2330 = vpop.f32.mrf.mxu0
    %v2331 = vadd.f32 %v2290, %v2330
    %2332 = vdwg.mxu0
    %v2333 = vadd.f32 %v2311, %v2331
    %2334 = vadd.xlane.f32.xlu0 %v2333
    %v2335 = vpop.xlane.xlu0 %2334
    %v2336 = vrcp.pop 256.0
    %v2337 = vmul.f32 256.0, %v2336
    %v2338 = vsub.f32 1.0, %v2337
    %v2339 = vmul.f32 %v2336, %v2338
    %v2340 = vadd.f32 %v2336, %v2339
    %vm2341 = vweird.f32 %v2336
    %v2342 = vsel %vm2341, %v2336, %v2340
    %v2343 = vmul.f32 %v2335, %v2342
    %v2344 = vsub.f32 %v2311, %v2343
    %v2345 = vsub.f32 %v2331, %v2343
    %v2346 = vmul.f32 %v2344, %v2344
    %v2347 = vmul.f32 %v2345, %v2345
    %v2348 = vadd.f32 %v2346, %v2347
    %2349 = vadd.xlane.f32.xlu0 %v2348
    %v2350 = vpop.xlane.xlu0 %2349
    %v2351 = vmul.f32 %v2350, %v2342
    %v2352 = vadd.f32 %v2351, 1e-05
    %v2353 = vrsqrt.pop %v2352
    %v2354 = vmul.f32 %v2353, %v2352
    %v2355 = vmul.f32 %v2354, %v2353
    %v2356 = vmul.f32 0.5, %v2355
    %v2357 = vsub.f32 1.5, %v2356
    %v2358 = vmul.f32 %v2353, %v2357
    %vm2359 = vweird.f32 %v2352
    %vm2360 = vweird.f32 %v2353
    %vm2361 = vmor %vm2359, %vm2360
    %v2362 = vsel %vm2361, %v2353, %v2358
    %v2363 = vmul.f32 %v2344, %v2362
    %v2364 = vmul.f32 %v2345, %v2362
    %v2366 = vperm.slane %v2253, 0
    %v2367 = vperm.slane %v2253, 1
    %v2370 = vmul.f32 %v2363, %v2366
    %v2371 = vmul.f32 %v2364, %v2367
    %v2373 = vperm.slane %v2254, 0
    %v2374 = vperm.slane %v2254, 1
    %v2377 = vadd.f32 %v2370, %v2373
    %v2378 = vadd.f32 %v2371, %v2374
    %v2379 = vxor.u32 %v2377, 2147483648
    %v2380 = vxor.u32 %v2378, 2147483648
    %v2381 = vmul.f32 %v2379, 1.442695
    %v2382 = vpow.pop %v2381
    %v2383 = vmul.f32 %v2380, 1.442695
    %v2384 = vpow.pop %v2383
    %v2385 = vadd.f32 %v2382, 1.0
    %v2386 = vadd.f32 %v2384, 1.0
    %v2387 = vrcp.pop %v2385
    %v2388 = vmul.f32 %v2385, %v2387
    %v2389 = vsub.f32 1.0, %v2388
    %v2390 = vmul.f32 %v2387, %v2389
    %v2391 = vadd.f32 %v2387, %v2390
    %vm2392 = vweird.f32 %v2385
    %vm2393 = vweird.f32 %v2387
    %vm2394 = vmor %vm2392, %vm2393
    %v2395 = vsel %vm2394, %v2387, %v2391
    %v2396 = vand.u32 2147483647, %v2385
    %vm2397 = vcmp.eq.f32.partialorder %v2396, 8.507059e+37
    %v2398 = vand.u32 %v2385, 2147483648
    %v2399 = vor.u32 1.1754944e-38, %v2398
    %v2400 = vsel %vm2397, %v2399, %v2395
    %v2401 = vmul.f32 1.0, %v2400
    %v2402 = vrcp.pop %v2386
    %v2403 = vmul.f32 %v2386, %v2402
    %v2404 = vsub.f32 1.0, %v2403
    %v2405 = vmul.f32 %v2402, %v2404
    %v2406 = vadd.f32 %v2402, %v2405
    %vm2407 = vweird.f32 %v2386
    %vm2408 = vweird.f32 %v2402
    %vm2409 = vmor %vm2407, %vm2408
    %v2410 = vsel %vm2409, %v2402, %v2406
    %v2411 = vand.u32 2147483647, %v2386
    %vm2412 = vcmp.eq.f32.partialorder %v2411, 8.507059e+37
    %v2413 = vand.u32 %v2386, 2147483648
    %v2414 = vor.u32 1.1754944e-38, %v2413
    %v2415 = vsel %vm2412, %v2414, %v2410
    %v2416 = vmul.f32 1.0, %v2415
    %v2417 = vmul.f32 %v2377, %v2401
    %v2418 = vmul.f32 %v2378, %v2416
    %v2420 = vperm.slane %v2287, 0
    %2422 = vmatpush.msra.mxu0 %v2270
    %2423 = vmatpush.msra.mxu0 %v2269
    %2424 = vmatpush.msra.mxu0 %v2268
    %2425 = vmatpush.msra.mxu0 %v2267
    %2426 = vmatpush.msra.mxu0 %v2266
    %2427 = vmatpush.msra.mxu0 %v2265
    %2428 = vmatpush.msra.mxu0 %v2264
    %2429 = vmatpush.msra.mxu0 %v2263
    %2430 = vmatpush.msra.mxu0 %v2262
    %2431 = vmatpush.msra.mxu0 %v2261
    %2432 = vmatpush.msra.mxu0 %v2260
    %2433 = vmatpush.msra.mxu0 %v2259
    %2434 = vmatpush.msra.mxu0 %v2258
    %2435 = vmatpush.msra.mxu0 %v2257
    %2436 = vmatpush.msra.mxu0 %v2256
    %2437 = vmatpush.msra.mxu0 %v2255
    %2438 = vmatmul.f32.gmra.mxu0 %v2417
    %v2439 = vpop.f32.mrf.mxu0
    %v2440 = vadd.f32 %v2420, %v2439
    %2441 = vdwg.mxu0
    %2442 = vmatpush.msra.mxu0 %v2286
    %2443 = vmatpush.msra.mxu0 %v2285
    %2444 = vmatpush.msra.mxu0 %v2284
    %2445 = vmatpush.msra.mxu0 %v2283
    %2446 = vmatpush.msra.mxu0 %v2282
    %2447 = vmatpush.msra.mxu0 %v2281
    %2448 = vmatpush.msra.mxu0 %v2280
    %2449 = vmatpush.msra.mxu0 %v2279
    %2450 = vmatpush.msra.mxu0 %v2278
    %2451 = vmatpush.msra.mxu0 %v2277
    %2452 = vmatpush.msra.mxu0 %v2276
    %2453 = vmatpush.msra.mxu0 %v2275
    %2454 = vmatpush.msra.mxu0 %v2274
    %2455 = vmatpush.msra.mxu0 %v2273
    %2456 = vmatpush.msra.mxu0 %v2272
    %2457 = vmatpush.msra.mxu0 %v2271
    %2458 = vmatmul.f32.gmra.mxu0 %v2418
    %v2459 = vpop.f32.mrf.mxu0
    %v2460 = vadd.f32 %v2440, %v2459
    %2461 = vdwg.mxu0
    %2462 = vst.msk [vmem:[%s147] sm:$0xff] %vm1054, %v2460
    // Predicated region
    $region422: #{tpu_custom_call.1} parent=1 // pred_check
      _
    $region423: #{tpu_custom_call.1} parent=1 // pred_check_branch
      %2464 = sbr.rel (0) target = $region425
    $region424: #{tpu_custom_call.1} parent=1 // pred_region
      _
    $region425: #{tpu_custom_call.1} parent=1 // pred_fallthru
      _
    // Predicated region
    $region426: #{tpu_custom_call.1} parent=1 // pred_check
      _
    $region427: #{tpu_custom_call.1} parent=1 // pred_check_branch
      %2466 = sbr.rel (0) target = $region429
    $region428: #{tpu_custom_call.1} parent=1 // pred_region
      _
    $region429: #{tpu_custom_call.1} parent=1 // pred_fallthru
      _
    %2467 = vsyncpa [#allocation3], 1
    %2468 = vsyncpa [#allocation5], 1
    %2469 = vsyncpa [#allocation8], 1
    %2470 = vsyncpa [#allocation11], 1
    %2471 = vsyncpa [#allocation14], 1
    %2472 = vsyncpa [#allocation17], 1
    %2473 = vsyncpa [#allocation20], 1
    %2474 = vsyncpa [#allocation23], 1
    %2475 = vsyncpa [#allocation26], 1
    %2476 = vsyncpa [#allocation29], 1
    %2477 = vsyncpa [#allocation32], 1
    %2478 = vsyncpa [#allocation35], 1
    %2479 = vsyncpa [#allocation38], 1
    %2480 = vsyncpa [#allocation41], 1
    %2481 = vsyncpa [#allocation44], 1
    %2482 = vsyncpa [#allocation47], 1
    %2483 = vsyncpa [#allocation50], 1

</llo_original>
